<compile_context>
chip_gen: v7x
topology: tpu7x:2x2x1
jax: 0.10.0
libtpu: 0.0.40
codegen_flags: <defaults>
</compile_context>

<pallas_src>
import functools
import math

import numpy as np

import jax
import jax.numpy as jnp
from jax.experimental import pallas as pl
from jax.experimental.pallas import tpu as pltpu


def _round_up(x, m):
    return ((x + m - 1) // m) * m


_VMEM_LIMIT = None


def _vmem_limit_bytes():
    """Generation-aware scoped-VMEM bound (v7x: 32 MiB, v5e/v6e: 64 MiB)."""
    global _VMEM_LIMIT
    if _VMEM_LIMIT is None:
        try:
            cap = int(pltpu.get_tpu_info().vmem_capacity_bytes)
        except Exception:
            cap = 64 * 1024 * 1024
        _VMEM_LIMIT = max(32 * 1024 * 1024, min(cap // 2, 96 * 1024 * 1024))
    return _VMEM_LIMIT


def _cparams(*sems):
    return pltpu.CompilerParams(
        dimension_semantics=tuple(sems),
        vmem_limit_bytes=_vmem_limit_bytes(),
    )


# ----------------------------------------------------------------------------
# Kernel 1: fully-fused per-image backbone.
#   x block      : (1, 1, HW)   f32   flattened (freq, time) pseudo-spectrogram
#   masks block  : (9, HW)      f32   3x3 "same"-conv boundary masks (resident)
#   conv weights : (C, 9*Cin)   bf16  slab-ordered [cout, t*Cin+cin] (resident)
#   conv biases  : (C, 1)       f32
#   SE / FC      : tiny f32 resident blocks
#   out block    : (1, 1, Dp)   f32   embedding, Dp = round_up(nOut, 128)
# ----------------------------------------------------------------------------
def _backbone_kernel(x_ref, m_ref, w1_ref, b1_ref, w2_ref, b2_ref, w3_ref, b3_ref,
                     se1w_ref, se1b_ref, se2wt_ref, se2b_ref, fcw_ref, fcb_ref,
                     o_ref, *, W):
    HW = x_ref.shape[-1]
    masks = m_ref[...]                                    # (9, HW) f32

    def conv3x3(x_flat, w_mat, b_col, relu):
        # x_flat: (Cin, HW) f32, channel-major, row-major (H, W) spatial on lanes.
        # Halo handled in-VMEM: tap t = roll by the flat offset + boundary mask.
        taps = []
        for t in range(9):
            di, dj = divmod(t, 3)
            off = (di - 1) * W + (dj - 1)                 # static flat offset
            shifted = pltpu.roll(x_flat, (-off) % HW, axis=1) if off != 0 else x_flat
            taps.append(shifted * masks[t:t + 1, :])
        slab = jnp.concatenate(taps, axis=0).astype(jnp.bfloat16)   # (9*Cin, HW)
        acc = jnp.dot(w_mat, slab, preferred_element_type=jnp.float32) + b_col
        return jnp.maximum(acc, 0.0) if relu else acc

    x0 = x_ref[...].reshape(1, HW)                        # (1, HW)
    a1 = conv3x3(x0, w1_ref[...], b1_ref[...], True)      # conv1 + relu      (C, HW)
    a2 = conv3x3(a1, w2_ref[...], b2_ref[...], True)      # block conv1 + relu
    h = conv3x3(a2, w3_ref[...], b3_ref[...], False)      # block conv2 (pre-act)

    # Squeeze-excitation, gate, residual, relu, global mean pool — all in VMEM.
    s0 = jnp.mean(h, axis=1, keepdims=True)                                    # (C, 1)
    s1 = jnp.maximum(jnp.sum(se1w_ref[...] * s0, axis=0, keepdims=True)
                     + se1b_ref[...], 0.0)                                     # (1, C/2)
    gate = jax.nn.sigmoid(jnp.sum(se2wt_ref[...] * s1, axis=1, keepdims=True)
                          + se2b_ref[...])                                     # (C, 1)
    x = jnp.maximum(h * gate + a1, 0.0)                                        # (C, HW)
    p = jnp.mean(x, axis=1, keepdims=True)                                     # (C, 1)

    # Embedding FC (K = C = 8): multiply + sublane reduce, no transpose needed.
    emb = jnp.sum(p * fcw_ref[...], axis=0, keepdims=True) + fcb_ref[...]      # (1, Dp)
    o_ref[...] = emb.reshape(1, 1, -1)


# ----------------------------------------------------------------------------
# Kernel 2: AAM-softmax scaled logits, tiled over the padded class dimension.
# One-hot built in-kernel from (B_pad, 1) int32 labels (no dense one-hot DMA).
# ----------------------------------------------------------------------------
def _aam_kernel(emb_ref, w_ref, lab_ref, o_ref, *, cos_m, sin_m, th, mm, s, tc):
    j = pl.program_id(0)
    x = emb_ref[...]                                              # (Bp, Dp) f32
    xn = x * jax.lax.rsqrt(jnp.sum(x * x, axis=1, keepdims=True) + 1e-12)
    w = w_ref[...]                                                # (Dp, tc) f32
    wn = w * jax.lax.rsqrt(jnp.sum(w * w, axis=0, keepdims=True) + 1e-12)
    cosine = jnp.dot(xn, wn, preferred_element_type=jnp.float32)  # (Bp, tc)
    sine = jnp.sqrt(jnp.clip(1.0 - cosine * cosine, 0.0, 1.0))
    phi = cosine * cos_m - sine * sin_m
    phi = jnp.where((cosine - th) > 0.0, phi, cosine - mm)
    col = jax.lax.broadcasted_iota(jnp.int32, cosine.shape, 1) + j * tc
    oh = (col == lab_ref[...]).astype(jnp.float32)
    o_ref[...] = s * (oh * phi + (1.0 - oh) * cosine)


# ----------------------------------------------------------------------------
# SpeakerNet = ResNetSE-style backbone + AAM-softmax LossFunction head.
# ----------------------------------------------------------------------------
class SpeakerNetPallas:
    def __init__(self, nOut, n_class, margin, scale, *, n_freq=16, channels=8,
                 head_tile_c=512):
        self.nOut = nOut
        self.n_class = n_class
        self.margin = margin
        self.scale = scale
        self.n_freq = n_freq
        C = channels
        self.channels = C

        self.emb_pad = _round_up(nOut, 128)                 # lane-dense embedding width
        self.n_class_pad = _round_up(n_class, 128)
        self.head_tile_c = min(head_tile_c, self.n_class_pad)
        self.n_class_pad = _round_up(self.n_class_pad, self.head_tile_c)

        key = jax.random.PRNGKey(1)
        ks = jax.random.split(key, 8)

        def conv_mat(w):   # HWIO (3,3,Cin,Cout) -> (Cout, 9*Cin) slab weight, bf16
            cout = w.shape[-1]
            return jnp.transpose(w, (3, 0, 1, 2)).reshape(cout, -1).astype(jnp.bfloat16)

        # TODO(synk): BatchNorm layers with default running stats (mean=0, var=1,
        # gamma=1, beta=0) are identities in eval mode and are folded out here.
        self.w1 = conv_mat(0.2 * jax.random.normal(ks[0], (3, 3, 1, C), jnp.float32))
        self.w2 = conv_mat(0.2 * jax.random.normal(ks[1], (3, 3, C, C), jnp.float32))
        self.w3 = conv_mat(0.2 * jax.random.normal(ks[2], (3, 3, C, C), jnp.float32))
        self.b1 = jnp.zeros((C, 1), jnp.float32)
        self.b2 = jnp.zeros((C, 1), jnp.float32)
        self.b3 = jnp.zeros((C, 1), jnp.float32)

        # SE bottleneck FCs (stored so the kernel needs no in-kernel transposes).
        self.se1_w = 0.3 * jax.random.normal(ks[3], (C, C // 2), jnp.float32)   # (C, C/2)
        self.se1_b = jnp.zeros((1, C // 2), jnp.float32)
        se2 = 0.3 * jax.random.normal(ks[4], (C // 2, C), jnp.float32)          # (C/2, C)
        self.se2_w_t = jnp.transpose(se2)                                       # (C, C/2)
        self.se2_b = jnp.zeros((C, 1), jnp.float32)

        # Embedding projection, zero-padded to Dp (padded dims stay exactly 0).
        fc_w = 0.2 * jax.random.normal(ks[5], (C, nOut), jnp.float32)
        self.fc_w_pad = jnp.pad(fc_w, ((0, 0), (0, self.emb_pad - nOut)))
        self.fc_b_pad = jnp.zeros((1, self.emb_pad), jnp.float32)

        # AAM head class weights stored natively as (D_pad, n_class_pad), f32.
        head_w = 0.2 * jax.random.normal(ks[6], (nOut, n_class), jnp.float32)
        self.head_w_pad = jnp.pad(head_w, ((0, self.emb_pad - nOut),
                                           (0, self.n_class_pad - n_class)))

        self._cos_m, self._sin_m = math.cos(margin), math.sin(margin)
        self._th = math.cos(math.pi - margin)
        self._mm = math.sin(math.pi - margin) * margin
        self._mask_cache = {}

    # 3x3 "same"-conv boundary masks for the flat (H*W) layout; built once per (H, W).
    def _get_masks(self, H, W):
        key = (H, W)
        m = self._mask_cache.get(key)
        if m is None:
            r = np.repeat(np.arange(H), W)
            c = np.tile(np.arange(W), H)
            mm = np.zeros((9, H * W), np.float32)
            for t in range(9):
                di, dj = divmod(t, 3)
                ri, cj = r + di - 1, c + dj - 1
                mm[t] = ((ri >= 0) & (ri < H) & (cj >= 0) & (cj < W)).astype(np.float32)
            m = jnp.asarray(mm)
            self._mask_cache[key] = m
        return m

    # --- ResNetSE.forward ---------------------------------------------------
    def backbone(self, wav):
        B, T = wav.shape
        C, Dp = self.channels, self.emb_pad
        H = self.n_freq
        W = T // H
        HW = H * W
        # TODO(synk): the torchfbank mel-spectrogram frontend of ResNetSE is not in
        # the snippet; the raw waveform is framed into an (H, W) pseudo-spectrogram
        # (its row-major flattening is exactly wav[:, :HW], so no reshape is needed).
        x = wav[:, :HW].reshape(B, 1, HW).astype(jnp.float32)
        masks = self._get_masks(H, W)

        flops = 2 * B * HW * (9 * C + 2 * 9 * C * C)
        bytes_accessed = (x.size * 4 + masks.size * 4 + B * Dp * 4
                          + self.w1.size * 2 + self.w2.size * 2 + self.w3.size * 2)
        # TODO(synk): for very long utterances / B==1, add a second ("parallel",
        # "arbitrary") time-tile grid axis with a 1-pixel halo so both v7x cores
        # always have work and the tile fits the 64 MiB VMEM budget.
        emb = pl.pallas_call(
            functools.partial(_backbone_kernel, W=W),
            out_shape=jax.ShapeDtypeStruct((B, 1, Dp), jnp.float32),
            grid=(B,),
            in_specs=[
                pl.BlockSpec((1, 1, HW), lambda i: (i, 0, 0)),
                pl.BlockSpec((9, HW), lambda i: (0, 0)),          # masks, resident
                pl.BlockSpec((C, 9), lambda i: (0, 0)),           # conv1 weight
                pl.BlockSpec((C, 1), lambda i: (0, 0)),
                pl.BlockSpec((C, 9 * C), lambda i: (0, 0)),       # block conv1 weight
                pl.BlockSpec((C, 1), lambda i: (0, 0)),
                pl.BlockSpec((C, 9 * C), lambda i: (0, 0)),       # block conv2 weight
                pl.BlockSpec((C, 1), lambda i: (0, 0)),
                pl.BlockSpec((C, C // 2), lambda i: (0, 0)),      # SE fc1
                pl.BlockSpec((1, C // 2), lambda i: (0, 0)),
                pl.BlockSpec((C, C // 2), lambda i: (0, 0)),      # SE fc2 (transposed)
                pl.BlockSpec((C, 1), lambda i: (0, 0)),
                pl.BlockSpec((C, Dp), lambda i: (0, 0)),          # embedding FC
                pl.BlockSpec((1, Dp), lambda i: (0, 0)),
            ],
            out_specs=pl.BlockSpec((1, 1, Dp), lambda i: (i, 0, 0)),
            compiler_params=_cparams("parallel"),
            cost_estimate=pl.CostEstimate(flops=flops, transcendentals=B * C,
                                          bytes_accessed=bytes_accessed),
        )(x, masks, self.w1, self.b1, self.w2, self.b2, self.w3, self.b3,
          self.se1_w, self.se1_b, self.se2_w_t, self.se2_b,
          self.fc_w_pad, self.fc_b_pad)
        return emb.reshape(B, Dp)          # still zero-padded beyond nOut

    # --- AAM-softmax logits --------------------------------------------------
    def _aam_logits(self, emb_pad, label):
        B, Dp = emb_pad.shape
        Bp = _round_up(max(B, 8), 8)
        Cp, tc = self.n_class_pad, self.head_tile_c
        emb_pad = jnp.pad(emb_pad, ((0, Bp - B), (0, 0)))
        lab = jnp.pad(label, (0, Bp - B), constant_values=-1).reshape(Bp, 1)
        logits = pl.pallas_call(
            functools.partial(_aam_kernel, cos_m=self._cos_m, sin_m=self._sin_m,
                              th=self._th, mm=self._mm, s=self.scale, tc=tc),
            out_shape=jax.ShapeDtypeStruct((Bp, Cp), jnp.float32),
            grid=(Cp // tc,),
            in_specs=[
                pl.BlockSpec((Bp, Dp), lambda j: (0, 0)),    # embeddings, resident
                pl.BlockSpec((Dp, tc), lambda j: (0, j)),    # class-weight tile (f32)
                pl.BlockSpec((Bp, 1), lambda j: (0, 0)),     # labels, resident
            ],
            out_specs=pl.BlockSpec((Bp, tc), lambda j: (0, j)),
            compiler_params=_cparams("parallel"),
        )(emb_pad, self.head_w_pad, lab)
        return logits[:B, :self.n_class]

    # --- LossFunction.forward (AAM-softmax + top-1 accuracy) -----------------
    def head(self, emb_pad, label):
        label = label.astype(jnp.int32)
        logits = self._aam_logits(emb_pad, label)
        logp = jax.nn.log_softmax(logits, axis=-1)
        nloss = -jnp.mean(jnp.take_along_axis(logp, label[:, None], axis=1))
        prec1 = jnp.mean((jnp.argmax(logits, axis=-1) == label).astype(jnp.float32)) * 100.0
        return nloss, prec1

    # --- SpeakerNet.forward ---------------------------------------------------
    def forward(self, data, label=None):
        x = data.reshape(-1, data.shape[-1])     # data.reshape(-1, data.size()[-1])
        emb_pad = self.backbone(x)               # (B, Dp), zero beyond nOut
        if label is None:
            return emb_pad[:, :self.nOut]
        return self.head(emb_pad, label)


# ----------------------------------------------------------------------------
if __name__ == "__main__":
    key = jax.random.PRNGKey(0)
    k_data, k_label = jax.random.split(key)

    nOut, n_class, margin, scale = 32, 10, 0.2, 30.0
    model = SpeakerNetPallas(nOut=nOut, n_class=n_class, margin=margin, scale=scale)

    # data: (batch, n_segments, samples) raw waveform; reshaped to (-1, samples)
    data = jax.random.normal(k_data, (2, 1, 1280), dtype=jnp.float32)
    label = jax.random.randint(k_label, (2,), 0, n_class)

    # Path 1: no label -> embedding
    emb = model.forward(data)
    emb = jax.block_until_ready(emb)
    assert emb.shape == (2, nOut)

    # Path 2: with label -> (loss, prec1)
    nloss, prec1 = model.forward(data, label)
    nloss = jax.block_until_ready(nloss)
    prec1 = jax.block_until_ready(prec1)
    assert nloss.shape == () and prec1.shape == ()
    assert jnp.isfinite(nloss) and jnp.isfinite(prec1)

    print("KERNEL_OK")
</pallas_src>

<mosaic_0001>
module attributes {stable_mosaic.version = 11 : i64} {
  func.func @_backbone_kernel(%arg0: i32, %arg1: memref<1x1x1280xf32, #tpu.memory_space<vmem>>, %arg2: memref<9x1280xf32, #tpu.memory_space<vmem>>, %arg3: memref<8x9xbf16, #tpu.memory_space<vmem>>, %arg4: memref<8x1xf32, #tpu.memory_space<vmem>>, %arg5: memref<8x72xbf16, #tpu.memory_space<vmem>>, %arg6: memref<8x1xf32, #tpu.memory_space<vmem>>, %arg7: memref<8x72xbf16, #tpu.memory_space<vmem>>, %arg8: memref<8x1xf32, #tpu.memory_space<vmem>>, %arg9: memref<8x4xf32, #tpu.memory_space<vmem>>, %arg10: memref<1x4xf32, #tpu.memory_space<vmem>>, %arg11: memref<8x4xf32, #tpu.memory_space<vmem>>, %arg12: memref<8x1xf32, #tpu.memory_space<vmem>>, %arg13: memref<8x128xf32, #tpu.memory_space<vmem>>, %arg14: memref<1x128xf32, #tpu.memory_space<vmem>>, %arg15: memref<1x1x128xf32, #tpu.memory_space<vmem>>) attributes {dimension_semantics = [#tpu.dimension_semantics<parallel>], iteration_bounds = array<i64: 2>, scalar_prefetch = 0 : i64, scratch_operands = 0 : i64, tpu.core_type = #tpu.core_type<tc>, window_params = [{transform_indices = @transform_0, window_bounds = array<i64: 1, 1, 1280>}, {pipeline_mode = #tpu.pipeline_mode<synchronous>, transform_indices = @transform_1, window_bounds = array<i64: 9, 1280>}, {pipeline_mode = #tpu.pipeline_mode<synchronous>, transform_indices = @transform_2, window_bounds = array<i64: 8, 9>}, {pipeline_mode = #tpu.pipeline_mode<synchronous>, transform_indices = @transform_3, window_bounds = array<i64: 8, 1>}, {pipeline_mode = #tpu.pipeline_mode<synchronous>, transform_indices = @transform_4, window_bounds = array<i64: 8, 72>}, {pipeline_mode = #tpu.pipeline_mode<synchronous>, transform_indices = @transform_5, window_bounds = array<i64: 8, 1>}, {pipeline_mode = #tpu.pipeline_mode<synchronous>, transform_indices = @transform_6, window_bounds = array<i64: 8, 72>}, {pipeline_mode = #tpu.pipeline_mode<synchronous>, transform_indices = @transform_7, window_bounds = array<i64: 8, 1>}, {pipeline_mode = #tpu.pipeline_mode<synchronous>, transform_indices = @transform_8, window_bounds = array<i64: 8, 4>}, {pipeline_mode = #tpu.pipeline_mode<synchronous>, transform_indices = @transform_9, window_bounds = array<i64: 1, 4>}, {pipeline_mode = #tpu.pipeline_mode<synchronous>, transform_indices = @transform_10, window_bounds = array<i64: 8, 4>}, {pipeline_mode = #tpu.pipeline_mode<synchronous>, transform_indices = @transform_11, window_bounds = array<i64: 8, 1>}, {pipeline_mode = #tpu.pipeline_mode<synchronous>, transform_indices = @transform_12, window_bounds = array<i64: 8, 128>}, {pipeline_mode = #tpu.pipeline_mode<synchronous>, transform_indices = @transform_13, window_bounds = array<i64: 1, 128>}, {transform_indices = @transform_14, window_bounds = array<i64: 1, 1, 128>}]} {
    %c0 = arith.constant 0 : index
    %c0_0 = arith.constant 0 : index
    %0 = vector.load %arg2[%c0, %c0_0] : memref<9x1280xf32, #tpu.memory_space<vmem>>, vector<9x1280xf32>
    %c0_1 = arith.constant 0 : index
    %c0_2 = arith.constant 0 : index
    %c0_3 = arith.constant 0 : index
    %1 = vector.load %arg1[%c0_1, %c0_2, %c0_3] : memref<1x1x1280xf32, #tpu.memory_space<vmem>>, vector<1x1x1280xf32>
    %2 = vector.shape_cast %1 : vector<1x1x1280xf32> to vector<1x1280xf32>
    %c0_4 = arith.constant 0 : index
    %c0_5 = arith.constant 0 : index
    %3 = vector.load %arg3[%c0_4, %c0_5] : memref<8x9xbf16, #tpu.memory_space<vmem>>, vector<8x9xbf16>
    %c0_6 = arith.constant 0 : index
    %c0_7 = arith.constant 0 : index
    %4 = vector.load %arg4[%c0_6, %c0_7] : memref<8x1xf32, #tpu.memory_space<vmem>>, vector<8x1xf32>
    %c81_i32 = arith.constant 81 : i32
    %5 = tpu.dynamic_rotate %2 by %c81_i32 dim 1 : vector<1x1280xf32>, i32 -> vector<1x1280xf32>
    %6 = vector.extract_strided_slice %0 {offsets = [0, 0], sizes = [1, 1280], strides = [1, 1]} : vector<9x1280xf32> to vector<1x1280xf32>
    %7 = arith.mulf %5, %6 : vector<1x1280xf32>
    %c80_i32 = arith.constant 80 : i32
    %8 = tpu.dynamic_rotate %2 by %c80_i32 dim 1 : vector<1x1280xf32>, i32 -> vector<1x1280xf32>
    %9 = vector.extract_strided_slice %0 {offsets = [1, 0], sizes = [1, 1280], strides = [1, 1]} : vector<9x1280xf32> to vector<1x1280xf32>
    %10 = arith.mulf %8, %9 : vector<1x1280xf32>
    %c79_i32 = arith.constant 79 : i32
    %11 = tpu.dynamic_rotate %2 by %c79_i32 dim 1 : vector<1x1280xf32>, i32 -> vector<1x1280xf32>
    %12 = vector.extract_strided_slice %0 {offsets = [2, 0], sizes = [1, 1280], strides = [1, 1]} : vector<9x1280xf32> to vector<1x1280xf32>
    %13 = arith.mulf %11, %12 : vector<1x1280xf32>
    %c1_i32 = arith.constant 1 : i32
    %14 = tpu.dynamic_rotate %2 by %c1_i32 dim 1 : vector<1x1280xf32>, i32 -> vector<1x1280xf32>
    %15 = vector.extract_strided_slice %0 {offsets = [3, 0], sizes = [1, 1280], strides = [1, 1]} : vector<9x1280xf32> to vector<1x1280xf32>
    %16 = arith.mulf %14, %15 : vector<1x1280xf32>
    %17 = vector.extract_strided_slice %0 {offsets = [4, 0], sizes = [1, 1280], strides = [1, 1]} : vector<9x1280xf32> to vector<1x1280xf32>
    %18 = arith.mulf %2, %17 : vector<1x1280xf32>
    %c1279_i32 = arith.constant 1279 : i32
    %19 = tpu.dynamic_rotate %2 by %c1279_i32 dim 1 : vector<1x1280xf32>, i32 -> vector<1x1280xf32>
    %20 = vector.extract_strided_slice %0 {offsets = [5, 0], sizes = [1, 1280], strides = [1, 1]} : vector<9x1280xf32> to vector<1x1280xf32>
    %21 = arith.mulf %19, %20 : vector<1x1280xf32>
    %c1201_i32 = arith.constant 1201 : i32
    %22 = tpu.dynamic_rotate %2 by %c1201_i32 dim 1 : vector<1x1280xf32>, i32 -> vector<1x1280xf32>
    %23 = vector.extract_strided_slice %0 {offsets = [6, 0], sizes = [1, 1280], strides = [1, 1]} : vector<9x1280xf32> to vector<1x1280xf32>
    %24 = arith.mulf %22, %23 : vector<1x1280xf32>
    %c1200_i32 = arith.constant 1200 : i32
    %25 = tpu.dynamic_rotate %2 by %c1200_i32 dim 1 : vector<1x1280xf32>, i32 -> vector<1x1280xf32>
    %26 = vector.extract_strided_slice %0 {offsets = [7, 0], sizes = [1, 1280], strides = [1, 1]} : vector<9x1280xf32> to vector<1x1280xf32>
    %27 = arith.mulf %25, %26 : vector<1x1280xf32>
    %c1199_i32 = arith.constant 1199 : i32
    %28 = tpu.dynamic_rotate %2 by %c1199_i32 dim 1 : vector<1x1280xf32>, i32 -> vector<1x1280xf32>
    %29 = vector.extract_strided_slice %0 {offsets = [8, 0], sizes = [1, 1280], strides = [1, 1]} : vector<9x1280xf32> to vector<1x1280xf32>
    %30 = arith.mulf %28, %29 : vector<1x1280xf32>
    %31 = tpu.concatenate %7, %10, %13, %16, %18, %21, %24, %27, %30 in 0 : vector<1x1280xf32>, vector<1x1280xf32>, vector<1x1280xf32>, vector<1x1280xf32>, vector<1x1280xf32>, vector<1x1280xf32>, vector<1x1280xf32>, vector<1x1280xf32>, vector<1x1280xf32> -> vector<9x1280xf32>
    %32 = arith.truncf %31 : vector<9x1280xf32> to vector<9x1280xbf16>
    %cst = arith.constant dense<0.000000e+00> : vector<8x1280xf32>
    %33 = tpu.matmul %3, %32, %cst {dimension_numbers = #tpu.dot_dimension_numbers<[1], [0], [0], [1], [0, 0, 1, 1], [], []>} : vector<8x9xbf16>, vector<9x1280xbf16>, vector<8x1280xf32> -> vector<8x1280xf32>
    %34 = vector.broadcast %4 : vector<8x1xf32> to vector<8x1280xf32>
    %35 = arith.addf %33, %34 : vector<8x1280xf32>
    %cst_8 = arith.constant 0.000000e+00 : f32
    %36 = vector.broadcast %cst_8 : f32 to vector<8x1280xf32>
    %37 = arith.maximumf %35, %36 : vector<8x1280xf32>
    %c0_9 = arith.constant 0 : index
    %c0_10 = arith.constant 0 : index
    %38 = vector.load %arg5[%c0_9, %c0_10] : memref<8x72xbf16, #tpu.memory_space<vmem>>, vector<8x72xbf16>
    %c0_11 = arith.constant 0 : index
    %c0_12 = arith.constant 0 : index
    %39 = vector.load %arg6[%c0_11, %c0_12] : memref<8x1xf32, #tpu.memory_space<vmem>>, vector<8x1xf32>
    %c81_i32_13 = arith.constant 81 : i32
    %40 = tpu.dynamic_rotate %37 by %c81_i32_13 dim 1 : vector<8x1280xf32>, i32 -> vector<8x1280xf32>
    %41 = vector.extract_strided_slice %0 {offsets = [0, 0], sizes = [1, 1280], strides = [1, 1]} : vector<9x1280xf32> to vector<1x1280xf32>
    %42 = vector.broadcast %41 : vector<1x1280xf32> to vector<8x1280xf32>
    %43 = arith.mulf %40, %42 : vector<8x1280xf32>
    %c80_i32_14 = arith.constant 80 : i32
    %44 = tpu.dynamic_rotate %37 by %c80_i32_14 dim 1 : vector<8x1280xf32>, i32 -> vector<8x1280xf32>
    %45 = vector.extract_strided_slice %0 {offsets = [1, 0], sizes = [1, 1280], strides = [1, 1]} : vector<9x1280xf32> to vector<1x1280xf32>
    %46 = vector.broadcast %45 : vector<1x1280xf32> to vector<8x1280xf32>
    %47 = arith.mulf %44, %46 : vector<8x1280xf32>
    %c79_i32_15 = arith.constant 79 : i32
    %48 = tpu.dynamic_rotate %37 by %c79_i32_15 dim 1 : vector<8x1280xf32>, i32 -> vector<8x1280xf32>
    %49 = vector.extract_strided_slice %0 {offsets = [2, 0], sizes = [1, 1280], strides = [1, 1]} : vector<9x1280xf32> to vector<1x1280xf32>
    %50 = vector.broadcast %49 : vector<1x1280xf32> to vector<8x1280xf32>
    %51 = arith.mulf %48, %50 : vector<8x1280xf32>
    %c1_i32_16 = arith.constant 1 : i32
    %52 = tpu.dynamic_rotate %37 by %c1_i32_16 dim 1 : vector<8x1280xf32>, i32 -> vector<8x1280xf32>
    %53 = vector.extract_strided_slice %0 {offsets = [3, 0], sizes = [1, 1280], strides = [1, 1]} : vector<9x1280xf32> to vector<1x1280xf32>
    %54 = vector.broadcast %53 : vector<1x1280xf32> to vector<8x1280xf32>
    %55 = arith.mulf %52, %54 : vector<8x1280xf32>
    %56 = vector.extract_strided_slice %0 {offsets = [4, 0], sizes = [1, 1280], strides = [1, 1]} : vector<9x1280xf32> to vector<1x1280xf32>
    %57 = vector.broadcast %56 : vector<1x1280xf32> to vector<8x1280xf32>
    %58 = arith.mulf %37, %57 : vector<8x1280xf32>
    %c1279_i32_17 = arith.constant 1279 : i32
    %59 = tpu.dynamic_rotate %37 by %c1279_i32_17 dim 1 : vector<8x1280xf32>, i32 -> vector<8x1280xf32>
    %60 = vector.extract_strided_slice %0 {offsets = [5, 0], sizes = [1, 1280], strides = [1, 1]} : vector<9x1280xf32> to vector<1x1280xf32>
    %61 = vector.broadcast %60 : vector<1x1280xf32> to vector<8x1280xf32>
    %62 = arith.mulf %59, %61 : vector<8x1280xf32>
    %c1201_i32_18 = arith.constant 1201 : i32
    %63 = tpu.dynamic_rotate %37 by %c1201_i32_18 dim 1 : vector<8x1280xf32>, i32 -> vector<8x1280xf32>
    %64 = vector.extract_strided_slice %0 {offsets = [6, 0], sizes = [1, 1280], strides = [1, 1]} : vector<9x1280xf32> to vector<1x1280xf32>
    %65 = vector.broadcast %64 : vector<1x1280xf32> to vector<8x1280xf32>
    %66 = arith.mulf %63, %65 : vector<8x1280xf32>
    %c1200_i32_19 = arith.constant 1200 : i32
    %67 = tpu.dynamic_rotate %37 by %c1200_i32_19 dim 1 : vector<8x1280xf32>, i32 -> vector<8x1280xf32>
    %68 = vector.extract_strided_slice %0 {offsets = [7, 0], sizes = [1, 1280], strides = [1, 1]} : vector<9x1280xf32> to vector<1x1280xf32>
    %69 = vector.broadcast %68 : vector<1x1280xf32> to vector<8x1280xf32>
    %70 = arith.mulf %67, %69 : vector<8x1280xf32>
    %c1199_i32_20 = arith.constant 1199 : i32
    %71 = tpu.dynamic_rotate %37 by %c1199_i32_20 dim 1 : vector<8x1280xf32>, i32 -> vector<8x1280xf32>
    %72 = vector.extract_strided_slice %0 {offsets = [8, 0], sizes = [1, 1280], strides = [1, 1]} : vector<9x1280xf32> to vector<1x1280xf32>
    %73 = vector.broadcast %72 : vector<1x1280xf32> to vector<8x1280xf32>
    %74 = arith.mulf %71, %73 : vector<8x1280xf32>
    %75 = tpu.concatenate %43, %47, %51, %55, %58, %62, %66, %70, %74 in 0 : vector<8x1280xf32>, vector<8x1280xf32>, vector<8x1280xf32>, vector<8x1280xf32>, vector<8x1280xf32>, vector<8x1280xf32>, vector<8x1280xf32>, vector<8x1280xf32>, vector<8x1280xf32> -> vector<72x1280xf32>
    %76 = arith.truncf %75 : vector<72x1280xf32> to vector<72x1280xbf16>
    %cst_21 = arith.constant dense<0.000000e+00> : vector<8x1280xf32>
    %77 = tpu.matmul %38, %76, %cst_21 {dimension_numbers = #tpu.dot_dimension_numbers<[1], [0], [0], [1], [0, 0, 1, 1], [], []>} : vector<8x72xbf16>, vector<72x1280xbf16>, vector<8x1280xf32> -> vector<8x1280xf32>
    %78 = vector.broadcast %39 : vector<8x1xf32> to vector<8x1280xf32>
    %79 = arith.addf %77, %78 : vector<8x1280xf32>
    %cst_22 = arith.constant 0.000000e+00 : f32
    %80 = vector.broadcast %cst_22 : f32 to vector<8x1280xf32>
    %81 = arith.maximumf %79, %80 : vector<8x1280xf32>
    %c0_23 = arith.constant 0 : index
    %c0_24 = arith.constant 0 : index
    %82 = vector.load %arg7[%c0_23, %c0_24] : memref<8x72xbf16, #tpu.memory_space<vmem>>, vector<8x72xbf16>
    %c0_25 = arith.constant 0 : index
    %c0_26 = arith.constant 0 : index
    %83 = vector.load %arg8[%c0_25, %c0_26] : memref<8x1xf32, #tpu.memory_space<vmem>>, vector<8x1xf32>
    %c81_i32_27 = arith.constant 81 : i32
    %84 = tpu.dynamic_rotate %81 by %c81_i32_27 dim 1 : vector<8x1280xf32>, i32 -> vector<8x1280xf32>
    %85 = vector.extract_strided_slice %0 {offsets = [0, 0], sizes = [1, 1280], strides = [1, 1]} : vector<9x1280xf32> to vector<1x1280xf32>
    %86 = vector.broadcast %85 : vector<1x1280xf32> to vector<8x1280xf32>
    %87 = arith.mulf %84, %86 : vector<8x1280xf32>
    %c80_i32_28 = arith.constant 80 : i32
    %88 = tpu.dynamic_rotate %81 by %c80_i32_28 dim 1 : vector<8x1280xf32>, i32 -> vector<8x1280xf32>
    %89 = vector.extract_strided_slice %0 {offsets = [1, 0], sizes = [1, 1280], strides = [1, 1]} : vector<9x1280xf32> to vector<1x1280xf32>
    %90 = vector.broadcast %89 : vector<1x1280xf32> to vector<8x1280xf32>
    %91 = arith.mulf %88, %90 : vector<8x1280xf32>
    %c79_i32_29 = arith.constant 79 : i32
    %92 = tpu.dynamic_rotate %81 by %c79_i32_29 dim 1 : vector<8x1280xf32>, i32 -> vector<8x1280xf32>
    %93 = vector.extract_strided_slice %0 {offsets = [2, 0], sizes = [1, 1280], strides = [1, 1]} : vector<9x1280xf32> to vector<1x1280xf32>
    %94 = vector.broadcast %93 : vector<1x1280xf32> to vector<8x1280xf32>
    %95 = arith.mulf %92, %94 : vector<8x1280xf32>
    %c1_i32_30 = arith.constant 1 : i32
    %96 = tpu.dynamic_rotate %81 by %c1_i32_30 dim 1 : vector<8x1280xf32>, i32 -> vector<8x1280xf32>
    %97 = vector.extract_strided_slice %0 {offsets = [3, 0], sizes = [1, 1280], strides = [1, 1]} : vector<9x1280xf32> to vector<1x1280xf32>
    %98 = vector.broadcast %97 : vector<1x1280xf32> to vector<8x1280xf32>
    %99 = arith.mulf %96, %98 : vector<8x1280xf32>
    %100 = vector.extract_strided_slice %0 {offsets = [4, 0], sizes = [1, 1280], strides = [1, 1]} : vector<9x1280xf32> to vector<1x1280xf32>
    %101 = vector.broadcast %100 : vector<1x1280xf32> to vector<8x1280xf32>
    %102 = arith.mulf %81, %101 : vector<8x1280xf32>
    %c1279_i32_31 = arith.constant 1279 : i32
    %103 = tpu.dynamic_rotate %81 by %c1279_i32_31 dim 1 : vector<8x1280xf32>, i32 -> vector<8x1280xf32>
    %104 = vector.extract_strided_slice %0 {offsets = [5, 0], sizes = [1, 1280], strides = [1, 1]} : vector<9x1280xf32> to vector<1x1280xf32>
    %105 = vector.broadcast %104 : vector<1x1280xf32> to vector<8x1280xf32>
    %106 = arith.mulf %103, %105 : vector<8x1280xf32>
    %c1201_i32_32 = arith.constant 1201 : i32
    %107 = tpu.dynamic_rotate %81 by %c1201_i32_32 dim 1 : vector<8x1280xf32>, i32 -> vector<8x1280xf32>
    %108 = vector.extract_strided_slice %0 {offsets = [6, 0], sizes = [1, 1280], strides = [1, 1]} : vector<9x1280xf32> to vector<1x1280xf32>
    %109 = vector.broadcast %108 : vector<1x1280xf32> to vector<8x1280xf32>
    %110 = arith.mulf %107, %109 : vector<8x1280xf32>
    %c1200_i32_33 = arith.constant 1200 : i32
    %111 = tpu.dynamic_rotate %81 by %c1200_i32_33 dim 1 : vector<8x1280xf32>, i32 -> vector<8x1280xf32>
    %112 = vector.extract_strided_slice %0 {offsets = [7, 0], sizes = [1, 1280], strides = [1, 1]} : vector<9x1280xf32> to vector<1x1280xf32>
    %113 = vector.broadcast %112 : vector<1x1280xf32> to vector<8x1280xf32>
    %114 = arith.mulf %111, %113 : vector<8x1280xf32>
    %c1199_i32_34 = arith.constant 1199 : i32
    %115 = tpu.dynamic_rotate %81 by %c1199_i32_34 dim 1 : vector<8x1280xf32>, i32 -> vector<8x1280xf32>
    %116 = vector.extract_strided_slice %0 {offsets = [8, 0], sizes = [1, 1280], strides = [1, 1]} : vector<9x1280xf32> to vector<1x1280xf32>
    %117 = vector.broadcast %116 : vector<1x1280xf32> to vector<8x1280xf32>
    %118 = arith.mulf %115, %117 : vector<8x1280xf32>
    %119 = tpu.concatenate %87, %91, %95, %99, %102, %106, %110, %114, %118 in 0 : vector<8x1280xf32>, vector<8x1280xf32>, vector<8x1280xf32>, vector<8x1280xf32>, vector<8x1280xf32>, vector<8x1280xf32>, vector<8x1280xf32>, vector<8x1280xf32>, vector<8x1280xf32> -> vector<72x1280xf32>
    %120 = arith.truncf %119 : vector<72x1280xf32> to vector<72x1280xbf16>
    %cst_35 = arith.constant dense<0.000000e+00> : vector<8x1280xf32>
    %121 = tpu.matmul %82, %120, %cst_35 {dimension_numbers = #tpu.dot_dimension_numbers<[1], [0], [0], [1], [0, 0, 1, 1], [], []>} : vector<8x72xbf16>, vector<72x1280xbf16>, vector<8x1280xf32> -> vector<8x1280xf32>
    %122 = vector.broadcast %83 : vector<8x1xf32> to vector<8x1280xf32>
    %123 = arith.addf %121, %122 : vector<8x1280xf32>
    %cst_36 = arith.constant dense<0.000000e+00> : vector<8xf32>
    %124 = vector.multi_reduction <add>, %123, %cst_36 [1] : vector<8x1280xf32> to vector<8xf32>
    %125 = vector.shape_cast %124 : vector<8xf32> to vector<8x1xf32>
    %cst_37 = arith.constant 1.280000e+03 : f32
    %126 = vector.broadcast %cst_37 : f32 to vector<8x1xf32>
    %127 = arith.divf %125, %126 : vector<8x1xf32>
    %c0_38 = arith.constant 0 : index
    %c0_39 = arith.constant 0 : index
    %128 = vector.load %arg9[%c0_38, %c0_39] : memref<8x4xf32, #tpu.memory_space<vmem>>, vector<8x4xf32>
    %129 = vector.broadcast %127 : vector<8x1xf32> to vector<8x4xf32>
    %130 = arith.mulf %128, %129 : vector<8x4xf32>
    %cst_40 = arith.constant dense<0.000000e+00> : vector<4xf32>
    %131 = vector.multi_reduction <add>, %130, %cst_40 [0] : vector<8x4xf32> to vector<4xf32>
    %132 = vector.shape_cast %131 : vector<4xf32> to vector<1x4xf32>
    %c0_41 = arith.constant 0 : index
    %c0_42 = arith.constant 0 : index
    %133 = vector.load %arg10[%c0_41, %c0_42] : memref<1x4xf32, #tpu.memory_space<vmem>>, vector<1x4xf32>
    %134 = arith.addf %132, %133 : vector<1x4xf32>
    %cst_43 = arith.constant 0.000000e+00 : f32
    %135 = vector.broadcast %cst_43 : f32 to vector<1x4xf32>
    %136 = arith.maximumf %134, %135 : vector<1x4xf32>
    %c0_44 = arith.constant 0 : index
    %c0_45 = arith.constant 0 : index
    %137 = vector.load %arg11[%c0_44, %c0_45] : memref<8x4xf32, #tpu.memory_space<vmem>>, vector<8x4xf32>
    %138 = vector.broadcast %136 : vector<1x4xf32> to vector<8x4xf32>
    %139 = arith.mulf %137, %138 : vector<8x4xf32>
    %cst_46 = arith.constant dense<0.000000e+00> : vector<8xf32>
    %140 = vector.multi_reduction <add>, %139, %cst_46 [1] : vector<8x4xf32> to vector<8xf32>
    %141 = vector.shape_cast %140 : vector<8xf32> to vector<8x1xf32>
    %c0_47 = arith.constant 0 : index
    %c0_48 = arith.constant 0 : index
    %142 = vector.load %arg12[%c0_47, %c0_48] : memref<8x1xf32, #tpu.memory_space<vmem>>, vector<8x1xf32>
    %143 = arith.addf %141, %142 : vector<8x1xf32>
    %144 = arith.negf %143 : vector<8x1xf32>
    %145 = math.exp %144 : vector<8x1xf32>
    %cst_49 = arith.constant 1.000000e+00 : f32
    %146 = vector.broadcast %cst_49 : f32 to vector<8x1xf32>
    %147 = arith.addf %146, %145 : vector<8x1xf32>
    %148 = arith.divf %146, %147 : vector<8x1xf32>
    %149 = vector.broadcast %148 : vector<8x1xf32> to vector<8x1280xf32>
    %150 = arith.mulf %123, %149 : vector<8x1280xf32>
    %151 = arith.addf %150, %37 : vector<8x1280xf32>
    %cst_50 = arith.constant 0.000000e+00 : f32
    %152 = vector.broadcast %cst_50 : f32 to vector<8x1280xf32>
    %153 = arith.maximumf %151, %152 : vector<8x1280xf32>
    %cst_51 = arith.constant dense<0.000000e+00> : vector<8xf32>
    %154 = vector.multi_reduction <add>, %153, %cst_51 [1] : vector<8x1280xf32> to vector<8xf32>
    %155 = vector.shape_cast %154 : vector<8xf32> to vector<8x1xf32>
    %cst_52 = arith.constant 1.280000e+03 : f32
    %156 = vector.broadcast %cst_52 : f32 to vector<8x1xf32>
    %157 = arith.divf %155, %156 : vector<8x1xf32>
    %c0_53 = arith.constant 0 : index
    %c0_54 = arith.constant 0 : index
    %158 = vector.load %arg13[%c0_53, %c0_54] : memref<8x128xf32, #tpu.memory_space<vmem>>, vector<8x128xf32>
    %159 = vector.broadcast %157 : vector<8x1xf32> to vector<8x128xf32>
    %160 = arith.mulf %159, %158 : vector<8x128xf32>
    %cst_55 = arith.constant dense<0.000000e+00> : vector<128xf32>
    %161 = vector.multi_reduction <add>, %160, %cst_55 [0] : vector<8x128xf32> to vector<128xf32>
    %162 = vector.shape_cast %161 : vector<128xf32> to vector<1x128xf32>
    %c0_56 = arith.constant 0 : index
    %c0_57 = arith.constant 0 : index
    %163 = vector.load %arg14[%c0_56, %c0_57] : memref<1x128xf32, #tpu.memory_space<vmem>>, vector<1x128xf32>
    %164 = arith.addf %162, %163 : vector<1x128xf32>
    %165 = vector.shape_cast %164 : vector<1x128xf32> to vector<1x1x128xf32>
    %c0_58 = arith.constant 0 : index
    %c0_59 = arith.constant 0 : index
    %c0_60 = arith.constant 0 : index
    %166 = vector.load %arg15[%c0_58, %c0_59, %c0_60] : memref<1x1x128xf32, #tpu.memory_space<vmem>>, vector<1x1x128xf32>
    tpu.vector_store %arg15[%c0_58, %c0_59, %c0_60], %165 {strides = array<i32>} : memref<1x1x128xf32, #tpu.memory_space<vmem>>, vector<1x1x128xf32>,
    return
  }
  func.func @transform_0(%arg0: i32) -> (i32, i32, i32) {
    %c0_i32 = arith.constant 0 : i32
    %c0_i32_0 = arith.constant 0 : i32
    %c0_i32_1 = arith.constant 0 : i32
    return %arg0, %c0_i32, %c0_i32_0 : i32, i32, i32
  }
  func.func @transform_1(%arg0: i32) -> (i32, i32) {
    %c0_i32 = arith.constant 0 : i32
    %c0_i32_0 = arith.constant 0 : i32
    %c0_i32_1 = arith.constant 0 : i32
    return %c0_i32, %c0_i32_0 : i32, i32
  }
  func.func @transform_2(%arg0: i32) -> (i32, i32) {
    %c0_i32 = arith.constant 0 : i32
    %c0_i32_0 = arith.constant 0 : i32
    %c0_i32_1 = arith.constant 0 : i32
    return %c0_i32, %c0_i32_0 : i32, i32
  }
  func.func @transform_3(%arg0: i32) -> (i32, i32) {
    %c0_i32 = arith.constant 0 : i32
    %c0_i32_0 = arith.constant 0 : i32
    %c0_i32_1 = arith.constant 0 : i32
    return %c0_i32, %c0_i32_0 : i32, i32
  }
  func.func @transform_4(%arg0: i32) -> (i32, i32) {
    %c0_i32 = arith.constant 0 : i32
    %c0_i32_0 = arith.constant 0 : i32
    %c0_i32_1 = arith.constant 0 : i32
    return %c0_i32, %c0_i32_0 : i32, i32
  }
  func.func @transform_5(%arg0: i32) -> (i32, i32) {
    %c0_i32 = arith.constant 0 : i32
    %c0_i32_0 = arith.constant 0 : i32
    %c0_i32_1 = arith.constant 0 : i32
    return %c0_i32, %c0_i32_0 : i32, i32
  }
  func.func @transform_6(%arg0: i32) -> (i32, i32) {
    %c0_i32 = arith.constant 0 : i32
    %c0_i32_0 = arith.constant 0 : i32
    %c0_i32_1 = arith.constant 0 : i32
    return %c0_i32, %c0_i32_0 : i32, i32
  }
  func.func @transform_7(%arg0: i32) -> (i32, i32) {
    %c0_i32 = arith.constant 0 : i32
    %c0_i32_0 = arith.constant 0 : i32
    %c0_i32_1 = arith.constant 0 : i32
    return %c0_i32, %c0_i32_0 : i32, i32
  }
  func.func @transform_8(%arg0: i32) -> (i32, i32) {
    %c0_i32 = arith.constant 0 : i32
    %c0_i32_0 = arith.constant 0 : i32
    %c0_i32_1 = arith.constant 0 : i32
    return %c0_i32, %c0_i32_0 : i32, i32
  }
  func.func @transform_9(%arg0: i32) -> (i32, i32) {
    %c0_i32 = arith.constant 0 : i32
    %c0_i32_0 = arith.constant 0 : i32
    %c0_i32_1 = arith.constant 0 : i32
    return %c0_i32, %c0_i32_0 : i32, i32
  }
  func.func @transform_10(%arg0: i32) -> (i32, i32) {
    %c0_i32 = arith.constant 0 : i32
    %c0_i32_0 = arith.constant 0 : i32
    %c0_i32_1 = arith.constant 0 : i32
    return %c0_i32, %c0_i32_0 : i32, i32
  }
  func.func @transform_11(%arg0: i32) -> (i32, i32) {
    %c0_i32 = arith.constant 0 : i32
    %c0_i32_0 = arith.constant 0 : i32
    %c0_i32_1 = arith.constant 0 : i32
    return %c0_i32, %c0_i32_0 : i32, i32
  }
  func.func @transform_12(%arg0: i32) -> (i32, i32) {
    %c0_i32 = arith.constant 0 : i32
    %c0_i32_0 = arith.constant 0 : i32
    %c0_i32_1 = arith.constant 0 : i32
    return %c0_i32, %c0_i32_0 : i32, i32
  }
  func.func @transform_13(%arg0: i32) -> (i32, i32) {
    %c0_i32 = arith.constant 0 : i32
    %c0_i32_0 = arith.constant 0 : i32
    %c0_i32_1 = arith.constant 0 : i32
    return %c0_i32, %c0_i32_0 : i32, i32
  }
  func.func @transform_14(%arg0: i32) -> (i32, i32, i32) {
    %c0_i32 = arith.constant 0 : i32
    %c0_i32_0 = arith.constant 0 : i32
    %c0_i32_1 = arith.constant 0 : i32
    return %arg0, %c0_i32, %c0_i32_0 : i32, i32, i32
  }
}

</mosaic_0001>

<llo_original>
// kernel: tpu_custom_call.1
$region0: #{tpu_custom_call.1}
  #allocation0 [shape = 'u32[]', space=smem, size = 0x4, offset = 0x4, fixed_abs, tag = 'smem constant byte address 0x4 - core index']
  #allocation1 [shape = 'u32[144,128]{1,0:T(1,128)}', space=vmem, size = 0x12000, scoped, tag = 'internal scratch']
  %s0 = inlined_call_operand.vmem [shape: f32[2,1,1280], index: 0, kind: input, shape index: {}]
  %s1 = inlined_call_operand.hbm [shape: f32[9,1280], index: 1, kind: input, shape index: {}]
  %s2 = inlined_call_operand.vmem [shape: bf16[8,9], index: 2, kind: input, shape index: {}]
  %s3 = inlined_call_operand.vmem [shape: f32[8,1], index: 3, kind: input, shape index: {}]
  %s4 = inlined_call_operand.vmem [shape: bf16[8,72], index: 4, kind: input, shape index: {}]
  %s5 = inlined_call_operand.vmem [shape: f32[8,1], index: 5, kind: input, shape index: {}]
  %s6 = inlined_call_operand.vmem [shape: bf16[8,72], index: 6, kind: input, shape index: {}]
  %s7 = inlined_call_operand.vmem [shape: f32[8,1], index: 7, kind: input, shape index: {}]
  %s8 = inlined_call_operand.vmem [shape: f32[8,4], index: 8, kind: input, shape index: {}]
  %s9 = inlined_call_operand.vmem [shape: f32[1,4], index: 9, kind: input, shape index: {}]
  %s10 = inlined_call_operand.vmem [shape: f32[8,4], index: 10, kind: input, shape index: {}]
  %s11 = inlined_call_operand.vmem [shape: f32[8,1], index: 11, kind: input, shape index: {}]
  %s12 = inlined_call_operand.vmem [shape: f32[8,128], index: 12, kind: input, shape index: {}]
  %s13 = inlined_call_operand.vmem [shape: f32[1,128], index: 13, kind: input, shape index: {}]
  %s14 = inlined_call_operand.hbm [shape: f32[2,1,128], index: 14, kind: output, shape index: {}]
  %s15 = sld [smem:[#allocation0]]
  $region93: #{tpu_custom_call.1} parent=0
    _
  %s17 = ssub.s32 1, %s15
  %s18 = scalar_select 0, %s17, %s15
  $region1: #{tpu_custom_call.1} parent=0
    #allocation2 [shape = 'u8[81920]{0}', space=vmem, size = 0x14000, scoped, tag = 'input window, operand 1, single buffered']
    #allocation3 [shape = 's32[2]{0}', space=sflag, size = 0x8, scoped, tag = 'scoped memory for tpu_custom_call.1']
    #allocation4 [shape = 's32[2]{0}', space=sflag, size = 0x8, scoped, tag = 'scoped memory for tpu_custom_call.1']
    #allocation5 [shape = 'u8[1024]{0}', space=vmem, size = 0x400, scoped, tag = 'output window, operand 0']
    %19 = vsyncpa [#allocation3], 0
    %20 = vsyncpa [#allocation4], 0
    %s21 = scalar_lea.sflag [#allocation4], 1
    %22 = vsyncpa %s21, 0
    loop: start=0, step=1, limit=4
    $region2: #{tpu_custom_call.1} parent=1 // loop_pre_header
      _
    $region3: #{tpu_custom_call.1} parent=1 // loop_header
      %s24 = sphi 0, %s28
      %p25 = scmp.ge.s32.totalorder %s24, 4
      %s34 = sphi 0, %s36
      %s37 = sphi 0, %s34
      %s38 = sphi 0, %s37
      %s54 = sphi 0, %s38
      %s58 = sphi 0, %s58
      %s60 = sphi 0, %s58
      %s61 = sphi 0, %s60
      %s75 = sphi 0, %s61
      %s79 = sphi 0, %s79
      %s81 = sphi 0, %s79
      %s82 = sphi 0, %s81
      %s96 = sphi 0, %s82
      %s100 = sphi 0, %s100
      %s102 = sphi 0, %s100
      %s103 = sphi 0, %s102
      %s117 = sphi 0, %s103
      %s121 = sphi 0, %s121
      %s123 = sphi 0, %s121
      %s124 = sphi 0, %s123
      %s138 = sphi 0, %s124
      %s142 = sphi 0, %s142
      %s144 = sphi 0, %s142
      %s145 = sphi 0, %s144
      %s159 = sphi 0, %s145
      %s163 = sphi 0, %s163
      %s165 = sphi 0, %s163
      %s166 = sphi 0, %s165
      %s180 = sphi 0, %s166
      %s184 = sphi 0, %s184
      %s186 = sphi 0, %s184
      %s187 = sphi 0, %s186
      %s201 = sphi 0, %s187
      %s205 = sphi 0, %s205
      %s207 = sphi 0, %s205
      %s208 = sphi 0, %s207
      %s222 = sphi 0, %s208
      %s226 = sphi 0, %s226
      %s228 = sphi 0, %s226
      %s229 = sphi 0, %s228
      %s243 = sphi 0, %s229
      %s247 = sphi 0, %s247
      %s249 = sphi 0, %s247
      %s250 = sphi 0, %s249
      %s264 = sphi 0, %s250
      %s268 = sphi 0, %s268
      %s270 = sphi 0, %s268
      %s271 = sphi 0, %s270
      %s285 = sphi 0, %s271
      %s289 = sphi 0, %s289
      %s291 = sphi 0, %s289
      %s292 = sphi 0, %s291
      %s306 = sphi 0, %s292
      %s310 = sphi 0, %s310
      %s312 = sphi 0, %s310
      %s313 = sphi 0, %s312
      %s327 = sphi 0, %s313
      %s333 = sphi 0, %s335
      %s336 = sphi 0, %s333
      %s337 = sphi 0, %s336
      %s353 = sphi 0, %s337
    $region4: #{tpu_custom_call.1} parent=1 // loop_header_branch
      %27 = sbr.rel (%p25) target = $region8
    $region5: #{tpu_custom_call.1} parent=1 // loop_body
      %s29 = ssub.s32 %s24, 1
      %s30 = ssub.s32 %s24, 2
      %s31 = sadd.s32 %s24, 1
      %s32 = ssub.s32 %s24, %s31
      %p33 = scmp.eq.s32.totalorder %s32, 0
      %s35 = sadd.s32 %s34, 1
      %s36 = scalar_select %p33, %s34, %s35
      %p39 = pneg %p33
      %p40 = scmp.eq.s32.totalorder %s24, 1
      %p41 = por %p39, %p40
      %p42 = scmp.ne.s32.totalorder %s34, %s37
      %p43 = scmp.eq.s32.totalorder %s24, 0
      %p44 = por %p42, %p43
      %p45 = scmp.ne.s32.totalorder %s34, %s37
      %p46 = scmp.eq.s32.totalorder %s29, 1
      %p47 = por %p45, %p46
      %p48 = scmp.ne.s32.totalorder %s37, %s38
      %p49 = scmp.eq.s32.totalorder %s29, 0
      %p50 = por %p48, %p49
      %p51 = scmp.ne.s32.totalorder %s37, %s38
      %p52 = scmp.eq.s32.totalorder %s30, 1
      %p53 = por %p51, %p52
      %p55 = scmp.ne.s32.totalorder %s38, %s54
      %p56 = scmp.eq.s32.totalorder %s30, 0
      %p57 = por %p55, %p56
      %s59 = sadd.s32 %s58, 1
      %p62 = scmp.eq.s32.totalorder %s24, 1
      %p63 = scmp.ne.s32.totalorder %s58, %s60
      %p64 = scmp.eq.s32.totalorder %s24, 0
      %p65 = por %p63, %p64
      %p66 = scmp.ne.s32.totalorder %s58, %s60
      %p67 = scmp.eq.s32.totalorder %s29, 1
      %p68 = por %p66, %p67
      %p69 = scmp.ne.s32.totalorder %s60, %s61
      %p70 = scmp.eq.s32.totalorder %s29, 0
      %p71 = por %p69, %p70
      %p72 = scmp.ne.s32.totalorder %s60, %s61
      %p73 = scmp.eq.s32.totalorder %s30, 1
      %p74 = por %p72, %p73
      %p76 = scmp.ne.s32.totalorder %s61, %s75
      %p77 = scmp.eq.s32.totalorder %s30, 0
      %p78 = por %p76, %p77
      %s80 = sadd.s32 %s79, 1
      %p83 = scmp.eq.s32.totalorder %s24, 1
      %p84 = scmp.ne.s32.totalorder %s79, %s81
      %p85 = scmp.eq.s32.totalorder %s24, 0
      %p86 = por %p84, %p85
      %p87 = scmp.ne.s32.totalorder %s79, %s81
      %p88 = scmp.eq.s32.totalorder %s29, 1
      %p89 = por %p87, %p88
      %p90 = scmp.ne.s32.totalorder %s81, %s82
      %p91 = scmp.eq.s32.totalorder %s29, 0
      %p92 = por %p90, %p91
      %p93 = scmp.ne.s32.totalorder %s81, %s82
      %p94 = scmp.eq.s32.totalorder %s30, 1
      %p95 = por %p93, %p94
      %p97 = scmp.ne.s32.totalorder %s82, %s96
      %p98 = scmp.eq.s32.totalorder %s30, 0
      %p99 = por %p97, %p98
      %s101 = sadd.s32 %s100, 1
      %p104 = scmp.eq.s32.totalorder %s24, 1
      %p105 = scmp.ne.s32.totalorder %s100, %s102
      %p106 = scmp.eq.s32.totalorder %s24, 0
      %p107 = por %p105, %p106
      %p108 = scmp.ne.s32.totalorder %s100, %s102
      %p109 = scmp.eq.s32.totalorder %s29, 1
      %p110 = por %p108, %p109
      %p111 = scmp.ne.s32.totalorder %s102, %s103
      %p112 = scmp.eq.s32.totalorder %s29, 0
      %p113 = por %p111, %p112
      %p114 = scmp.ne.s32.totalorder %s102, %s103
      %p115 = scmp.eq.s32.totalorder %s30, 1
      %p116 = por %p114, %p115
      %p118 = scmp.ne.s32.totalorder %s103, %s117
      %p119 = scmp.eq.s32.totalorder %s30, 0
      %p120 = por %p118, %p119
      %s122 = sadd.s32 %s121, 1
      %p125 = scmp.eq.s32.totalorder %s24, 1
      %p126 = scmp.ne.s32.totalorder %s121, %s123
      %p127 = scmp.eq.s32.totalorder %s24, 0
      %p128 = por %p126, %p127
      %p129 = scmp.ne.s32.totalorder %s121, %s123
      %p130 = scmp.eq.s32.totalorder %s29, 1
      %p131 = por %p129, %p130
      %p132 = scmp.ne.s32.totalorder %s123, %s124
      %p133 = scmp.eq.s32.totalorder %s29, 0
      %p134 = por %p132, %p133
      %p135 = scmp.ne.s32.totalorder %s123, %s124
      %p136 = scmp.eq.s32.totalorder %s30, 1
      %p137 = por %p135, %p136
      %p139 = scmp.ne.s32.totalorder %s124, %s138
      %p140 = scmp.eq.s32.totalorder %s30, 0
      %p141 = por %p139, %p140
      %s143 = sadd.s32 %s142, 1
      %p146 = scmp.eq.s32.totalorder %s24, 1
      %p147 = scmp.ne.s32.totalorder %s142, %s144
      %p148 = scmp.eq.s32.totalorder %s24, 0
      %p149 = por %p147, %p148
      %p150 = scmp.ne.s32.totalorder %s142, %s144
      %p151 = scmp.eq.s32.totalorder %s29, 1
      %p152 = por %p150, %p151
      %p153 = scmp.ne.s32.totalorder %s144, %s145
      %p154 = scmp.eq.s32.totalorder %s29, 0
      %p155 = por %p153, %p154
      %p156 = scmp.ne.s32.totalorder %s144, %s145
      %p157 = scmp.eq.s32.totalorder %s30, 1
      %p158 = por %p156, %p157
      %p160 = scmp.ne.s32.totalorder %s145, %s159
      %p161 = scmp.eq.s32.totalorder %s30, 0
      %p162 = por %p160, %p161
      %s164 = sadd.s32 %s163, 1
      %p167 = scmp.eq.s32.totalorder %s24, 1
      %p168 = scmp.ne.s32.totalorder %s163, %s165
      %p169 = scmp.eq.s32.totalorder %s24, 0
      %p170 = por %p168, %p169
      %p171 = scmp.ne.s32.totalorder %s163, %s165
      %p172 = scmp.eq.s32.totalorder %s29, 1
      %p173 = por %p171, %p172
      %p174 = scmp.ne.s32.totalorder %s165, %s166
      %p175 = scmp.eq.s32.totalorder %s29, 0
      %p176 = por %p174, %p175
      %p177 = scmp.ne.s32.totalorder %s165, %s166
      %p178 = scmp.eq.s32.totalorder %s30, 1
      %p179 = por %p177, %p178
      %p181 = scmp.ne.s32.totalorder %s166, %s180
      %p182 = scmp.eq.s32.totalorder %s30, 0
      %p183 = por %p181, %p182
      %s185 = sadd.s32 %s184, 1
      %p188 = scmp.eq.s32.totalorder %s24, 1
      %p189 = scmp.ne.s32.totalorder %s184, %s186
      %p190 = scmp.eq.s32.totalorder %s24, 0
      %p191 = por %p189, %p190
      %p192 = scmp.ne.s32.totalorder %s184, %s186
      %p193 = scmp.eq.s32.totalorder %s29, 1
      %p194 = por %p192, %p193
      %p195 = scmp.ne.s32.totalorder %s186, %s187
      %p196 = scmp.eq.s32.totalorder %s29, 0
      %p197 = por %p195, %p196
      %p198 = scmp.ne.s32.totalorder %s186, %s187
      %p199 = scmp.eq.s32.totalorder %s30, 1
      %p200 = por %p198, %p199
      %p202 = scmp.ne.s32.totalorder %s187, %s201
      %p203 = scmp.eq.s32.totalorder %s30, 0
      %p204 = por %p202, %p203
      %s206 = sadd.s32 %s205, 1
      %p209 = scmp.eq.s32.totalorder %s24, 1
      %p210 = scmp.ne.s32.totalorder %s205, %s207
      %p211 = scmp.eq.s32.totalorder %s24, 0
      %p212 = por %p210, %p211
      %p213 = scmp.ne.s32.totalorder %s205, %s207
      %p214 = scmp.eq.s32.totalorder %s29, 1
      %p215 = por %p213, %p214
      %p216 = scmp.ne.s32.totalorder %s207, %s208
      %p217 = scmp.eq.s32.totalorder %s29, 0
      %p218 = por %p216, %p217
      %p219 = scmp.ne.s32.totalorder %s207, %s208
      %p220 = scmp.eq.s32.totalorder %s30, 1
      %p221 = por %p219, %p220
      %p223 = scmp.ne.s32.totalorder %s208, %s222
      %p224 = scmp.eq.s32.totalorder %s30, 0
      %p225 = por %p223, %p224
      %s227 = sadd.s32 %s226, 1
      %p230 = scmp.eq.s32.totalorder %s24, 1
      %p231 = scmp.ne.s32.totalorder %s226, %s228
      %p232 = scmp.eq.s32.totalorder %s24, 0
      %p233 = por %p231, %p232
      %p234 = scmp.ne.s32.totalorder %s226, %s228
      %p235 = scmp.eq.s32.totalorder %s29, 1
      %p236 = por %p234, %p235
      %p237 = scmp.ne.s32.totalorder %s228, %s229
      %p238 = scmp.eq.s32.totalorder %s29, 0
      %p239 = por %p237, %p238
      %p240 = scmp.ne.s32.totalorder %s228, %s229
      %p241 = scmp.eq.s32.totalorder %s30, 1
      %p242 = por %p240, %p241
      %p244 = scmp.ne.s32.totalorder %s229, %s243
      %p245 = scmp.eq.s32.totalorder %s30, 0
      %p246 = por %p244, %p245
      %s248 = sadd.s32 %s247, 1
      %p251 = scmp.eq.s32.totalorder %s24, 1
      %p252 = scmp.ne.s32.totalorder %s247, %s249
      %p253 = scmp.eq.s32.totalorder %s24, 0
      %p254 = por %p252, %p253
      %p255 = scmp.ne.s32.totalorder %s247, %s249
      %p256 = scmp.eq.s32.totalorder %s29, 1
      %p257 = por %p255, %p256
      %p258 = scmp.ne.s32.totalorder %s249, %s250
      %p259 = scmp.eq.s32.totalorder %s29, 0
      %p260 = por %p258, %p259
      %p261 = scmp.ne.s32.totalorder %s249, %s250
      %p262 = scmp.eq.s32.totalorder %s30, 1
      %p263 = por %p261, %p262
      %p265 = scmp.ne.s32.totalorder %s250, %s264
      %p266 = scmp.eq.s32.totalorder %s30, 0
      %p267 = por %p265, %p266
      %s269 = sadd.s32 %s268, 1
      %p272 = scmp.eq.s32.totalorder %s24, 1
      %p273 = scmp.ne.s32.totalorder %s268, %s270
      %p274 = scmp.eq.s32.totalorder %s24, 0
      %p275 = por %p273, %p274
      %p276 = scmp.ne.s32.totalorder %s268, %s270
      %p277 = scmp.eq.s32.totalorder %s29, 1
      %p278 = por %p276, %p277
      %p279 = scmp.ne.s32.totalorder %s270, %s271
      %p280 = scmp.eq.s32.totalorder %s29, 0
      %p281 = por %p279, %p280
      %p282 = scmp.ne.s32.totalorder %s270, %s271
      %p283 = scmp.eq.s32.totalorder %s30, 1
      %p284 = por %p282, %p283
      %p286 = scmp.ne.s32.totalorder %s271, %s285
      %p287 = scmp.eq.s32.totalorder %s30, 0
      %p288 = por %p286, %p287
      %s290 = sadd.s32 %s289, 1
      %p293 = scmp.eq.s32.totalorder %s24, 1
      %p294 = scmp.ne.s32.totalorder %s289, %s291
      %p295 = scmp.eq.s32.totalorder %s24, 0
      %p296 = por %p294, %p295
      %p297 = scmp.ne.s32.totalorder %s289, %s291
      %p298 = scmp.eq.s32.totalorder %s29, 1
      %p299 = por %p297, %p298
      %p300 = scmp.ne.s32.totalorder %s291, %s292
      %p301 = scmp.eq.s32.totalorder %s29, 0
      %p302 = por %p300, %p301
      %p303 = scmp.ne.s32.totalorder %s291, %s292
      %p304 = scmp.eq.s32.totalorder %s30, 1
      %p305 = por %p303, %p304
      %p307 = scmp.ne.s32.totalorder %s292, %s306
      %p308 = scmp.eq.s32.totalorder %s30, 0
      %p309 = por %p307, %p308
      %s311 = sadd.s32 %s310, 1
      %p314 = scmp.eq.s32.totalorder %s24, 1
      %p315 = scmp.ne.s32.totalorder %s310, %s312
      %p316 = scmp.eq.s32.totalorder %s24, 0
      %p317 = por %p315, %p316
      %p318 = scmp.ne.s32.totalorder %s310, %s312
      %p319 = scmp.eq.s32.totalorder %s29, 1
      %p320 = por %p318, %p319
      %p321 = scmp.ne.s32.totalorder %s312, %s313
      %p322 = scmp.eq.s32.totalorder %s29, 0
      %p323 = por %p321, %p322
      %p324 = scmp.ne.s32.totalorder %s312, %s313
      %p325 = scmp.eq.s32.totalorder %s30, 1
      %p326 = por %p324, %p325
      %p328 = scmp.ne.s32.totalorder %s313, %s327
      %p329 = scmp.eq.s32.totalorder %s30, 0
      %p330 = por %p328, %p329
      %s331 = ssub.s32 %s24, %s31
      %p332 = scmp.eq.s32.totalorder %s331, 0
      %s334 = sadd.s32 %s333, 1
      %s335 = scalar_select %p332, %s333, %s334
      %p338 = pneg %p332
      %p339 = scmp.eq.s32.totalorder %s24, 1
      %p340 = por %p338, %p339
      %p341 = scmp.ne.s32.totalorder %s333, %s336
      %p342 = scmp.eq.s32.totalorder %s24, 0
      %p343 = por %p341, %p342
      %p344 = scmp.ne.s32.totalorder %s333, %s336
      %p345 = scmp.eq.s32.totalorder %s29, 1
      %p346 = por %p344, %p345
      %p347 = scmp.ne.s32.totalorder %s336, %s337
      %p348 = scmp.eq.s32.totalorder %s29, 0
      %p349 = por %p347, %p348
      %p350 = scmp.ne.s32.totalorder %s336, %s337
      %p351 = scmp.eq.s32.totalorder %s30, 1
      %p352 = por %p350, %p351
      %p354 = scmp.ne.s32.totalorder %s337, %s353
      %p355 = scmp.eq.s32.totalorder %s30, 0
      %p356 = por %p354, %p355
      %p357 = scmp.le.s32.totalorder 1, %s24
      %p358 = scmp.lt.s32.totalorder %s24, 3
      %p359 = pnand %p357, %p358
      %p360 = pneg %p359
      // Predicated region
      $region9: #{tpu_custom_call.1} parent=5 // pred_check
        _
      $region10: #{tpu_custom_call.1} parent=5 // pred_check_branch
        %362 = sbr.rel (%p359) target = $region12
      $region11: #{tpu_custom_call.1} parent=5 // pred_region
        %s363 = ssub.s32 %s24, 1
        // Predicated region
        $region13: #{tpu_custom_call.1} parent=11 // pred_check
          %p364 = pneg %p71
        $region14: #{tpu_custom_call.1} parent=11 // pred_check_branch
          %366 = sbr.rel (%p364) target = $region16
        $region15: #{tpu_custom_call.1} parent=11 // pred_region
          %s368 = ssub.s32 2560, 2560
          %369 = vsyncadd [#allocation3], %s368
          %s370 = sshll.u32 [#allocation2], 4
          %s371 = int_to_ptr.vmem [resolvable:$true] %s370
          %376 = dma.hbm_to_vmem [thread:$0]  %s1, 2560, %s371, [#allocation3], 1280, 1280, 80
        $region16: #{tpu_custom_call.1} parent=11 // pred_fallthru
          _
        // Predicated region
        $region17: #{tpu_custom_call.1} parent=11 // pred_check
          %p377 = pneg %p92
        $region18: #{tpu_custom_call.1} parent=11 // pred_check_branch
          %379 = sbr.rel (%p377) target = $region20
        $region19: #{tpu_custom_call.1} parent=11 // pred_region
          _
        $region20: #{tpu_custom_call.1} parent=11 // pred_fallthru
          _
        // Predicated region
        $region21: #{tpu_custom_call.1} parent=11 // pred_check
          %p380 = pneg %p113
        $region22: #{tpu_custom_call.1} parent=11 // pred_check_branch
          %382 = sbr.rel (%p380) target = $region24
        $region23: #{tpu_custom_call.1} parent=11 // pred_region
          _
        $region24: #{tpu_custom_call.1} parent=11 // pred_fallthru
          _
        // Predicated region
        $region25: #{tpu_custom_call.1} parent=11 // pred_check
          %p383 = pneg %p134
        $region26: #{tpu_custom_call.1} parent=11 // pred_check_branch
          %385 = sbr.rel (%p383) target = $region28
        $region27: #{tpu_custom_call.1} parent=11 // pred_region
          _
        $region28: #{tpu_custom_call.1} parent=11 // pred_fallthru
          _
        // Predicated region
        $region29: #{tpu_custom_call.1} parent=11 // pred_check
          %p386 = pneg %p155
        $region30: #{tpu_custom_call.1} parent=11 // pred_check_branch
          %388 = sbr.rel (%p386) target = $region32
        $region31: #{tpu_custom_call.1} parent=11 // pred_region
          _
        $region32: #{tpu_custom_call.1} parent=11 // pred_fallthru
          _
        // Predicated region
        $region33: #{tpu_custom_call.1} parent=11 // pred_check
          %p389 = pneg %p176
        $region34: #{tpu_custom_call.1} parent=11 // pred_check_branch
          %391 = sbr.rel (%p389) target = $region36
        $region35: #{tpu_custom_call.1} parent=11 // pred_region
          _
        $region36: #{tpu_custom_call.1} parent=11 // pred_fallthru
          _
        // Predicated region
        $region37: #{tpu_custom_call.1} parent=11 // pred_check
          %p392 = pneg %p197
        $region38: #{tpu_custom_call.1} parent=11 // pred_check_branch
          %394 = sbr.rel (%p392) target = $region40
        $region39: #{tpu_custom_call.1} parent=11 // pred_region
          _
        $region40: #{tpu_custom_call.1} parent=11 // pred_fallthru
          _
        // Predicated region
        $region41: #{tpu_custom_call.1} parent=11 // pred_check
          %p395 = pneg %p218
        $region42: #{tpu_custom_call.1} parent=11 // pred_check_branch
          %397 = sbr.rel (%p395) target = $region44
        $region43: #{tpu_custom_call.1} parent=11 // pred_region
          _
        $region44: #{tpu_custom_call.1} parent=11 // pred_fallthru
          _
        // Predicated region
        $region45: #{tpu_custom_call.1} parent=11 // pred_check
          %p398 = pneg %p239
        $region46: #{tpu_custom_call.1} parent=11 // pred_check_branch
          %400 = sbr.rel (%p398) target = $region48
        $region47: #{tpu_custom_call.1} parent=11 // pred_region
          _
        $region48: #{tpu_custom_call.1} parent=11 // pred_fallthru
          _
        // Predicated region
        $region49: #{tpu_custom_call.1} parent=11 // pred_check
          %p401 = pneg %p260
        $region50: #{tpu_custom_call.1} parent=11 // pred_check_branch
          %403 = sbr.rel (%p401) target = $region52
        $region51: #{tpu_custom_call.1} parent=11 // pred_region
          _
        $region52: #{tpu_custom_call.1} parent=11 // pred_fallthru
          _
        // Predicated region
        $region53: #{tpu_custom_call.1} parent=11 // pred_check
          %p404 = pneg %p281
        $region54: #{tpu_custom_call.1} parent=11 // pred_check_branch
          %406 = sbr.rel (%p404) target = $region56
        $region55: #{tpu_custom_call.1} parent=11 // pred_region
          _
        $region56: #{tpu_custom_call.1} parent=11 // pred_fallthru
          _
        // Predicated region
        $region57: #{tpu_custom_call.1} parent=11 // pred_check
          %p407 = pneg %p302
        $region58: #{tpu_custom_call.1} parent=11 // pred_check_branch
          %409 = sbr.rel (%p407) target = $region60
        $region59: #{tpu_custom_call.1} parent=11 // pred_region
          _
        $region60: #{tpu_custom_call.1} parent=11 // pred_fallthru
          _
        // Predicated region
        $region61: #{tpu_custom_call.1} parent=11 // pred_check
          %p410 = pneg %p323
        $region62: #{tpu_custom_call.1} parent=11 // pred_check_branch
          %412 = sbr.rel (%p410) target = $region64
        $region63: #{tpu_custom_call.1} parent=11 // pred_region
          _
        $region64: #{tpu_custom_call.1} parent=11 // pred_fallthru
          _
      $region12: #{tpu_custom_call.1} parent=5 // pred_fallthru
        _
      %p413 = scmp.lt.s32.totalorder %s24, 2
      // Predicated region
      $region65: #{tpu_custom_call.1} parent=5 // pred_check
        %p414 = pneg %p413
      $region66: #{tpu_custom_call.1} parent=5 // pred_check_branch
        %416 = sbr.rel (%p414) target = $region68
      $region67: #{tpu_custom_call.1} parent=5 // pred_region
        // Predicated region
        $region69: #{tpu_custom_call.1} parent=67 // pred_check
          %p417 = pneg %p44
        $region70: #{tpu_custom_call.1} parent=67 // pred_check_branch
          %419 = sbr.rel (%p417) target = $region72
        $region71: #{tpu_custom_call.1} parent=67 // pred_region
          %p420 = scmp.lt.s32.totalorder %s24, 1
          %s421 = scalar_select %p420, %s24, 1
          %s422 = smul.addr %s421, 10
          %s423 = scalar_lea.vmem %s0, %s422
        $region72: #{tpu_custom_call.1} parent=67 // pred_fallthru
          _
      $region68: #{tpu_custom_call.1} parent=5 // pred_fallthru
        _
      %p424 = scmp.le.s32.totalorder 1, %s24
      %p425 = scmp.lt.s32.totalorder %s24, 3
      %p426 = pnand %p424, %p425
      %p427 = pneg %p426
      // Predicated region
      $region73: #{tpu_custom_call.1} parent=5 // pred_check
        _
      $region74: #{tpu_custom_call.1} parent=5 // pred_check_branch
        %429 = sbr.rel (%p426) target = $region76
      $region75: #{tpu_custom_call.1} parent=5 // pred_region
        %s430 = ssub.s32 %s24, 1
        // Predicated region
        $region77: #{tpu_custom_call.1} parent=75 // pred_check
          %p431 = pneg %p71
        $region78: #{tpu_custom_call.1} parent=75 // pred_check_branch
          %433 = sbr.rel (%p431) target = $region80
        $region79: #{tpu_custom_call.1} parent=75 // pred_region
          %434 = dma.done [#allocation3], 2560
        $region80: #{tpu_custom_call.1} parent=75 // pred_fallthru
          _
        %p435 = scmp.lt.s32.totalorder %s29, 1
        %s436 = scalar_select %p435, %s29, 1
        %s437 = smul.addr %s436, 10
        %s438 = scalar_lea.vmem %s0, %s437
        %p439 = pneg %p50
        %p440 = pneg %p47
        %p441 = pneg %p71
        %p442 = pneg %p68
        %p443 = pneg %p92
        %p444 = pneg %p89
        %p445 = pneg %p113
        %p446 = pneg %p110
        %p447 = pneg %p134
        %p448 = pneg %p131
        %p449 = pneg %p155
        %p450 = pneg %p152
        %p451 = pneg %p176
        %p452 = pneg %p173
        %p453 = pneg %p197
        %p454 = pneg %p194
        %p455 = pneg %p218
        %p456 = pneg %p215
        %p457 = pneg %p239
        %p458 = pneg %p236
        %p459 = pneg %p260
        %p460 = pneg %p257
        %p461 = pneg %p281
        %p462 = pneg %p278
        %p463 = pneg %p302
        %p464 = pneg %p299
        %p465 = pneg %p323
        %p466 = pneg %p320
        %p467 = pneg %p349
        %p468 = pneg %p346
        %s469 = sand.u32 %s336, 1
        %s470 = scalar_lea.sflag [#allocation4], %s469
        %s471 = sand.u32 %s336, 1
        %s472 = scalar_lea.vmem [#allocation5], %s471
        %p473 = scmp.lt.s32.totalorder %s29, 1
        %s474 = scalar_select %p473, %s29, 1
        %s475 = smul.addr %s474, 10
        %s476 = scalar_lea.vmem %s0, %s475
        %v478 = vld [vmem:[#allocation2] sm:$0xff]
        %v479 = vld [vmem:[#allocation2 + $0x8] sm:$0xff]
        %v480 = vld [vmem:[#allocation2 + $0x10] sm:$0xff]
        %v481 = vld [vmem:[#allocation2 + $0x18] sm:$0xff]
        %v482 = vld [vmem:[#allocation2 + $0x20] sm:$0xff]
        %v483 = vld [vmem:[#allocation2 + $0x28] sm:$0xff]
        %v484 = vld [vmem:[#allocation2 + $0x30] sm:$0xff]
        %v485 = vld [vmem:[#allocation2 + $0x38] sm:$0xff]
        %v486 = vld [vmem:[#allocation2 + $0x40] sm:$0xff]
        %v487 = vld [vmem:[#allocation2 + $0x48] sm:$0xff]
        %v488 = vld [vmem:[#allocation2 + $0x50] sm:$0x1]
        %v489 = vld [vmem:[#allocation2 + $0x58] sm:$0x1]
        %v490 = vld [vmem:[#allocation2 + $0x60] sm:$0x1]
        %v491 = vld [vmem:[#allocation2 + $0x68] sm:$0x1]
        %v492 = vld [vmem:[#allocation2 + $0x70] sm:$0x1]
        %v493 = vld [vmem:[#allocation2 + $0x78] sm:$0x1]
        %v494 = vld [vmem:[#allocation2 + $0x80] sm:$0x1]
        %v495 = vld [vmem:[#allocation2 + $0x88] sm:$0x1]
        %v496 = vld [vmem:[#allocation2 + $0x90] sm:$0x1]
        %v497 = vld [vmem:[#allocation2 + $0x98] sm:$0x1]
        %v498 = vld [vmem:[%s476] sm:$0xff]
        %v499 = vld [vmem:[%s476 + $0x8] sm:$0x3]
        %v500 = vld [vmem:[%s2] sm:$0xf]
        %v501 = vld [vmem:[%s3] sm:$0xff]
        %v504 = vlaneseq
        %v505 = vshrl.u32 %v504, 7
        %v506 = vsub.s32 0, %v505
        %v507 = vrot.slane %v498, %v506
        %v508 = vlaneseq
        %v509 = vshrl.u32 %v508, 7
        %v510 = vsub.s32 1, %v509
        %v511 = vrot.slane %v498, %v510
        %v512 = vlaneseq
        %v513 = vshrl.u32 %v512, 7
        %v514 = vsub.s32 2, %v513
        %v515 = vrot.slane %v498, %v514
        %v516 = vlaneseq
        %v517 = vshrl.u32 %v516, 7
        %v518 = vsub.s32 3, %v517
        %v519 = vrot.slane %v498, %v518
        %v520 = vlaneseq
        %v521 = vshrl.u32 %v520, 7
        %v522 = vsub.s32 4, %v521
        %v523 = vrot.slane %v498, %v522
        %v524 = vlaneseq
        %v525 = vshrl.u32 %v524, 7
        %v526 = vsub.s32 5, %v525
        %v527 = vrot.slane %v498, %v526
        %v528 = vlaneseq
        %v529 = vshrl.u32 %v528, 7
        %v530 = vsub.s32 6, %v529
        %v531 = vrot.slane %v498, %v530
        %v532 = vlaneseq
        %v533 = vshrl.u32 %v532, 7
        %v534 = vsub.s32 7, %v533
        %v535 = vrot.slane %v498, %v534
        %v536 = vlaneseq
        %v537 = vshrl.u32 %v536, 7
        %v538 = vsub.s32 0, %v537
        %v539 = vrot.slane %v499, %v538
        %v540 = vlaneseq
        %v541 = vshrl.u32 %v540, 7
        %v542 = vsub.s32 1, %v541
        %v543 = vrot.slane %v499, %v542
        %554 = vrot.lane.b32.xlu0 %v507, 81
        %v555 = vpop.permute.xlu0 %554
        %556 = vrot.lane.b32.xlu0 %v511, 81
        %v557 = vpop.permute.xlu0 %556
        %558 = vrot.lane.b32.xlu0 %v515, 81
        %v559 = vpop.permute.xlu0 %558
        %560 = vrot.lane.b32.xlu0 %v519, 81
        %v561 = vpop.permute.xlu0 %560
        %562 = vrot.lane.b32.xlu0 %v523, 81
        %v563 = vpop.permute.xlu0 %562
        %564 = vrot.lane.b32.xlu0 %v527, 81
        %v565 = vpop.permute.xlu0 %564
        %566 = vrot.lane.b32.xlu0 %v531, 81
        %v567 = vpop.permute.xlu0 %566
        %568 = vrot.lane.b32.xlu0 %v535, 81
        %v569 = vpop.permute.xlu0 %568
        %570 = vrot.lane.b32.xlu0 %v539, 81
        %v571 = vpop.permute.xlu0 %570
        %572 = vrot.lane.b32.xlu0 %v543, 81
        %v573 = vpop.permute.xlu0 %572
        %v574 = vlaneseq
        %v575 = vand.u32 %v574, 127
        %vm576 = vcmp.lt.s32.totalorder %v575, 81
        %v577 = vsel %vm576, %v571, %v573
        %v578 = vsel %vm576, %v569, %v571
        %v579 = vsel %vm576, %v567, %v569
        %v580 = vsel %vm576, %v565, %v567
        %v581 = vsel %vm576, %v563, %v565
        %v582 = vsel %vm576, %v561, %v563
        %v583 = vsel %vm576, %v559, %v561
        %v584 = vsel %vm576, %v557, %v559
        %v585 = vsel %vm576, %v555, %v557
        %v586 = vsel %vm576, %v573, %v555
        %v587 = vmul.f32 %v586, %v478
        %v588 = vmul.f32 %v585, %v479
        %v589 = vmul.f32 %v584, %v480
        %v590 = vmul.f32 %v583, %v481
        %v591 = vmul.f32 %v582, %v482
        %v592 = vmul.f32 %v581, %v483
        %v593 = vmul.f32 %v580, %v484
        %v594 = vmul.f32 %v579, %v485
        %v595 = vmul.f32 %v578, %v486
        %v596 = vmul.f32 %v577, %v487
        %597 = vrot.lane.b32.xlu0 %v507, 80
        %v598 = vpop.permute.xlu0 %597
        %599 = vrot.lane.b32.xlu0 %v511, 80
        %v600 = vpop.permute.xlu0 %599
        %601 = vrot.lane.b32.xlu0 %v515, 80
        %v602 = vpop.permute.xlu0 %601
        %603 = vrot.lane.b32.xlu0 %v519, 80
        %v604 = vpop.permute.xlu0 %603
        %605 = vrot.lane.b32.xlu0 %v523, 80
        %v606 = vpop.permute.xlu0 %605
        %607 = vrot.lane.b32.xlu0 %v527, 80
        %v608 = vpop.permute.xlu0 %607
        %609 = vrot.lane.b32.xlu0 %v531, 80
        %v610 = vpop.permute.xlu0 %609
        %611 = vrot.lane.b32.xlu0 %v535, 80
        %v612 = vpop.permute.xlu0 %611
        %613 = vrot.lane.b32.xlu0 %v539, 80
        %v614 = vpop.permute.xlu0 %613
        %615 = vrot.lane.b32.xlu0 %v543, 80
        %v616 = vpop.permute.xlu0 %615
        %vm617 = vcmp.lt.s32.totalorder %v575, 80
        %v618 = vsel %vm617, %v614, %v616
        %v619 = vsel %vm617, %v612, %v614
        %v620 = vsel %vm617, %v610, %v612
        %v621 = vsel %vm617, %v608, %v610
        %v622 = vsel %vm617, %v606, %v608
        %v623 = vsel %vm617, %v604, %v606
        %v624 = vsel %vm617, %v602, %v604
        %v625 = vsel %vm617, %v600, %v602
        %v626 = vsel %vm617, %v598, %v600
        %v627 = vsel %vm617, %v616, %v598
        %v638 = vrot.slane %v478, 1
        %v639 = vrot.slane %v479, 1
        %v640 = vrot.slane %v480, 1
        %v641 = vrot.slane %v481, 1
        %v642 = vrot.slane %v482, 1
        %v643 = vrot.slane %v483, 1
        %v644 = vrot.slane %v484, 1
        %v645 = vrot.slane %v485, 1
        %v646 = vrot.slane %v486, 1
        %v647 = vrot.slane %v487, 1
        %v658 = vmul.f32 %v627, %v638
        %v659 = vmul.f32 %v626, %v639
        %v660 = vmul.f32 %v625, %v640
        %v661 = vmul.f32 %v624, %v641
        %v662 = vmul.f32 %v623, %v642
        %v663 = vmul.f32 %v622, %v643
        %v664 = vmul.f32 %v621, %v644
        %v665 = vmul.f32 %v620, %v645
        %v666 = vmul.f32 %v619, %v646
        %v667 = vmul.f32 %v618, %v647
        %668 = vrot.lane.b32.xlu0 %v507, 79
        %v669 = vpop.permute.xlu0 %668
        %670 = vrot.lane.b32.xlu0 %v511, 79
        %v671 = vpop.permute.xlu0 %670
        %672 = vrot.lane.b32.xlu0 %v515, 79
        %v673 = vpop.permute.xlu0 %672
        %674 = vrot.lane.b32.xlu0 %v519, 79
        %v675 = vpop.permute.xlu0 %674
        %676 = vrot.lane.b32.xlu0 %v523, 79
        %v677 = vpop.permute.xlu0 %676
        %678 = vrot.lane.b32.xlu0 %v527, 79
        %v679 = vpop.permute.xlu0 %678
        %680 = vrot.lane.b32.xlu0 %v531, 79
        %v681 = vpop.permute.xlu0 %680
        %682 = vrot.lane.b32.xlu0 %v535, 79
        %v683 = vpop.permute.xlu0 %682
        %684 = vrot.lane.b32.xlu0 %v539, 79
        %v685 = vpop.permute.xlu0 %684
        %686 = vrot.lane.b32.xlu0 %v543, 79
        %v687 = vpop.permute.xlu0 %686
        %vm688 = vcmp.lt.s32.totalorder %v575, 79
        %v689 = vsel %vm688, %v685, %v687
        %v690 = vsel %vm688, %v683, %v685
        %v691 = vsel %vm688, %v681, %v683
        %v692 = vsel %vm688, %v679, %v681
        %v693 = vsel %vm688, %v677, %v679
        %v694 = vsel %vm688, %v675, %v677
        %v695 = vsel %vm688, %v673, %v675
        %v696 = vsel %vm688, %v671, %v673
        %v697 = vsel %vm688, %v669, %v671
        %v698 = vsel %vm688, %v687, %v669
        %v699 = vrot.slane %v478, 2
        %v700 = vrot.slane %v479, 2
        %v701 = vrot.slane %v480, 2
        %v702 = vrot.slane %v481, 2
        %v703 = vrot.slane %v482, 2
        %v704 = vrot.slane %v483, 2
        %v705 = vrot.slane %v484, 2
        %v706 = vrot.slane %v485, 2
        %v707 = vrot.slane %v486, 2
        %v708 = vrot.slane %v487, 2
        %v719 = vmul.f32 %v698, %v699
        %v720 = vmul.f32 %v697, %v700
        %v721 = vmul.f32 %v696, %v701
        %v722 = vmul.f32 %v695, %v702
        %v723 = vmul.f32 %v694, %v703
        %v724 = vmul.f32 %v693, %v704
        %v725 = vmul.f32 %v692, %v705
        %v726 = vmul.f32 %v691, %v706
        %v727 = vmul.f32 %v690, %v707
        %v728 = vmul.f32 %v689, %v708
        %729 = vrot.lane.b32.xlu0 %v507, 1
        %v730 = vpop.permute.xlu0 %729
        %731 = vrot.lane.b32.xlu0 %v511, 1
        %v732 = vpop.permute.xlu0 %731
        %733 = vrot.lane.b32.xlu0 %v515, 1
        %v734 = vpop.permute.xlu0 %733
        %735 = vrot.lane.b32.xlu0 %v519, 1
        %v736 = vpop.permute.xlu0 %735
        %737 = vrot.lane.b32.xlu0 %v523, 1
        %v738 = vpop.permute.xlu0 %737
        %739 = vrot.lane.b32.xlu0 %v527, 1
        %v740 = vpop.permute.xlu0 %739
        %741 = vrot.lane.b32.xlu0 %v531, 1
        %v742 = vpop.permute.xlu0 %741
        %743 = vrot.lane.b32.xlu0 %v535, 1
        %v744 = vpop.permute.xlu0 %743
        %745 = vrot.lane.b32.xlu0 %v539, 1
        %v746 = vpop.permute.xlu0 %745
        %747 = vrot.lane.b32.xlu0 %v543, 1
        %v748 = vpop.permute.xlu0 %747
        %vm749 = vcmp.lt.s32.totalorder %v575, 1
        %v750 = vsel %vm749, %v746, %v748
        %v751 = vsel %vm749, %v744, %v746
        %v752 = vsel %vm749, %v742, %v744
        %v753 = vsel %vm749, %v740, %v742
        %v754 = vsel %vm749, %v738, %v740
        %v755 = vsel %vm749, %v736, %v738
        %v756 = vsel %vm749, %v734, %v736
        %v757 = vsel %vm749, %v732, %v734
        %v758 = vsel %vm749, %v730, %v732
        %v759 = vsel %vm749, %v748, %v730
        %v760 = vrot.slane %v478, 3
        %v761 = vrot.slane %v479, 3
        %v762 = vrot.slane %v480, 3
        %v763 = vrot.slane %v481, 3
        %v764 = vrot.slane %v482, 3
        %v765 = vrot.slane %v483, 3
        %v766 = vrot.slane %v484, 3
        %v767 = vrot.slane %v485, 3
        %v768 = vrot.slane %v486, 3
        %v769 = vrot.slane %v487, 3
        %v780 = vmul.f32 %v759, %v760
        %v781 = vmul.f32 %v758, %v761
        %v782 = vmul.f32 %v757, %v762
        %v783 = vmul.f32 %v756, %v763
        %v784 = vmul.f32 %v755, %v764
        %v785 = vmul.f32 %v754, %v765
        %v786 = vmul.f32 %v753, %v766
        %v787 = vmul.f32 %v752, %v767
        %v788 = vmul.f32 %v751, %v768
        %v789 = vmul.f32 %v750, %v769
        %v790 = vcombine.high %v478, %v479
        %v791 = vcombine.high %v480, %v481
        %v792 = vcombine.high %v482, %v483
        %v793 = vcombine.high %v484, %v485
        %v795 = vunpack.c.l.s4 1966171168
        %v796 = vunpack.c.0.s8 %v795
        %v797 = vlaneseq
        %v798 = vshrl.u32 %v797, 7
        %v799 = vsub.s32 %v796, %v798
        %v800 = vrot.slane %v790, %v799
        %v802 = vunpack.c.l.s4 1966171168
        %v803 = vunpack.c.0.s8 %v802
        %v804 = vlaneseq
        %v805 = vshrl.u32 %v804, 7
        %v806 = vsub.s32 %v803, %v805
        %v807 = vrot.slane %v791, %v806
        %v809 = vunpack.c.l.s4 1966171168
        %v810 = vunpack.c.0.s8 %v809
        %v811 = vlaneseq
        %v812 = vshrl.u32 %v811, 7
        %v813 = vsub.s32 %v810, %v812
        %v814 = vrot.slane %v792, %v813
        %v816 = vunpack.c.l.s4 1966171168
        %v817 = vunpack.c.0.s8 %v816
        %v818 = vlaneseq
        %v819 = vshrl.u32 %v818, 7
        %v820 = vsub.s32 %v817, %v819
        %v821 = vrot.slane %v793, %v820
        %v822 = vcombine.low %v800, %v807
        %v823 = vcombine.low %v814, %v821
        %v825 = vunpack.c.l.s4 1966171168
        %v826 = vunpack.c.0.s8 %v825
        %v827 = vlaneseq
        %v828 = vshrl.u32 %v827, 7
        %v829 = vsub.s32 %v826, %v828
        %v830 = vrot.slane %v822, %v829
        %v832 = vunpack.c.l.s4 1966171168
        %v833 = vunpack.c.0.s8 %v832
        %v834 = vlaneseq
        %v835 = vshrl.u32 %v834, 7
        %v836 = vsub.s32 %v833, %v835
        %v837 = vrot.slane %v823, %v836
        %v838 = vcombine.low %v830, %v837
        %v839 = vcombine.high %v486, %v487
        %v841 = vunpack.c.l.s4 1966171168
        %v842 = vunpack.c.0.s8 %v841
        %v843 = vlaneseq
        %v844 = vshrl.u32 %v843, 7
        %v845 = vsub.s32 %v842, %v844
        %v846 = vrot.slane %v839, %v845
        %v848 = vunpack.c.l.s4 1966171168
        %v849 = vunpack.c.0.s8 %v848
        %v850 = vlaneseq
        %v851 = vshrl.u32 %v850, 7
        %v852 = vsub.s32 %v849, %v851
        %v853 = vrot.slane %v846, %v852
        %v856 = vmul.f32 %v498, %v838
        %v857 = vmul.f32 %v499, %v853
        %858 = vrot.lane.b32.xlu0 %v507, 127
        %v859 = vpop.permute.xlu0 %858
        %860 = vrot.lane.b32.xlu0 %v511, 127
        %v861 = vpop.permute.xlu0 %860
        %862 = vrot.lane.b32.xlu0 %v515, 127
        %v863 = vpop.permute.xlu0 %862
        %864 = vrot.lane.b32.xlu0 %v519, 127
        %v865 = vpop.permute.xlu0 %864
        %866 = vrot.lane.b32.xlu0 %v523, 127
        %v867 = vpop.permute.xlu0 %866
        %868 = vrot.lane.b32.xlu0 %v527, 127
        %v869 = vpop.permute.xlu0 %868
        %870 = vrot.lane.b32.xlu0 %v531, 127
        %v871 = vpop.permute.xlu0 %870
        %872 = vrot.lane.b32.xlu0 %v535, 127
        %v873 = vpop.permute.xlu0 %872
        %874 = vrot.lane.b32.xlu0 %v539, 127
        %v875 = vpop.permute.xlu0 %874
        %876 = vrot.lane.b32.xlu0 %v543, 127
        %v877 = vpop.permute.xlu0 %876
        %vm878 = vcmp.lt.s32.totalorder %v575, 127
        %v879 = vsel %vm878, %v875, %v877
        %v880 = vsel %vm878, %v873, %v875
        %v881 = vsel %vm878, %v871, %v873
        %v882 = vsel %vm878, %v869, %v871
        %v883 = vsel %vm878, %v867, %v869
        %v884 = vsel %vm878, %v865, %v867
        %v885 = vsel %vm878, %v863, %v865
        %v886 = vsel %vm878, %v861, %v863
        %v887 = vsel %vm878, %v859, %v861
        %v888 = vsel %vm878, %v877, %v859
        %v889 = vrot.slane %v478, 5
        %v890 = vrot.slane %v479, 5
        %v891 = vrot.slane %v480, 5
        %v892 = vrot.slane %v481, 5
        %v893 = vrot.slane %v482, 5
        %v894 = vrot.slane %v483, 5
        %v895 = vrot.slane %v484, 5
        %v896 = vrot.slane %v485, 5
        %v897 = vrot.slane %v486, 5
        %v898 = vrot.slane %v487, 5
        %v909 = vmul.f32 %v887, %v889
        %v910 = vmul.f32 %v886, %v890
        %v911 = vmul.f32 %v885, %v891
        %v912 = vmul.f32 %v884, %v892
        %v913 = vmul.f32 %v883, %v893
        %v914 = vmul.f32 %v882, %v894
        %v915 = vmul.f32 %v881, %v895
        %v916 = vmul.f32 %v880, %v896
        %v917 = vmul.f32 %v879, %v897
        %v918 = vmul.f32 %v888, %v898
        %919 = vrot.lane.b32.xlu0 %v507, 49
        %v920 = vpop.permute.xlu0 %919
        %921 = vrot.lane.b32.xlu0 %v511, 49
        %v922 = vpop.permute.xlu0 %921
        %923 = vrot.lane.b32.xlu0 %v515, 49
        %v924 = vpop.permute.xlu0 %923
        %925 = vrot.lane.b32.xlu0 %v519, 49
        %v926 = vpop.permute.xlu0 %925
        %927 = vrot.lane.b32.xlu0 %v523, 49
        %v928 = vpop.permute.xlu0 %927
        %929 = vrot.lane.b32.xlu0 %v527, 49
        %v930 = vpop.permute.xlu0 %929
        %931 = vrot.lane.b32.xlu0 %v531, 49
        %v932 = vpop.permute.xlu0 %931
        %933 = vrot.lane.b32.xlu0 %v535, 49
        %v934 = vpop.permute.xlu0 %933
        %935 = vrot.lane.b32.xlu0 %v539, 49
        %v936 = vpop.permute.xlu0 %935
        %937 = vrot.lane.b32.xlu0 %v543, 49
        %v938 = vpop.permute.xlu0 %937
        %vm939 = vcmp.lt.s32.totalorder %v575, 49
        %v940 = vsel %vm939, %v936, %v938
        %v941 = vsel %vm939, %v934, %v936
        %v942 = vsel %vm939, %v932, %v934
        %v943 = vsel %vm939, %v930, %v932
        %v944 = vsel %vm939, %v928, %v930
        %v945 = vsel %vm939, %v926, %v928
        %v946 = vsel %vm939, %v924, %v926
        %v947 = vsel %vm939, %v922, %v924
        %v948 = vsel %vm939, %v920, %v922
        %v949 = vsel %vm939, %v938, %v920
        %v950 = vrot.slane %v478, 6
        %v951 = vrot.slane %v479, 6
        %v952 = vrot.slane %v480, 6
        %v953 = vrot.slane %v481, 6
        %v954 = vrot.slane %v482, 6
        %v955 = vrot.slane %v483, 6
        %v956 = vrot.slane %v484, 6
        %v957 = vrot.slane %v485, 6
        %v958 = vrot.slane %v486, 6
        %v959 = vrot.slane %v487, 6
        %v970 = vmul.f32 %v948, %v950
        %v971 = vmul.f32 %v947, %v951
        %v972 = vmul.f32 %v946, %v952
        %v973 = vmul.f32 %v945, %v953
        %v974 = vmul.f32 %v944, %v954
        %v975 = vmul.f32 %v943, %v955
        %v976 = vmul.f32 %v942, %v956
        %v977 = vmul.f32 %v941, %v957
        %v978 = vmul.f32 %v940, %v958
        %v979 = vmul.f32 %v949, %v959
        %980 = vrot.lane.b32.xlu0 %v507, 48
        %v981 = vpop.permute.xlu0 %980
        %982 = vrot.lane.b32.xlu0 %v511, 48
        %v983 = vpop.permute.xlu0 %982
        %984 = vrot.lane.b32.xlu0 %v515, 48
        %v985 = vpop.permute.xlu0 %984
        %986 = vrot.lane.b32.xlu0 %v519, 48
        %v987 = vpop.permute.xlu0 %986
        %988 = vrot.lane.b32.xlu0 %v523, 48
        %v989 = vpop.permute.xlu0 %988
        %990 = vrot.lane.b32.xlu0 %v527, 48
        %v991 = vpop.permute.xlu0 %990
        %992 = vrot.lane.b32.xlu0 %v531, 48
        %v993 = vpop.permute.xlu0 %992
        %994 = vrot.lane.b32.xlu0 %v535, 48
        %v995 = vpop.permute.xlu0 %994
        %996 = vrot.lane.b32.xlu0 %v539, 48
        %v997 = vpop.permute.xlu0 %996
        %998 = vrot.lane.b32.xlu0 %v543, 48
        %v999 = vpop.permute.xlu0 %998
        %vm1000 = vcmp.lt.s32.totalorder %v575, 48
        %v1001 = vsel %vm1000, %v997, %v999
        %v1002 = vsel %vm1000, %v995, %v997
        %v1003 = vsel %vm1000, %v993, %v995
        %v1004 = vsel %vm1000, %v991, %v993
        %v1005 = vsel %vm1000, %v989, %v991
        %v1006 = vsel %vm1000, %v987, %v989
        %v1007 = vsel %vm1000, %v985, %v987
        %v1008 = vsel %vm1000, %v983, %v985
        %v1009 = vsel %vm1000, %v981, %v983
        %v1010 = vsel %vm1000, %v999, %v981
        %v1011 = vrot.slane %v478, 7
        %v1012 = vrot.slane %v479, 7
        %v1013 = vrot.slane %v480, 7
        %v1014 = vrot.slane %v481, 7
        %v1015 = vrot.slane %v482, 7
        %v1016 = vrot.slane %v483, 7
        %v1017 = vrot.slane %v484, 7
        %v1018 = vrot.slane %v485, 7
        %v1019 = vrot.slane %v486, 7
        %v1020 = vrot.slane %v487, 7
        %v1031 = vmul.f32 %v1009, %v1011
        %v1032 = vmul.f32 %v1008, %v1012
        %v1033 = vmul.f32 %v1007, %v1013
        %v1034 = vmul.f32 %v1006, %v1014
        %v1035 = vmul.f32 %v1005, %v1015
        %v1036 = vmul.f32 %v1004, %v1016
        %v1037 = vmul.f32 %v1003, %v1017
        %v1038 = vmul.f32 %v1002, %v1018
        %v1039 = vmul.f32 %v1001, %v1019
        %v1040 = vmul.f32 %v1010, %v1020
        %1041 = vrot.lane.b32.xlu0 %v507, 47
        %v1042 = vpop.permute.xlu0 %1041
        %1043 = vrot.lane.b32.xlu0 %v511, 47
        %v1044 = vpop.permute.xlu0 %1043
        %1045 = vrot.lane.b32.xlu0 %v515, 47
        %v1046 = vpop.permute.xlu0 %1045
        %1047 = vrot.lane.b32.xlu0 %v519, 47
        %v1048 = vpop.permute.xlu0 %1047
        %1049 = vrot.lane.b32.xlu0 %v523, 47
        %v1050 = vpop.permute.xlu0 %1049
        %1051 = vrot.lane.b32.xlu0 %v527, 47
        %v1052 = vpop.permute.xlu0 %1051
        %1053 = vrot.lane.b32.xlu0 %v531, 47
        %v1054 = vpop.permute.xlu0 %1053
        %1055 = vrot.lane.b32.xlu0 %v535, 47
        %v1056 = vpop.permute.xlu0 %1055
        %1057 = vrot.lane.b32.xlu0 %v539, 47
        %v1058 = vpop.permute.xlu0 %1057
        %1059 = vrot.lane.b32.xlu0 %v543, 47
        %v1060 = vpop.permute.xlu0 %1059
        %vm1061 = vcmp.lt.s32.totalorder %v575, 47
        %v1062 = vsel %vm1061, %v1058, %v1060
        %v1063 = vsel %vm1061, %v1056, %v1058
        %v1064 = vsel %vm1061, %v1054, %v1056
        %v1065 = vsel %vm1061, %v1052, %v1054
        %v1066 = vsel %vm1061, %v1050, %v1052
        %v1067 = vsel %vm1061, %v1048, %v1050
        %v1068 = vsel %vm1061, %v1046, %v1048
        %v1069 = vsel %vm1061, %v1044, %v1046
        %v1070 = vsel %vm1061, %v1042, %v1044
        %v1071 = vsel %vm1061, %v1060, %v1042
        %v1072 = vmul.f32 %v1070, %v488
        %v1073 = vmul.f32 %v1069, %v489
        %v1074 = vmul.f32 %v1068, %v490
        %v1075 = vmul.f32 %v1067, %v491
        %v1076 = vmul.f32 %v1066, %v492
        %v1077 = vmul.f32 %v1065, %v493
        %v1078 = vmul.f32 %v1064, %v494
        %v1079 = vmul.f32 %v1063, %v495
        %v1080 = vmul.f32 %v1062, %v496
        %v1081 = vmul.f32 %v1071, %v497
        %v1092 = vrot.slane %v658, 7
        %v1093 = vrot.slane %v659, 7
        %v1094 = vrot.slane %v660, 7
        %v1095 = vrot.slane %v661, 7
        %v1096 = vrot.slane %v662, 7
        %v1097 = vrot.slane %v663, 7
        %v1098 = vrot.slane %v664, 7
        %v1099 = vrot.slane %v665, 7
        %v1100 = vrot.slane %v666, 7
        %v1101 = vrot.slane %v667, 7
        %v1122 = vrot.slane %v719, 6
        %v1123 = vrot.slane %v720, 6
        %v1124 = vrot.slane %v721, 6
        %v1125 = vrot.slane %v722, 6
        %v1126 = vrot.slane %v723, 6
        %v1127 = vrot.slane %v724, 6
        %v1128 = vrot.slane %v725, 6
        %v1129 = vrot.slane %v726, 6
        %v1130 = vrot.slane %v727, 6
        %v1131 = vrot.slane %v728, 6
        %v1152 = vrot.slane %v780, 5
        %v1153 = vrot.slane %v781, 5
        %v1154 = vrot.slane %v782, 5
        %v1155 = vrot.slane %v783, 5
        %v1156 = vrot.slane %v784, 5
        %v1157 = vrot.slane %v785, 5
        %v1158 = vrot.slane %v786, 5
        %v1159 = vrot.slane %v787, 5
        %v1160 = vrot.slane %v788, 5
        %v1161 = vrot.slane %v789, 5
        %v1174 = vlaneseq
        %v1175 = vshrl.u32 %v1174, 7
        %v1176 = vsub.s32 0, %v1175
        %v1177 = vrot.slane %v856, %v1176
        %v1178 = vlaneseq
        %v1179 = vshrl.u32 %v1178, 7
        %v1180 = vsub.s32 1, %v1179
        %v1181 = vrot.slane %v856, %v1180
        %v1182 = vlaneseq
        %v1183 = vshrl.u32 %v1182, 7
        %v1184 = vsub.s32 2, %v1183
        %v1185 = vrot.slane %v856, %v1184
        %v1186 = vlaneseq
        %v1187 = vshrl.u32 %v1186, 7
        %v1188 = vsub.s32 3, %v1187
        %v1189 = vrot.slane %v856, %v1188
        %v1190 = vlaneseq
        %v1191 = vshrl.u32 %v1190, 7
        %v1192 = vsub.s32 4, %v1191
        %v1193 = vrot.slane %v856, %v1192
        %v1194 = vlaneseq
        %v1195 = vshrl.u32 %v1194, 7
        %v1196 = vsub.s32 5, %v1195
        %v1197 = vrot.slane %v856, %v1196
        %v1198 = vlaneseq
        %v1199 = vshrl.u32 %v1198, 7
        %v1200 = vsub.s32 6, %v1199
        %v1201 = vrot.slane %v856, %v1200
        %v1202 = vlaneseq
        %v1203 = vshrl.u32 %v1202, 7
        %v1204 = vsub.s32 7, %v1203
        %v1205 = vrot.slane %v856, %v1204
        %v1206 = vlaneseq
        %v1207 = vshrl.u32 %v1206, 7
        %v1208 = vsub.s32 0, %v1207
        %v1209 = vrot.slane %v857, %v1208
        %v1210 = vlaneseq
        %v1211 = vshrl.u32 %v1210, 7
        %v1212 = vsub.s32 1, %v1211
        %v1213 = vrot.slane %v857, %v1212
        %v1234 = vrot.slane %v909, 3
        %v1235 = vrot.slane %v910, 3
        %v1236 = vrot.slane %v911, 3
        %v1237 = vrot.slane %v912, 3
        %v1238 = vrot.slane %v913, 3
        %v1239 = vrot.slane %v914, 3
        %v1240 = vrot.slane %v915, 3
        %v1241 = vrot.slane %v916, 3
        %v1242 = vrot.slane %v917, 3
        %v1243 = vrot.slane %v918, 3
        %v1264 = vrot.slane %v970, 2
        %v1265 = vrot.slane %v971, 2
        %v1266 = vrot.slane %v972, 2
        %v1267 = vrot.slane %v973, 2
        %v1268 = vrot.slane %v974, 2
        %v1269 = vrot.slane %v975, 2
        %v1270 = vrot.slane %v976, 2
        %v1271 = vrot.slane %v977, 2
        %v1272 = vrot.slane %v978, 2
        %v1273 = vrot.slane %v979, 2
        %v1294 = vrot.slane %v1031, 1
        %v1295 = vrot.slane %v1032, 1
        %v1296 = vrot.slane %v1033, 1
        %v1297 = vrot.slane %v1034, 1
        %v1298 = vrot.slane %v1035, 1
        %v1299 = vrot.slane %v1036, 1
        %v1300 = vrot.slane %v1037, 1
        %v1301 = vrot.slane %v1038, 1
        %v1302 = vrot.slane %v1039, 1
        %v1303 = vrot.slane %v1040, 1
        %vm1314 = vcmask 1040384
        %v1315 = vsel %vm1314, %v587, %v1092
        %v1316 = vsel %vm1314, %v588, %v1093
        %v1317 = vsel %vm1314, %v589, %v1094
        %v1318 = vsel %vm1314, %v590, %v1095
        %v1319 = vsel %vm1314, %v591, %v1096
        %v1320 = vsel %vm1314, %v592, %v1097
        %v1321 = vsel %vm1314, %v593, %v1098
        %v1322 = vsel %vm1314, %v594, %v1099
        %v1323 = vsel %vm1314, %v595, %v1100
        %v1324 = vsel %vm1314, %v596, %v1101
        %vm1325 = vcmask 1041408
        %v1326 = vsel %vm1325, %v1315, %v1122
        %v1327 = vsel %vm1325, %v1316, %v1123
        %v1328 = vsel %vm1325, %v1317, %v1124
        %v1329 = vsel %vm1325, %v1318, %v1125
        %v1330 = vsel %vm1325, %v1319, %v1126
        %v1331 = vsel %vm1325, %v1320, %v1127
        %v1332 = vsel %vm1325, %v1321, %v1128
        %v1333 = vsel %vm1325, %v1322, %v1129
        %v1334 = vsel %vm1325, %v1323, %v1130
        %v1335 = vsel %vm1325, %v1324, %v1131
        %vm1336 = vcmask 1042432
        %v1337 = vsel %vm1336, %v1326, %v1152
        %v1338 = vsel %vm1336, %v1327, %v1153
        %v1339 = vsel %vm1336, %v1328, %v1154
        %v1340 = vsel %vm1336, %v1329, %v1155
        %v1341 = vsel %vm1336, %v1330, %v1156
        %v1342 = vsel %vm1336, %v1331, %v1157
        %v1343 = vsel %vm1336, %v1332, %v1158
        %v1344 = vsel %vm1336, %v1333, %v1159
        %v1345 = vsel %vm1336, %v1334, %v1160
        %v1346 = vsel %vm1336, %v1335, %v1161
        %vm1347 = vcmask 1043456
        %v1348 = vsel %vm1347, %v1337, %v1177
        %v1349 = vsel %vm1347, %v1338, %v1181
        %v1350 = vsel %vm1347, %v1339, %v1185
        %v1351 = vsel %vm1347, %v1340, %v1189
        %v1352 = vsel %vm1347, %v1341, %v1193
        %v1353 = vsel %vm1347, %v1342, %v1197
        %v1354 = vsel %vm1347, %v1343, %v1201
        %v1355 = vsel %vm1347, %v1344, %v1205
        %v1356 = vsel %vm1347, %v1345, %v1209
        %v1357 = vsel %vm1347, %v1346, %v1213
        %vm1358 = vcmask 1044480
        %v1359 = vsel %vm1358, %v1348, %v1234
        %v1360 = vsel %vm1358, %v1349, %v1235
        %v1361 = vsel %vm1358, %v1350, %v1236
        %v1362 = vsel %vm1358, %v1351, %v1237
        %v1363 = vsel %vm1358, %v1352, %v1238
        %v1364 = vsel %vm1358, %v1353, %v1239
        %v1365 = vsel %vm1358, %v1354, %v1240
        %v1366 = vsel %vm1358, %v1355, %v1241
        %v1367 = vsel %vm1358, %v1356, %v1242
        %v1368 = vsel %vm1358, %v1357, %v1243
        %vm1369 = vcmask 1045504
        %v1370 = vsel %vm1369, %v1359, %v1264
        %v1371 = vsel %vm1369, %v1360, %v1265
        %v1372 = vsel %vm1369, %v1361, %v1266
        %v1373 = vsel %vm1369, %v1362, %v1267
        %v1374 = vsel %vm1369, %v1363, %v1268
        %v1375 = vsel %vm1369, %v1364, %v1269
        %v1376 = vsel %vm1369, %v1365, %v1270
        %v1377 = vsel %vm1369, %v1366, %v1271
        %v1378 = vsel %vm1369, %v1367, %v1272
        %v1379 = vsel %vm1369, %v1368, %v1273
        %vm1380 = vcmask 1046528
        %v1381 = vsel %vm1380, %v1370, %v1294
        %v1382 = vsel %vm1380, %v1371, %v1295
        %v1383 = vsel %vm1380, %v1372, %v1296
        %v1384 = vsel %vm1380, %v1373, %v1297
        %v1385 = vsel %vm1380, %v1374, %v1298
        %v1386 = vsel %vm1380, %v1375, %v1299
        %v1387 = vsel %vm1380, %v1376, %v1300
        %v1388 = vsel %vm1380, %v1377, %v1301
        %v1389 = vsel %vm1380, %v1378, %v1302
        %v1390 = vsel %vm1380, %v1379, %v1303
        %v1391 = vpack.c.bf16 %v1072, %v1381
        %v1392 = vpack.c.bf16 %v1073, %v1382
        %v1393 = vpack.c.bf16 %v1074, %v1383
        %v1394 = vpack.c.bf16 %v1075, %v1384
        %v1395 = vpack.c.bf16 %v1076, %v1385
        %v1396 = vpack.c.bf16 %v1077, %v1386
        %v1397 = vpack.c.bf16 %v1078, %v1387
        %v1398 = vpack.c.bf16 %v1079, %v1388
        %v1399 = vpack.c.bf16 %v1080, %v1389
        %v1400 = vpack.c.bf16 %v1081, %v1390
        %1402 = vset.pattern.permute.xlu0 0
        %1403 = vperm.xlu0 %1402, %v501
        %v1404 = vpop.permute.xlu0 %1403
        %vm1406 = vcmask 72704
        %v1408 = vsel %vm1406, %v500, 0
        %v1410 = vsel %vm1347, 4294967295, 65535
        %v1411 = vsel %vm1358, %v1410, 0
        %v1413 = vand.u32 %v1391, %v1411
        %v1416 = vand.u32 %v1392, %v1411
        %v1419 = vand.u32 %v1393, %v1411
        %v1422 = vand.u32 %v1394, %v1411
        %v1425 = vand.u32 %v1395, %v1411
        %v1428 = vand.u32 %v1396, %v1411
        %v1431 = vand.u32 %v1397, %v1411
        %v1434 = vand.u32 %v1398, %v1411
        %v1437 = vand.u32 %v1399, %v1411
        %v1440 = vand.u32 %v1400, %v1411
        %1442 = vmatprep.subr.bf16.mxu0 %v1416
        %1443 = vmatpush1.bf16.msra.mxu0 %v1413
        %1444 = vmatprep.subr.bf16.mxu0 0
        %1445 = vmatpush1.bf16.msra.mxu0 0
        %1446 = vmatprep.subr.bf16.mxu0 0
        %1447 = vmatpush1.bf16.msra.mxu0 0
        %1448 = vmatprep.subr.bf16.mxu0 0
        %1449 = vmatpush1.bf16.msra.mxu0 0
        %1450 = vmatprep.subr.bf16.mxu0 0
        %1451 = vmatpush1.bf16.msra.mxu0 0
        %1452 = vmatprep.subr.bf16.mxu0 0
        %1453 = vmatpush1.bf16.msra.mxu0 0
        %1454 = vmatprep.subr.bf16.mxu0 0
        %1455 = vmatpush1.bf16.msra.mxu0 0
        %1456 = vmatprep.subr.bf16.mxu0 0
        %1457 = vmatpush1.bf16.msra.mxu0 0
        %1458 = vmatprep.subr.bf16.mxu0 0
        %1459 = vmatpush1.bf16.msra.mxu0 0
        %1460 = vmatprep.subr.bf16.mxu0 0
        %1461 = vmatpush1.bf16.msra.mxu0 0
        %1462 = vmatprep.subr.bf16.mxu0 0
        %1463 = vmatpush1.bf16.msra.mxu0 0
        %1464 = vmatprep.subr.bf16.mxu0 0
        %1465 = vmatpush1.bf16.msra.mxu0 0
        %1466 = vmatprep.subr.bf16.mxu0 0
        %1467 = vmatpush1.bf16.msra.mxu0 0
        %1468 = vmatprep.subr.bf16.mxu0 0
        %1469 = vmatpush1.bf16.msra.mxu0 0
        %1470 = vmatprep.subr.bf16.mxu0 0
        %1471 = vmatpush1.bf16.msra.mxu0 0
        %1472 = vmatprep.subr.bf16.mxu0 0
        %1473 = vmatpush1.bf16.msra.mxu0 0
        %1474 = vmatprep.mubr.bf16.mxu0 0
        %1475 = vmatmul.mubr.bf16.gmra.mrb[0].mxu0 %v1408
        %v1476 = vpop.f32.mrb[0].mxu0
        %v1477 = vadd.f32 %v1404, %v1476
        %v1478 = vpop.f32.mrb[0].mxu0
        %v1479 = vadd.f32 %v1404, %v1478
        %v1480 = vpop.f32.mrb[0].mxu0
        %v1481 = vpop.f32.mrb[0].mxu0
        %1482 = vdwg.mxu0
        %1483 = vmatprep.subr.bf16.mxu0 %v1422
        %1484 = vmatpush1.bf16.msra.mxu0 %v1419
        %1485 = vmatprep.subr.bf16.mxu0 0
        %1486 = vmatpush1.bf16.msra.mxu0 0
        %1487 = vmatprep.subr.bf16.mxu0 0
        %1488 = vmatpush1.bf16.msra.mxu0 0
        %1489 = vmatprep.subr.bf16.mxu0 0
        %1490 = vmatpush1.bf16.msra.mxu0 0
        %1491 = vmatprep.subr.bf16.mxu0 0
        %1492 = vmatpush1.bf16.msra.mxu0 0
        %1493 = vmatprep.subr.bf16.mxu0 0
        %1494 = vmatpush1.bf16.msra.mxu0 0
        %1495 = vmatprep.subr.bf16.mxu0 0
        %1496 = vmatpush1.bf16.msra.mxu0 0
        %1497 = vmatprep.subr.bf16.mxu0 0
        %1498 = vmatpush1.bf16.msra.mxu0 0
        %1499 = vmatprep.subr.bf16.mxu0 0
        %1500 = vmatpush1.bf16.msra.mxu0 0
        %1501 = vmatprep.subr.bf16.mxu0 0
        %1502 = vmatpush1.bf16.msra.mxu0 0
        %1503 = vmatprep.subr.bf16.mxu0 0
        %1504 = vmatpush1.bf16.msra.mxu0 0
        %1505 = vmatprep.subr.bf16.mxu0 0
        %1506 = vmatpush1.bf16.msra.mxu0 0
        %1507 = vmatprep.subr.bf16.mxu0 0
        %1508 = vmatpush1.bf16.msra.mxu0 0
        %1509 = vmatprep.subr.bf16.mxu0 0
        %1510 = vmatpush1.bf16.msra.mxu0 0
        %1511 = vmatprep.subr.bf16.mxu0 0
        %1512 = vmatpush1.bf16.msra.mxu0 0
        %1513 = vmatprep.subr.bf16.mxu0 0
        %1514 = vmatpush1.bf16.msra.mxu0 0
        %1515 = vmatprep.mubr.bf16.mxu0 0
        %1516 = vmatmul.mubr.bf16.gmra.mrb[0].mxu0 %v1408
        %v1517 = vpop.f32.mrb[0].mxu0
        %v1518 = vadd.f32 %v1404, %v1517
        %v1519 = vpop.f32.mrb[0].mxu0
        %v1520 = vadd.f32 %v1404, %v1519
        %v1521 = vpop.f32.mrb[0].mxu0
        %v1522 = vpop.f32.mrb[0].mxu0
        %1523 = vdwg.mxu0
        %1524 = vmatprep.subr.bf16.mxu0 %v1428
        %1525 = vmatpush1.bf16.msra.mxu0 %v1425
        %1526 = vmatprep.subr.bf16.mxu0 0
        %1527 = vmatpush1.bf16.msra.mxu0 0
        %1528 = vmatprep.subr.bf16.mxu0 0
        %1529 = vmatpush1.bf16.msra.mxu0 0
        %1530 = vmatprep.subr.bf16.mxu0 0
        %1531 = vmatpush1.bf16.msra.mxu0 0
        %1532 = vmatprep.subr.bf16.mxu0 0
        %1533 = vmatpush1.bf16.msra.mxu0 0
        %1534 = vmatprep.subr.bf16.mxu0 0
        %1535 = vmatpush1.bf16.msra.mxu0 0
        %1536 = vmatprep.subr.bf16.mxu0 0
        %1537 = vmatpush1.bf16.msra.mxu0 0
        %1538 = vmatprep.subr.bf16.mxu0 0
        %1539 = vmatpush1.bf16.msra.mxu0 0
        %1540 = vmatprep.subr.bf16.mxu0 0
        %1541 = vmatpush1.bf16.msra.mxu0 0
        %1542 = vmatprep.subr.bf16.mxu0 0
        %1543 = vmatpush1.bf16.msra.mxu0 0
        %1544 = vmatprep.subr.bf16.mxu0 0
        %1545 = vmatpush1.bf16.msra.mxu0 0
        %1546 = vmatprep.subr.bf16.mxu0 0
        %1547 = vmatpush1.bf16.msra.mxu0 0
        %1548 = vmatprep.subr.bf16.mxu0 0
        %1549 = vmatpush1.bf16.msra.mxu0 0
        %1550 = vmatprep.subr.bf16.mxu0 0
        %1551 = vmatpush1.bf16.msra.mxu0 0
        %1552 = vmatprep.subr.bf16.mxu0 0
        %1553 = vmatpush1.bf16.msra.mxu0 0
        %1554 = vmatprep.subr.bf16.mxu0 0
        %1555 = vmatpush1.bf16.msra.mxu0 0
        %1556 = vmatprep.mubr.bf16.mxu0 0
        %1557 = vmatmul.mubr.bf16.gmra.mrb[0].mxu0 %v1408
        %v1558 = vpop.f32.mrb[0].mxu0
        %v1559 = vadd.f32 %v1404, %v1558
        %v1560 = vpop.f32.mrb[0].mxu0
        %v1561 = vadd.f32 %v1404, %v1560
        %v1562 = vpop.f32.mrb[0].mxu0
        %v1563 = vpop.f32.mrb[0].mxu0
        %1564 = vdwg.mxu0
        %1565 = vmatprep.subr.bf16.mxu0 %v1434
        %1566 = vmatpush1.bf16.msra.mxu0 %v1431
        %1567 = vmatprep.subr.bf16.mxu0 0
        %1568 = vmatpush1.bf16.msra.mxu0 0
        %1569 = vmatprep.subr.bf16.mxu0 0
        %1570 = vmatpush1.bf16.msra.mxu0 0
        %1571 = vmatprep.subr.bf16.mxu0 0
        %1572 = vmatpush1.bf16.msra.mxu0 0
        %1573 = vmatprep.subr.bf16.mxu0 0
        %1574 = vmatpush1.bf16.msra.mxu0 0
        %1575 = vmatprep.subr.bf16.mxu0 0
        %1576 = vmatpush1.bf16.msra.mxu0 0
        %1577 = vmatprep.subr.bf16.mxu0 0
        %1578 = vmatpush1.bf16.msra.mxu0 0
        %1579 = vmatprep.subr.bf16.mxu0 0
        %1580 = vmatpush1.bf16.msra.mxu0 0
        %1581 = vmatprep.subr.bf16.mxu0 0
        %1582 = vmatpush1.bf16.msra.mxu0 0
        %1583 = vmatprep.subr.bf16.mxu0 0
        %1584 = vmatpush1.bf16.msra.mxu0 0
        %1585 = vmatprep.subr.bf16.mxu0 0
        %1586 = vmatpush1.bf16.msra.mxu0 0
        %1587 = vmatprep.subr.bf16.mxu0 0
        %1588 = vmatpush1.bf16.msra.mxu0 0
        %1589 = vmatprep.subr.bf16.mxu0 0
        %1590 = vmatpush1.bf16.msra.mxu0 0
        %1591 = vmatprep.subr.bf16.mxu0 0
        %1592 = vmatpush1.bf16.msra.mxu0 0
        %1593 = vmatprep.subr.bf16.mxu0 0
        %1594 = vmatpush1.bf16.msra.mxu0 0
        %1595 = vmatprep.subr.bf16.mxu0 0
        %1596 = vmatpush1.bf16.msra.mxu0 0
        %1597 = vmatprep.mubr.bf16.mxu0 0
        %1598 = vmatmul.mubr.bf16.gmra.mrb[0].mxu0 %v1408
        %v1599 = vpop.f32.mrb[0].mxu0
        %v1600 = vadd.f32 %v1404, %v1599
        %v1601 = vpop.f32.mrb[0].mxu0
        %v1602 = vadd.f32 %v1404, %v1601
        %v1603 = vpop.f32.mrb[0].mxu0
        %v1604 = vpop.f32.mrb[0].mxu0
        %1605 = vdwg.mxu0
        %1606 = vmatprep.subr.bf16.mxu0 %v1440
        %1607 = vmatpush1.bf16.msra.mxu0 %v1437
        %1608 = vmatprep.subr.bf16.mxu0 0
        %1609 = vmatpush1.bf16.msra.mxu0 0
        %1610 = vmatprep.subr.bf16.mxu0 0
        %1611 = vmatpush1.bf16.msra.mxu0 0
        %1612 = vmatprep.subr.bf16.mxu0 0
        %1613 = vmatpush1.bf16.msra.mxu0 0
        %1614 = vmatprep.subr.bf16.mxu0 0
        %1615 = vmatpush1.bf16.msra.mxu0 0
        %1616 = vmatprep.subr.bf16.mxu0 0
        %1617 = vmatpush1.bf16.msra.mxu0 0
        %1618 = vmatprep.subr.bf16.mxu0 0
        %1619 = vmatpush1.bf16.msra.mxu0 0
        %1620 = vmatprep.subr.bf16.mxu0 0
        %1621 = vmatpush1.bf16.msra.mxu0 0
        %1622 = vmatprep.subr.bf16.mxu0 0
        %1623 = vmatpush1.bf16.msra.mxu0 0
        %1624 = vmatprep.subr.bf16.mxu0 0
        %1625 = vmatpush1.bf16.msra.mxu0 0
        %1626 = vmatprep.subr.bf16.mxu0 0
        %1627 = vmatpush1.bf16.msra.mxu0 0
        %1628 = vmatprep.subr.bf16.mxu0 0
        %1629 = vmatpush1.bf16.msra.mxu0 0
        %1630 = vmatprep.subr.bf16.mxu0 0
        %1631 = vmatpush1.bf16.msra.mxu0 0
        %1632 = vmatprep.subr.bf16.mxu0 0
        %1633 = vmatpush1.bf16.msra.mxu0 0
        %1634 = vmatprep.subr.bf16.mxu0 0
        %1635 = vmatpush1.bf16.msra.mxu0 0
        %1636 = vmatprep.subr.bf16.mxu0 0
        %1637 = vmatpush1.bf16.msra.mxu0 0
        %1638 = vmatprep.mubr.bf16.mxu0 0
        %1639 = vmatmul.mubr.bf16.gmra.mrb[0].mxu0 %v1408
        %v1640 = vpop.f32.mrb[0].mxu0
        %v1641 = vadd.f32 %v1404, %v1640
        %v1642 = vpop.f32.mrb[0].mxu0
        %v1643 = vadd.f32 %v1404, %v1642
        %v1644 = vpop.f32.mrb[0].mxu0
        %v1645 = vpop.f32.mrb[0].mxu0
        %1646 = vdwg.mxu0
        %v1647 = vmax.f32 %v1477, 0.0
        %v1648 = vmax.f32 %v1479, 0.0
        %v1649 = vmax.f32 %v1518, 0.0
        %v1650 = vmax.f32 %v1520, 0.0
        %v1651 = vmax.f32 %v1559, 0.0
        %v1652 = vmax.f32 %v1561, 0.0
        %v1653 = vmax.f32 %v1600, 0.0
        %v1654 = vmax.f32 %v1602, 0.0
        %v1655 = vmax.f32 %v1641, 0.0
        %v1656 = vmax.f32 %v1643, 0.0
        %v1657 = vld [vmem:[%s4] sm:$0xf]
        %v1658 = vld [vmem:[%s5] sm:$0xff]
        %1659 = vrot.lane.b32.xlu0 %v1647, 81
        %v1660 = vpop.permute.xlu0 %1659
        %1661 = vrot.lane.b32.xlu0 %v1648, 81
        %v1662 = vpop.permute.xlu0 %1661
        %1663 = vrot.lane.b32.xlu0 %v1649, 81
        %v1664 = vpop.permute.xlu0 %1663
        %1665 = vrot.lane.b32.xlu0 %v1650, 81
        %v1666 = vpop.permute.xlu0 %1665
        %1667 = vrot.lane.b32.xlu0 %v1651, 81
        %v1668 = vpop.permute.xlu0 %1667
        %1669 = vrot.lane.b32.xlu0 %v1652, 81
        %v1670 = vpop.permute.xlu0 %1669
        %1671 = vrot.lane.b32.xlu0 %v1653, 81
        %v1672 = vpop.permute.xlu0 %1671
        %1673 = vrot.lane.b32.xlu0 %v1654, 81
        %v1674 = vpop.permute.xlu0 %1673
        %1675 = vrot.lane.b32.xlu0 %v1655, 81
        %v1676 = vpop.permute.xlu0 %1675
        %1677 = vrot.lane.b32.xlu0 %v1656, 81
        %v1678 = vpop.permute.xlu0 %1677
        %v1679 = vsel %vm576, %v1676, %v1678
        %v1680 = vsel %vm576, %v1674, %v1676
        %v1681 = vsel %vm576, %v1672, %v1674
        %v1682 = vsel %vm576, %v1670, %v1672
        %v1683 = vsel %vm576, %v1668, %v1670
        %v1684 = vsel %vm576, %v1666, %v1668
        %v1685 = vsel %vm576, %v1664, %v1666
        %v1686 = vsel %vm576, %v1662, %v1664
        %v1687 = vsel %vm576, %v1660, %v1662
        %v1688 = vsel %vm576, %v1678, %v1660
        %v1689 = vlaneseq
        %v1690 = vshrl.u32 %v1689, 7
        %v1691 = vsub.s32 0, %v1690
        %v1692 = vrot.slane %v478, %v1691
        %v1693 = vlaneseq
        %v1694 = vshrl.u32 %v1693, 7
        %v1695 = vsub.s32 0, %v1694
        %v1696 = vrot.slane %v479, %v1695
        %v1697 = vlaneseq
        %v1698 = vshrl.u32 %v1697, 7
        %v1699 = vsub.s32 0, %v1698
        %v1700 = vrot.slane %v480, %v1699
        %v1701 = vlaneseq
        %v1702 = vshrl.u32 %v1701, 7
        %v1703 = vsub.s32 0, %v1702
        %v1704 = vrot.slane %v481, %v1703
        %v1705 = vlaneseq
        %v1706 = vshrl.u32 %v1705, 7
        %v1707 = vsub.s32 0, %v1706
        %v1708 = vrot.slane %v482, %v1707
        %v1709 = vlaneseq
        %v1710 = vshrl.u32 %v1709, 7
        %v1711 = vsub.s32 0, %v1710
        %v1712 = vrot.slane %v483, %v1711
        %v1713 = vlaneseq
        %v1714 = vshrl.u32 %v1713, 7
        %v1715 = vsub.s32 0, %v1714
        %v1716 = vrot.slane %v484, %v1715
        %v1717 = vlaneseq
        %v1718 = vshrl.u32 %v1717, 7
        %v1719 = vsub.s32 0, %v1718
        %v1720 = vrot.slane %v485, %v1719
        %v1721 = vlaneseq
        %v1722 = vshrl.u32 %v1721, 7
        %v1723 = vsub.s32 0, %v1722
        %v1724 = vrot.slane %v486, %v1723
        %v1725 = vlaneseq
        %v1726 = vshrl.u32 %v1725, 7
        %v1727 = vsub.s32 0, %v1726
        %v1728 = vrot.slane %v487, %v1727
        %v1729 = vmul.f32 %v1688, %v1692
        %v1730 = vmul.f32 %v1687, %v1696
        %v1731 = vmul.f32 %v1686, %v1700
        %v1732 = vmul.f32 %v1685, %v1704
        %v1733 = vmul.f32 %v1684, %v1708
        %v1734 = vmul.f32 %v1683, %v1712
        %v1735 = vmul.f32 %v1682, %v1716
        %v1736 = vmul.f32 %v1681, %v1720
        %v1737 = vmul.f32 %v1680, %v1724
        %v1738 = vmul.f32 %v1679, %v1728
        %1739 = vrot.lane.b32.xlu0 %v1647, 80
        %v1740 = vpop.permute.xlu0 %1739
        %1741 = vrot.lane.b32.xlu0 %v1648, 80
        %v1742 = vpop.permute.xlu0 %1741
        %1743 = vrot.lane.b32.xlu0 %v1649, 80
        %v1744 = vpop.permute.xlu0 %1743
        %1745 = vrot.lane.b32.xlu0 %v1650, 80
        %v1746 = vpop.permute.xlu0 %1745
        %1747 = vrot.lane.b32.xlu0 %v1651, 80
        %v1748 = vpop.permute.xlu0 %1747
        %1749 = vrot.lane.b32.xlu0 %v1652, 80
        %v1750 = vpop.permute.xlu0 %1749
        %1751 = vrot.lane.b32.xlu0 %v1653, 80
        %v1752 = vpop.permute.xlu0 %1751
        %1753 = vrot.lane.b32.xlu0 %v1654, 80
        %v1754 = vpop.permute.xlu0 %1753
        %1755 = vrot.lane.b32.xlu0 %v1655, 80
        %v1756 = vpop.permute.xlu0 %1755
        %1757 = vrot.lane.b32.xlu0 %v1656, 80
        %v1758 = vpop.permute.xlu0 %1757
        %v1759 = vsel %vm617, %v1756, %v1758
        %v1760 = vsel %vm617, %v1754, %v1756
        %v1761 = vsel %vm617, %v1752, %v1754
        %v1762 = vsel %vm617, %v1750, %v1752
        %v1763 = vsel %vm617, %v1748, %v1750
        %v1764 = vsel %vm617, %v1746, %v1748
        %v1765 = vsel %vm617, %v1744, %v1746
        %v1766 = vsel %vm617, %v1742, %v1744
        %v1767 = vsel %vm617, %v1740, %v1742
        %v1768 = vsel %vm617, %v1758, %v1740
        %v1769 = vlaneseq
        %v1770 = vshrl.u32 %v1769, 7
        %v1771 = vsub.s32 1, %v1770
        %v1772 = vrot.slane %v478, %v1771
        %v1773 = vlaneseq
        %v1774 = vshrl.u32 %v1773, 7
        %v1775 = vsub.s32 1, %v1774
        %v1776 = vrot.slane %v479, %v1775
        %v1777 = vlaneseq
        %v1778 = vshrl.u32 %v1777, 7
        %v1779 = vsub.s32 1, %v1778
        %v1780 = vrot.slane %v480, %v1779
        %v1781 = vlaneseq
        %v1782 = vshrl.u32 %v1781, 7
        %v1783 = vsub.s32 1, %v1782
        %v1784 = vrot.slane %v481, %v1783
        %v1785 = vlaneseq
        %v1786 = vshrl.u32 %v1785, 7
        %v1787 = vsub.s32 1, %v1786
        %v1788 = vrot.slane %v482, %v1787
        %v1789 = vlaneseq
        %v1790 = vshrl.u32 %v1789, 7
        %v1791 = vsub.s32 1, %v1790
        %v1792 = vrot.slane %v483, %v1791
        %v1793 = vlaneseq
        %v1794 = vshrl.u32 %v1793, 7
        %v1795 = vsub.s32 1, %v1794
        %v1796 = vrot.slane %v484, %v1795
        %v1797 = vlaneseq
        %v1798 = vshrl.u32 %v1797, 7
        %v1799 = vsub.s32 1, %v1798
        %v1800 = vrot.slane %v485, %v1799
        %v1801 = vlaneseq
        %v1802 = vshrl.u32 %v1801, 7
        %v1803 = vsub.s32 1, %v1802
        %v1804 = vrot.slane %v486, %v1803
        %v1805 = vlaneseq
        %v1806 = vshrl.u32 %v1805, 7
        %v1807 = vsub.s32 1, %v1806
        %v1808 = vrot.slane %v487, %v1807
        %v1809 = vmul.f32 %v1768, %v1772
        %v1810 = vmul.f32 %v1767, %v1776
        %v1811 = vmul.f32 %v1766, %v1780
        %v1812 = vmul.f32 %v1765, %v1784
        %v1813 = vmul.f32 %v1764, %v1788
        %v1814 = vmul.f32 %v1763, %v1792
        %v1815 = vmul.f32 %v1762, %v1796
        %v1816 = vmul.f32 %v1761, %v1800
        %v1817 = vmul.f32 %v1760, %v1804
        %v1818 = vmul.f32 %v1759, %v1808
        %1819 = vrot.lane.b32.xlu0 %v1647, 79
        %v1820 = vpop.permute.xlu0 %1819
        %1821 = vrot.lane.b32.xlu0 %v1648, 79
        %v1822 = vpop.permute.xlu0 %1821
        %1823 = vrot.lane.b32.xlu0 %v1649, 79
        %v1824 = vpop.permute.xlu0 %1823
        %1825 = vrot.lane.b32.xlu0 %v1650, 79
        %v1826 = vpop.permute.xlu0 %1825
        %1827 = vrot.lane.b32.xlu0 %v1651, 79
        %v1828 = vpop.permute.xlu0 %1827
        %1829 = vrot.lane.b32.xlu0 %v1652, 79
        %v1830 = vpop.permute.xlu0 %1829
        %1831 = vrot.lane.b32.xlu0 %v1653, 79
        %v1832 = vpop.permute.xlu0 %1831
        %1833 = vrot.lane.b32.xlu0 %v1654, 79
        %v1834 = vpop.permute.xlu0 %1833
        %1835 = vrot.lane.b32.xlu0 %v1655, 79
        %v1836 = vpop.permute.xlu0 %1835
        %1837 = vrot.lane.b32.xlu0 %v1656, 79
        %v1838 = vpop.permute.xlu0 %1837
        %v1839 = vsel %vm688, %v1836, %v1838
        %v1840 = vsel %vm688, %v1834, %v1836
        %v1841 = vsel %vm688, %v1832, %v1834
        %v1842 = vsel %vm688, %v1830, %v1832
        %v1843 = vsel %vm688, %v1828, %v1830
        %v1844 = vsel %vm688, %v1826, %v1828
        %v1845 = vsel %vm688, %v1824, %v1826
        %v1846 = vsel %vm688, %v1822, %v1824
        %v1847 = vsel %vm688, %v1820, %v1822
        %v1848 = vsel %vm688, %v1838, %v1820
        %v1849 = vlaneseq
        %v1850 = vshrl.u32 %v1849, 7
        %v1851 = vsub.s32 2, %v1850
        %v1852 = vrot.slane %v478, %v1851
        %v1853 = vlaneseq
        %v1854 = vshrl.u32 %v1853, 7
        %v1855 = vsub.s32 2, %v1854
        %v1856 = vrot.slane %v479, %v1855
        %v1857 = vlaneseq
        %v1858 = vshrl.u32 %v1857, 7
        %v1859 = vsub.s32 2, %v1858
        %v1860 = vrot.slane %v480, %v1859
        %v1861 = vlaneseq
        %v1862 = vshrl.u32 %v1861, 7
        %v1863 = vsub.s32 2, %v1862
        %v1864 = vrot.slane %v481, %v1863
        %v1865 = vlaneseq
        %v1866 = vshrl.u32 %v1865, 7
        %v1867 = vsub.s32 2, %v1866
        %v1868 = vrot.slane %v482, %v1867
        %v1869 = vlaneseq
        %v1870 = vshrl.u32 %v1869, 7
        %v1871 = vsub.s32 2, %v1870
        %v1872 = vrot.slane %v483, %v1871
        %v1873 = vlaneseq
        %v1874 = vshrl.u32 %v1873, 7
        %v1875 = vsub.s32 2, %v1874
        %v1876 = vrot.slane %v484, %v1875
        %v1877 = vlaneseq
        %v1878 = vshrl.u32 %v1877, 7
        %v1879 = vsub.s32 2, %v1878
        %v1880 = vrot.slane %v485, %v1879
        %v1881 = vlaneseq
        %v1882 = vshrl.u32 %v1881, 7
        %v1883 = vsub.s32 2, %v1882
        %v1884 = vrot.slane %v486, %v1883
        %v1885 = vlaneseq
        %v1886 = vshrl.u32 %v1885, 7
        %v1887 = vsub.s32 2, %v1886
        %v1888 = vrot.slane %v487, %v1887
        %v1889 = vmul.f32 %v1848, %v1852
        %v1890 = vmul.f32 %v1847, %v1856
        %v1891 = vmul.f32 %v1846, %v1860
        %v1892 = vmul.f32 %v1845, %v1864
        %v1893 = vmul.f32 %v1844, %v1868
        %v1894 = vmul.f32 %v1843, %v1872
        %v1895 = vmul.f32 %v1842, %v1876
        %v1896 = vmul.f32 %v1841, %v1880
        %v1897 = vmul.f32 %v1840, %v1884
        %v1898 = vmul.f32 %v1839, %v1888
        %1899 = vrot.lane.b32.xlu0 %v1647, 1
        %v1900 = vpop.permute.xlu0 %1899
        %1901 = vrot.lane.b32.xlu0 %v1648, 1
        %v1902 = vpop.permute.xlu0 %1901
        %1903 = vrot.lane.b32.xlu0 %v1649, 1
        %v1904 = vpop.permute.xlu0 %1903
        %1905 = vrot.lane.b32.xlu0 %v1650, 1
        %v1906 = vpop.permute.xlu0 %1905
        %1907 = vrot.lane.b32.xlu0 %v1651, 1
        %v1908 = vpop.permute.xlu0 %1907
        %1909 = vrot.lane.b32.xlu0 %v1652, 1
        %v1910 = vpop.permute.xlu0 %1909
        %1911 = vrot.lane.b32.xlu0 %v1653, 1
        %v1912 = vpop.permute.xlu0 %1911
        %1913 = vrot.lane.b32.xlu0 %v1654, 1
        %v1914 = vpop.permute.xlu0 %1913
        %1915 = vrot.lane.b32.xlu0 %v1655, 1
        %v1916 = vpop.permute.xlu0 %1915
        %1917 = vrot.lane.b32.xlu0 %v1656, 1
        %v1918 = vpop.permute.xlu0 %1917
        %v1919 = vsel %vm749, %v1916, %v1918
        %v1920 = vsel %vm749, %v1914, %v1916
        %v1921 = vsel %vm749, %v1912, %v1914
        %v1922 = vsel %vm749, %v1910, %v1912
        %v1923 = vsel %vm749, %v1908, %v1910
        %v1924 = vsel %vm749, %v1906, %v1908
        %v1925 = vsel %vm749, %v1904, %v1906
        %v1926 = vsel %vm749, %v1902, %v1904
        %v1927 = vsel %vm749, %v1900, %v1902
        %v1928 = vsel %vm749, %v1918, %v1900
        %v1929 = vlaneseq
        %v1930 = vshrl.u32 %v1929, 7
        %v1931 = vsub.s32 3, %v1930
        %v1932 = vrot.slane %v478, %v1931
        %v1933 = vlaneseq
        %v1934 = vshrl.u32 %v1933, 7
        %v1935 = vsub.s32 3, %v1934
        %v1936 = vrot.slane %v479, %v1935
        %v1937 = vlaneseq
        %v1938 = vshrl.u32 %v1937, 7
        %v1939 = vsub.s32 3, %v1938
        %v1940 = vrot.slane %v480, %v1939
        %v1941 = vlaneseq
        %v1942 = vshrl.u32 %v1941, 7
        %v1943 = vsub.s32 3, %v1942
        %v1944 = vrot.slane %v481, %v1943
        %v1945 = vlaneseq
        %v1946 = vshrl.u32 %v1945, 7
        %v1947 = vsub.s32 3, %v1946
        %v1948 = vrot.slane %v482, %v1947
        %v1949 = vlaneseq
        %v1950 = vshrl.u32 %v1949, 7
        %v1951 = vsub.s32 3, %v1950
        %v1952 = vrot.slane %v483, %v1951
        %v1953 = vlaneseq
        %v1954 = vshrl.u32 %v1953, 7
        %v1955 = vsub.s32 3, %v1954
        %v1956 = vrot.slane %v484, %v1955
        %v1957 = vlaneseq
        %v1958 = vshrl.u32 %v1957, 7
        %v1959 = vsub.s32 3, %v1958
        %v1960 = vrot.slane %v485, %v1959
        %v1961 = vlaneseq
        %v1962 = vshrl.u32 %v1961, 7
        %v1963 = vsub.s32 3, %v1962
        %v1964 = vrot.slane %v486, %v1963
        %v1965 = vlaneseq
        %v1966 = vshrl.u32 %v1965, 7
        %v1967 = vsub.s32 3, %v1966
        %v1968 = vrot.slane %v487, %v1967
        %v1969 = vmul.f32 %v1928, %v1932
        %v1970 = vmul.f32 %v1927, %v1936
        %v1971 = vmul.f32 %v1926, %v1940
        %v1972 = vmul.f32 %v1925, %v1944
        %v1973 = vmul.f32 %v1924, %v1948
        %v1974 = vmul.f32 %v1923, %v1952
        %v1975 = vmul.f32 %v1922, %v1956
        %v1976 = vmul.f32 %v1921, %v1960
        %v1977 = vmul.f32 %v1920, %v1964
        %v1978 = vmul.f32 %v1919, %v1968
        %v1979 = vlaneseq
        %v1980 = vshrl.u32 %v1979, 7
        %v1981 = vsub.s32 4, %v1980
        %v1982 = vrot.slane %v478, %v1981
        %v1983 = vlaneseq
        %v1984 = vshrl.u32 %v1983, 7
        %v1985 = vsub.s32 4, %v1984
        %v1986 = vrot.slane %v479, %v1985
        %v1987 = vlaneseq
        %v1988 = vshrl.u32 %v1987, 7
        %v1989 = vsub.s32 4, %v1988
        %v1990 = vrot.slane %v480, %v1989
        %v1991 = vlaneseq
        %v1992 = vshrl.u32 %v1991, 7
        %v1993 = vsub.s32 4, %v1992
        %v1994 = vrot.slane %v481, %v1993
        %v1995 = vlaneseq
        %v1996 = vshrl.u32 %v1995, 7
        %v1997 = vsub.s32 4, %v1996
        %v1998 = vrot.slane %v482, %v1997
        %v1999 = vlaneseq
        %v2000 = vshrl.u32 %v1999, 7
        %v2001 = vsub.s32 4, %v2000
        %v2002 = vrot.slane %v483, %v2001
        %v2003 = vlaneseq
        %v2004 = vshrl.u32 %v2003, 7
        %v2005 = vsub.s32 4, %v2004
        %v2006 = vrot.slane %v484, %v2005
        %v2007 = vlaneseq
        %v2008 = vshrl.u32 %v2007, 7
        %v2009 = vsub.s32 4, %v2008
        %v2010 = vrot.slane %v485, %v2009
        %v2011 = vlaneseq
        %v2012 = vshrl.u32 %v2011, 7
        %v2013 = vsub.s32 4, %v2012
        %v2014 = vrot.slane %v486, %v2013
        %v2015 = vlaneseq
        %v2016 = vshrl.u32 %v2015, 7
        %v2017 = vsub.s32 4, %v2016
        %v2018 = vrot.slane %v487, %v2017
        %v2019 = vmul.f32 %v1647, %v1982
        %v2020 = vmul.f32 %v1648, %v1986
        %v2021 = vmul.f32 %v1649, %v1990
        %v2022 = vmul.f32 %v1650, %v1994
        %v2023 = vmul.f32 %v1651, %v1998
        %v2024 = vmul.f32 %v1652, %v2002
        %v2025 = vmul.f32 %v1653, %v2006
        %v2026 = vmul.f32 %v1654, %v2010
        %v2027 = vmul.f32 %v1655, %v2014
        %v2028 = vmul.f32 %v1656, %v2018
        %2029 = vrot.lane.b32.xlu0 %v1647, 127
        %v2030 = vpop.permute.xlu0 %2029
        %2031 = vrot.lane.b32.xlu0 %v1648, 127
        %v2032 = vpop.permute.xlu0 %2031
        %2033 = vrot.lane.b32.xlu0 %v1649, 127
        %v2034 = vpop.permute.xlu0 %2033
        %2035 = vrot.lane.b32.xlu0 %v1650, 127
        %v2036 = vpop.permute.xlu0 %2035
        %2037 = vrot.lane.b32.xlu0 %v1651, 127
        %v2038 = vpop.permute.xlu0 %2037
        %2039 = vrot.lane.b32.xlu0 %v1652, 127
        %v2040 = vpop.permute.xlu0 %2039
        %2041 = vrot.lane.b32.xlu0 %v1653, 127
        %v2042 = vpop.permute.xlu0 %2041
        %2043 = vrot.lane.b32.xlu0 %v1654, 127
        %v2044 = vpop.permute.xlu0 %2043
        %2045 = vrot.lane.b32.xlu0 %v1655, 127
        %v2046 = vpop.permute.xlu0 %2045
        %2047 = vrot.lane.b32.xlu0 %v1656, 127
        %v2048 = vpop.permute.xlu0 %2047
        %v2049 = vsel %vm878, %v2046, %v2048
        %v2050 = vsel %vm878, %v2044, %v2046
        %v2051 = vsel %vm878, %v2042, %v2044
        %v2052 = vsel %vm878, %v2040, %v2042
        %v2053 = vsel %vm878, %v2038, %v2040
        %v2054 = vsel %vm878, %v2036, %v2038
        %v2055 = vsel %vm878, %v2034, %v2036
        %v2056 = vsel %vm878, %v2032, %v2034
        %v2057 = vsel %vm878, %v2030, %v2032
        %v2058 = vsel %vm878, %v2048, %v2030
        %v2059 = vlaneseq
        %v2060 = vshrl.u32 %v2059, 7
        %v2061 = vsub.s32 5, %v2060
        %v2062 = vrot.slane %v478, %v2061
        %v2063 = vlaneseq
        %v2064 = vshrl.u32 %v2063, 7
        %v2065 = vsub.s32 5, %v2064
        %v2066 = vrot.slane %v479, %v2065
        %v2067 = vlaneseq
        %v2068 = vshrl.u32 %v2067, 7
        %v2069 = vsub.s32 5, %v2068
        %v2070 = vrot.slane %v480, %v2069
        %v2071 = vlaneseq
        %v2072 = vshrl.u32 %v2071, 7
        %v2073 = vsub.s32 5, %v2072
        %v2074 = vrot.slane %v481, %v2073
        %v2075 = vlaneseq
        %v2076 = vshrl.u32 %v2075, 7
        %v2077 = vsub.s32 5, %v2076
        %v2078 = vrot.slane %v482, %v2077
        %v2079 = vlaneseq
        %v2080 = vshrl.u32 %v2079, 7
        %v2081 = vsub.s32 5, %v2080
        %v2082 = vrot.slane %v483, %v2081
        %v2083 = vlaneseq
        %v2084 = vshrl.u32 %v2083, 7
        %v2085 = vsub.s32 5, %v2084
        %v2086 = vrot.slane %v484, %v2085
        %v2087 = vlaneseq
        %v2088 = vshrl.u32 %v2087, 7
        %v2089 = vsub.s32 5, %v2088
        %v2090 = vrot.slane %v485, %v2089
        %v2091 = vlaneseq
        %v2092 = vshrl.u32 %v2091, 7
        %v2093 = vsub.s32 5, %v2092
        %v2094 = vrot.slane %v486, %v2093
        %v2095 = vlaneseq
        %v2096 = vshrl.u32 %v2095, 7
        %v2097 = vsub.s32 5, %v2096
        %v2098 = vrot.slane %v487, %v2097
        %v2099 = vmul.f32 %v2057, %v2062
        %v2100 = vmul.f32 %v2056, %v2066
        %v2101 = vmul.f32 %v2055, %v2070
        %v2102 = vmul.f32 %v2054, %v2074
        %v2103 = vmul.f32 %v2053, %v2078
        %v2104 = vmul.f32 %v2052, %v2082
        %v2105 = vmul.f32 %v2051, %v2086
        %v2106 = vmul.f32 %v2050, %v2090
        %v2107 = vmul.f32 %v2049, %v2094
        %v2108 = vmul.f32 %v2058, %v2098
        %2109 = vrot.lane.b32.xlu0 %v1647, 49
        %v2110 = vpop.permute.xlu0 %2109
        %2111 = vrot.lane.b32.xlu0 %v1648, 49
        %v2112 = vpop.permute.xlu0 %2111
        %2113 = vrot.lane.b32.xlu0 %v1649, 49
        %v2114 = vpop.permute.xlu0 %2113
        %2115 = vrot.lane.b32.xlu0 %v1650, 49
        %v2116 = vpop.permute.xlu0 %2115
        %2117 = vrot.lane.b32.xlu0 %v1651, 49
        %v2118 = vpop.permute.xlu0 %2117
        %2119 = vrot.lane.b32.xlu0 %v1652, 49
        %v2120 = vpop.permute.xlu0 %2119
        %2121 = vrot.lane.b32.xlu0 %v1653, 49
        %v2122 = vpop.permute.xlu0 %2121
        %2123 = vrot.lane.b32.xlu0 %v1654, 49
        %v2124 = vpop.permute.xlu0 %2123
        %2125 = vrot.lane.b32.xlu0 %v1655, 49
        %v2126 = vpop.permute.xlu0 %2125
        %2127 = vrot.lane.b32.xlu0 %v1656, 49
        %v2128 = vpop.permute.xlu0 %2127
        %v2129 = vsel %vm939, %v2126, %v2128
        %v2130 = vsel %vm939, %v2124, %v2126
        %v2131 = vsel %vm939, %v2122, %v2124
        %v2132 = vsel %vm939, %v2120, %v2122
        %v2133 = vsel %vm939, %v2118, %v2120
        %v2134 = vsel %vm939, %v2116, %v2118
        %v2135 = vsel %vm939, %v2114, %v2116
        %v2136 = vsel %vm939, %v2112, %v2114
        %v2137 = vsel %vm939, %v2110, %v2112
        %v2138 = vsel %vm939, %v2128, %v2110
        %v2139 = vlaneseq
        %v2140 = vshrl.u32 %v2139, 7
        %v2141 = vsub.s32 6, %v2140
        %v2142 = vrot.slane %v478, %v2141
        %v2143 = vlaneseq
        %v2144 = vshrl.u32 %v2143, 7
        %v2145 = vsub.s32 6, %v2144
        %v2146 = vrot.slane %v479, %v2145
        %v2147 = vlaneseq
        %v2148 = vshrl.u32 %v2147, 7
        %v2149 = vsub.s32 6, %v2148
        %v2150 = vrot.slane %v480, %v2149
        %v2151 = vlaneseq
        %v2152 = vshrl.u32 %v2151, 7
        %v2153 = vsub.s32 6, %v2152
        %v2154 = vrot.slane %v481, %v2153
        %v2155 = vlaneseq
        %v2156 = vshrl.u32 %v2155, 7
        %v2157 = vsub.s32 6, %v2156
        %v2158 = vrot.slane %v482, %v2157
        %v2159 = vlaneseq
        %v2160 = vshrl.u32 %v2159, 7
        %v2161 = vsub.s32 6, %v2160
        %v2162 = vrot.slane %v483, %v2161
        %v2163 = vlaneseq
        %v2164 = vshrl.u32 %v2163, 7
        %v2165 = vsub.s32 6, %v2164
        %v2166 = vrot.slane %v484, %v2165
        %v2167 = vlaneseq
        %v2168 = vshrl.u32 %v2167, 7
        %v2169 = vsub.s32 6, %v2168
        %v2170 = vrot.slane %v485, %v2169
        %v2171 = vlaneseq
        %v2172 = vshrl.u32 %v2171, 7
        %v2173 = vsub.s32 6, %v2172
        %v2174 = vrot.slane %v486, %v2173
        %v2175 = vlaneseq
        %v2176 = vshrl.u32 %v2175, 7
        %v2177 = vsub.s32 6, %v2176
        %v2178 = vrot.slane %v487, %v2177
        %v2179 = vmul.f32 %v2137, %v2142
        %v2180 = vmul.f32 %v2136, %v2146
        %v2181 = vmul.f32 %v2135, %v2150
        %v2182 = vmul.f32 %v2134, %v2154
        %v2183 = vmul.f32 %v2133, %v2158
        %v2184 = vmul.f32 %v2132, %v2162
        %v2185 = vmul.f32 %v2131, %v2166
        %v2186 = vmul.f32 %v2130, %v2170
        %v2187 = vmul.f32 %v2129, %v2174
        %v2188 = vmul.f32 %v2138, %v2178
        %2189 = vrot.lane.b32.xlu0 %v1647, 48
        %v2190 = vpop.permute.xlu0 %2189
        %2191 = vrot.lane.b32.xlu0 %v1648, 48
        %v2192 = vpop.permute.xlu0 %2191
        %2193 = vrot.lane.b32.xlu0 %v1649, 48
        %v2194 = vpop.permute.xlu0 %2193
        %2195 = vrot.lane.b32.xlu0 %v1650, 48
        %v2196 = vpop.permute.xlu0 %2195
        %2197 = vrot.lane.b32.xlu0 %v1651, 48
        %v2198 = vpop.permute.xlu0 %2197
        %2199 = vrot.lane.b32.xlu0 %v1652, 48
        %v2200 = vpop.permute.xlu0 %2199
        %2201 = vrot.lane.b32.xlu0 %v1653, 48
        %v2202 = vpop.permute.xlu0 %2201
        %2203 = vrot.lane.b32.xlu0 %v1654, 48
        %v2204 = vpop.permute.xlu0 %2203
        %2205 = vrot.lane.b32.xlu0 %v1655, 48
        %v2206 = vpop.permute.xlu0 %2205
        %2207 = vrot.lane.b32.xlu0 %v1656, 48
        %v2208 = vpop.permute.xlu0 %2207
        %v2209 = vsel %vm1000, %v2206, %v2208
        %v2210 = vsel %vm1000, %v2204, %v2206
        %v2211 = vsel %vm1000, %v2202, %v2204
        %v2212 = vsel %vm1000, %v2200, %v2202
        %v2213 = vsel %vm1000, %v2198, %v2200
        %v2214 = vsel %vm1000, %v2196, %v2198
        %v2215 = vsel %vm1000, %v2194, %v2196
        %v2216 = vsel %vm1000, %v2192, %v2194
        %v2217 = vsel %vm1000, %v2190, %v2192
        %v2218 = vsel %vm1000, %v2208, %v2190
        %v2219 = vlaneseq
        %v2220 = vshrl.u32 %v2219, 7
        %v2221 = vsub.s32 7, %v2220
        %v2222 = vrot.slane %v478, %v2221
        %v2223 = vlaneseq
        %v2224 = vshrl.u32 %v2223, 7
        %v2225 = vsub.s32 7, %v2224
        %v2226 = vrot.slane %v479, %v2225
        %v2227 = vlaneseq
        %v2228 = vshrl.u32 %v2227, 7
        %v2229 = vsub.s32 7, %v2228
        %v2230 = vrot.slane %v480, %v2229
        %v2231 = vlaneseq
        %v2232 = vshrl.u32 %v2231, 7
        %v2233 = vsub.s32 7, %v2232
        %v2234 = vrot.slane %v481, %v2233
        %v2235 = vlaneseq
        %v2236 = vshrl.u32 %v2235, 7
        %v2237 = vsub.s32 7, %v2236
        %v2238 = vrot.slane %v482, %v2237
        %v2239 = vlaneseq
        %v2240 = vshrl.u32 %v2239, 7
        %v2241 = vsub.s32 7, %v2240
        %v2242 = vrot.slane %v483, %v2241
        %v2243 = vlaneseq
        %v2244 = vshrl.u32 %v2243, 7
        %v2245 = vsub.s32 7, %v2244
        %v2246 = vrot.slane %v484, %v2245
        %v2247 = vlaneseq
        %v2248 = vshrl.u32 %v2247, 7
        %v2249 = vsub.s32 7, %v2248
        %v2250 = vrot.slane %v485, %v2249
        %v2251 = vlaneseq
        %v2252 = vshrl.u32 %v2251, 7
        %v2253 = vsub.s32 7, %v2252
        %v2254 = vrot.slane %v486, %v2253
        %v2255 = vlaneseq
        %v2256 = vshrl.u32 %v2255, 7
        %v2257 = vsub.s32 7, %v2256
        %v2258 = vrot.slane %v487, %v2257
        %v2259 = vmul.f32 %v2217, %v2222
        %v2260 = vmul.f32 %v2216, %v2226
        %v2261 = vmul.f32 %v2215, %v2230
        %v2262 = vmul.f32 %v2214, %v2234
        %v2263 = vmul.f32 %v2213, %v2238
        %v2264 = vmul.f32 %v2212, %v2242
        %v2265 = vmul.f32 %v2211, %v2246
        %v2266 = vmul.f32 %v2210, %v2250
        %v2267 = vmul.f32 %v2209, %v2254
        %v2268 = vmul.f32 %v2218, %v2258
        %2269 = vrot.lane.b32.xlu0 %v1647, 47
        %v2270 = vpop.permute.xlu0 %2269
        %2271 = vrot.lane.b32.xlu0 %v1648, 47
        %v2272 = vpop.permute.xlu0 %2271
        %2273 = vrot.lane.b32.xlu0 %v1649, 47
        %v2274 = vpop.permute.xlu0 %2273
        %2275 = vrot.lane.b32.xlu0 %v1650, 47
        %v2276 = vpop.permute.xlu0 %2275
        %2277 = vrot.lane.b32.xlu0 %v1651, 47
        %v2278 = vpop.permute.xlu0 %2277
        %2279 = vrot.lane.b32.xlu0 %v1652, 47
        %v2280 = vpop.permute.xlu0 %2279
        %2281 = vrot.lane.b32.xlu0 %v1653, 47
        %v2282 = vpop.permute.xlu0 %2281
        %2283 = vrot.lane.b32.xlu0 %v1654, 47
        %v2284 = vpop.permute.xlu0 %2283
        %2285 = vrot.lane.b32.xlu0 %v1655, 47
        %v2286 = vpop.permute.xlu0 %2285
        %2287 = vrot.lane.b32.xlu0 %v1656, 47
        %v2288 = vpop.permute.xlu0 %2287
        %v2289 = vsel %vm1061, %v2286, %v2288
        %v2290 = vsel %vm1061, %v2284, %v2286
        %v2291 = vsel %vm1061, %v2282, %v2284
        %v2292 = vsel %vm1061, %v2280, %v2282
        %v2293 = vsel %vm1061, %v2278, %v2280
        %v2294 = vsel %vm1061, %v2276, %v2278
        %v2295 = vsel %vm1061, %v2274, %v2276
        %v2296 = vsel %vm1061, %v2272, %v2274
        %v2297 = vsel %vm1061, %v2270, %v2272
        %v2298 = vsel %vm1061, %v2288, %v2270
        %v2299 = vlaneseq
        %v2300 = vshrl.u32 %v2299, 7
        %v2301 = vsub.s32 0, %v2300
        %v2302 = vrot.slane %v488, %v2301
        %v2303 = vlaneseq
        %v2304 = vshrl.u32 %v2303, 7
        %v2305 = vsub.s32 0, %v2304
        %v2306 = vrot.slane %v489, %v2305
        %v2307 = vlaneseq
        %v2308 = vshrl.u32 %v2307, 7
        %v2309 = vsub.s32 0, %v2308
        %v2310 = vrot.slane %v490, %v2309
        %v2311 = vlaneseq
        %v2312 = vshrl.u32 %v2311, 7
        %v2313 = vsub.s32 0, %v2312
        %v2314 = vrot.slane %v491, %v2313
        %v2315 = vlaneseq
        %v2316 = vshrl.u32 %v2315, 7
        %v2317 = vsub.s32 0, %v2316
        %v2318 = vrot.slane %v492, %v2317
        %v2319 = vlaneseq
        %v2320 = vshrl.u32 %v2319, 7
        %v2321 = vsub.s32 0, %v2320
        %v2322 = vrot.slane %v493, %v2321
        %v2323 = vlaneseq
        %v2324 = vshrl.u32 %v2323, 7
        %v2325 = vsub.s32 0, %v2324
        %v2326 = vrot.slane %v494, %v2325
        %v2327 = vlaneseq
        %v2328 = vshrl.u32 %v2327, 7
        %v2329 = vsub.s32 0, %v2328
        %v2330 = vrot.slane %v495, %v2329
        %v2331 = vlaneseq
        %v2332 = vshrl.u32 %v2331, 7
        %v2333 = vsub.s32 0, %v2332
        %v2334 = vrot.slane %v496, %v2333
        %v2335 = vlaneseq
        %v2336 = vshrl.u32 %v2335, 7
        %v2337 = vsub.s32 0, %v2336
        %v2338 = vrot.slane %v497, %v2337
        %v2339 = vmul.f32 %v2297, %v2302
        %v2340 = vmul.f32 %v2296, %v2306
        %v2341 = vmul.f32 %v2295, %v2310
        %v2342 = vmul.f32 %v2294, %v2314
        %v2343 = vmul.f32 %v2293, %v2318
        %v2344 = vmul.f32 %v2292, %v2322
        %v2345 = vmul.f32 %v2291, %v2326
        %v2346 = vmul.f32 %v2290, %v2330
        %v2347 = vmul.f32 %v2289, %v2334
        %v2348 = vmul.f32 %v2298, %v2338
        %v2349 = vpack.c.bf16 %v1809, %v1729
        %v2350 = vpack.c.bf16 %v1810, %v1730
        %v2351 = vpack.c.bf16 %v1811, %v1731
        %v2352 = vpack.c.bf16 %v1812, %v1732
        %v2353 = vpack.c.bf16 %v1813, %v1733
        %v2354 = vpack.c.bf16 %v1814, %v1734
        %v2355 = vpack.c.bf16 %v1815, %v1735
        %v2356 = vpack.c.bf16 %v1816, %v1736
        %v2357 = vpack.c.bf16 %v1817, %v1737
        %v2358 = vpack.c.bf16 %v1818, %v1738
        %v2359 = vpack.c.bf16 %v1969, %v1889
        %v2360 = vpack.c.bf16 %v1970, %v1890
        %v2361 = vpack.c.bf16 %v1971, %v1891
        %v2362 = vpack.c.bf16 %v1972, %v1892
        %v2363 = vpack.c.bf16 %v1973, %v1893
        %v2364 = vpack.c.bf16 %v1974, %v1894
        %v2365 = vpack.c.bf16 %v1975, %v1895
        %v2366 = vpack.c.bf16 %v1976, %v1896
        %v2367 = vpack.c.bf16 %v1977, %v1897
        %v2368 = vpack.c.bf16 %v1978, %v1898
        %v2369 = vpack.c.bf16 %v2099, %v2019
        %v2370 = vpack.c.bf16 %v2100, %v2020
        %v2371 = vpack.c.bf16 %v2101, %v2021
        %v2372 = vpack.c.bf16 %v2102, %v2022
        %v2373 = vpack.c.bf16 %v2103, %v2023
        %v2374 = vpack.c.bf16 %v2104, %v2024
        %v2375 = vpack.c.bf16 %v2105, %v2025
        %v2376 = vpack.c.bf16 %v2106, %v2026
        %v2377 = vpack.c.bf16 %v2107, %v2027
        %v2378 = vpack.c.bf16 %v2108, %v2028
        %v2379 = vpack.c.bf16 %v2259, %v2179
        %v2380 = vpack.c.bf16 %v2260, %v2180
        %v2381 = vpack.c.bf16 %v2261, %v2181
        %v2382 = vpack.c.bf16 %v2262, %v2182
        %v2383 = vpack.c.bf16 %v2263, %v2183
        %v2384 = vpack.c.bf16 %v2264, %v2184
        %v2385 = vpack.c.bf16 %v2265, %v2185
        %v2386 = vpack.c.bf16 %v2266, %v2186
        %v2387 = vpack.c.bf16 %v2267, %v2187
        %v2388 = vpack.c.bf16 %v2268, %v2188
        %v2389 = vpack.c.bf16 %v2339, %v2339
        %v2390 = vpack.c.bf16 %v2340, %v2340
        %v2391 = vpack.c.bf16 %v2341, %v2341
        %v2392 = vpack.c.bf16 %v2342, %v2342
        %v2393 = vpack.c.bf16 %v2343, %v2343
        %v2394 = vpack.c.bf16 %v2344, %v2344
        %v2395 = vpack.c.bf16 %v2345, %v2345
        %v2396 = vpack.c.bf16 %v2346, %v2346
        %v2397 = vpack.c.bf16 %v2347, %v2347
        %v2398 = vpack.c.bf16 %v2348, %v2348
        %2400 = vset.pattern.permute.xlu0 0
        %2401 = vperm.xlu0 %2400, %v1658
        %v2402 = vpop.permute.xlu0 %2401
        %vm2404 = vcmask 588800
        %v2406 = vsel %vm2404, %v1657, 0
        %v2409 = vsel %vm1347, %v2389, 0
        %v2412 = vsel %vm1347, %v2390, 0
        %v2415 = vsel %vm1347, %v2391, 0
        %v2418 = vsel %vm1347, %v2392, 0
        %v2421 = vsel %vm1347, %v2393, 0
        %v2424 = vsel %vm1347, %v2394, 0
        %v2427 = vsel %vm1347, %v2395, 0
        %v2430 = vsel %vm1347, %v2396, 0
        %v2433 = vsel %vm1347, %v2397, 0
        %v2436 = vsel %vm1347, %v2398, 0
        %2438 = vmatprep.subr.bf16.mxu0 %v2350
        %2439 = vmatpush1.bf16.msra.mxu0 %v2349
        %2440 = vmatprep.subr.bf16.mxu0 %v2360
        %2441 = vmatpush1.bf16.msra.mxu0 %v2359
        %2442 = vmatprep.subr.bf16.mxu0 %v2370
        %2443 = vmatpush1.bf16.msra.mxu0 %v2369
        %2444 = vmatprep.subr.bf16.mxu0 %v2380
        %2445 = vmatpush1.bf16.msra.mxu0 %v2379
        %2446 = vmatprep.subr.bf16.mxu0 %v2412
        %2447 = vmatpush1.bf16.msra.mxu0 %v2409
        %2448 = vmatprep.subr.bf16.mxu0 0
        %2449 = vmatpush1.bf16.msra.mxu0 0
        %2450 = vmatprep.subr.bf16.mxu0 0
        %2451 = vmatpush1.bf16.msra.mxu0 0
        %2452 = vmatprep.subr.bf16.mxu0 0
        %2453 = vmatpush1.bf16.msra.mxu0 0
        %2454 = vmatprep.subr.bf16.mxu0 0
        %2455 = vmatpush1.bf16.msra.mxu0 0
        %2456 = vmatprep.subr.bf16.mxu0 0
        %2457 = vmatpush1.bf16.msra.mxu0 0
        %2458 = vmatprep.subr.bf16.mxu0 0
        %2459 = vmatpush1.bf16.msra.mxu0 0
        %2460 = vmatprep.subr.bf16.mxu0 0
        %2461 = vmatpush1.bf16.msra.mxu0 0
        %2462 = vmatprep.subr.bf16.mxu0 0
        %2463 = vmatpush1.bf16.msra.mxu0 0
        %2464 = vmatprep.subr.bf16.mxu0 0
        %2465 = vmatpush1.bf16.msra.mxu0 0
        %2466 = vmatprep.subr.bf16.mxu0 0
        %2467 = vmatpush1.bf16.msra.mxu0 0
        %2468 = vmatprep.subr.bf16.mxu0 0
        %2469 = vmatpush1.bf16.msra.mxu0 0
        %2470 = vmatprep.mubr.bf16.mxu0 0
        %2471 = vmatmul.mubr.bf16.gmra.mrb[0].mxu0 %v2406
        %v2472 = vpop.f32.mrb[0].mxu0
        %v2473 = vadd.f32 %v2402, %v2472
        %v2474 = vpop.f32.mrb[0].mxu0
        %v2475 = vadd.f32 %v2402, %v2474
        %v2476 = vpop.f32.mrb[0].mxu0
        %v2477 = vpop.f32.mrb[0].mxu0
        %2478 = vdwg.mxu0
        %2479 = vmatprep.subr.bf16.mxu0 %v2352
        %2480 = vmatpush1.bf16.msra.mxu0 %v2351
        %2481 = vmatprep.subr.bf16.mxu0 %v2362
        %2482 = vmatpush1.bf16.msra.mxu0 %v2361
        %2483 = vmatprep.subr.bf16.mxu0 %v2372
        %2484 = vmatpush1.bf16.msra.mxu0 %v2371
        %2485 = vmatprep.subr.bf16.mxu0 %v2382
        %2486 = vmatpush1.bf16.msra.mxu0 %v2381
        %2487 = vmatprep.subr.bf16.mxu0 %v2418
        %2488 = vmatpush1.bf16.msra.mxu0 %v2415
        %2489 = vmatprep.subr.bf16.mxu0 0
        %2490 = vmatpush1.bf16.msra.mxu0 0
        %2491 = vmatprep.subr.bf16.mxu0 0
        %2492 = vmatpush1.bf16.msra.mxu0 0
        %2493 = vmatprep.subr.bf16.mxu0 0
        %2494 = vmatpush1.bf16.msra.mxu0 0
        %2495 = vmatprep.subr.bf16.mxu0 0
        %2496 = vmatpush1.bf16.msra.mxu0 0
        %2497 = vmatprep.subr.bf16.mxu0 0
        %2498 = vmatpush1.bf16.msra.mxu0 0
        %2499 = vmatprep.subr.bf16.mxu0 0
        %2500 = vmatpush1.bf16.msra.mxu0 0
        %2501 = vmatprep.subr.bf16.mxu0 0
        %2502 = vmatpush1.bf16.msra.mxu0 0
        %2503 = vmatprep.subr.bf16.mxu0 0
        %2504 = vmatpush1.bf16.msra.mxu0 0
        %2505 = vmatprep.subr.bf16.mxu0 0
        %2506 = vmatpush1.bf16.msra.mxu0 0
        %2507 = vmatprep.subr.bf16.mxu0 0
        %2508 = vmatpush1.bf16.msra.mxu0 0
        %2509 = vmatprep.subr.bf16.mxu0 0
        %2510 = vmatpush1.bf16.msra.mxu0 0
        %2511 = vmatprep.mubr.bf16.mxu0 0
        %2512 = vmatmul.mubr.bf16.gmra.mrb[0].mxu0 %v2406
        %v2513 = vpop.f32.mrb[0].mxu0
        %v2514 = vadd.f32 %v2402, %v2513
        %v2515 = vpop.f32.mrb[0].mxu0
        %v2516 = vadd.f32 %v2402, %v2515
        %v2517 = vpop.f32.mrb[0].mxu0
        %v2518 = vpop.f32.mrb[0].mxu0
        %2519 = vdwg.mxu0
        %2520 = vmatprep.subr.bf16.mxu0 %v2354
        %2521 = vmatpush1.bf16.msra.mxu0 %v2353
        %2522 = vmatprep.subr.bf16.mxu0 %v2364
        %2523 = vmatpush1.bf16.msra.mxu0 %v2363
        %2524 = vmatprep.subr.bf16.mxu0 %v2374
        %2525 = vmatpush1.bf16.msra.mxu0 %v2373
        %2526 = vmatprep.subr.bf16.mxu0 %v2384
        %2527 = vmatpush1.bf16.msra.mxu0 %v2383
        %2528 = vmatprep.subr.bf16.mxu0 %v2424
        %2529 = vmatpush1.bf16.msra.mxu0 %v2421
        %2530 = vmatprep.subr.bf16.mxu0 0
        %2531 = vmatpush1.bf16.msra.mxu0 0
        %2532 = vmatprep.subr.bf16.mxu0 0
        %2533 = vmatpush1.bf16.msra.mxu0 0
        %2534 = vmatprep.subr.bf16.mxu0 0
        %2535 = vmatpush1.bf16.msra.mxu0 0
        %2536 = vmatprep.subr.bf16.mxu0 0
        %2537 = vmatpush1.bf16.msra.mxu0 0
        %2538 = vmatprep.subr.bf16.mxu0 0
        %2539 = vmatpush1.bf16.msra.mxu0 0
        %2540 = vmatprep.subr.bf16.mxu0 0
        %2541 = vmatpush1.bf16.msra.mxu0 0
        %2542 = vmatprep.subr.bf16.mxu0 0
        %2543 = vmatpush1.bf16.msra.mxu0 0
        %2544 = vmatprep.subr.bf16.mxu0 0
        %2545 = vmatpush1.bf16.msra.mxu0 0
        %2546 = vmatprep.subr.bf16.mxu0 0
        %2547 = vmatpush1.bf16.msra.mxu0 0
        %2548 = vmatprep.subr.bf16.mxu0 0
        %2549 = vmatpush1.bf16.msra.mxu0 0
        %2550 = vmatprep.subr.bf16.mxu0 0
        %2551 = vmatpush1.bf16.msra.mxu0 0
        %2552 = vmatprep.mubr.bf16.mxu0 0
        %2553 = vmatmul.mubr.bf16.gmra.mrb[0].mxu0 %v2406
        %v2554 = vpop.f32.mrb[0].mxu0
        %v2555 = vadd.f32 %v2402, %v2554
        %v2556 = vpop.f32.mrb[0].mxu0
        %v2557 = vadd.f32 %v2402, %v2556
        %v2558 = vpop.f32.mrb[0].mxu0
        %v2559 = vpop.f32.mrb[0].mxu0
        %2560 = vdwg.mxu0
        %2561 = vmatprep.subr.bf16.mxu0 %v2356
        %2562 = vmatpush1.bf16.msra.mxu0 %v2355
        %2563 = vmatprep.subr.bf16.mxu0 %v2366
        %2564 = vmatpush1.bf16.msra.mxu0 %v2365
        %2565 = vmatprep.subr.bf16.mxu0 %v2376
        %2566 = vmatpush1.bf16.msra.mxu0 %v2375
        %2567 = vmatprep.subr.bf16.mxu0 %v2386
        %2568 = vmatpush1.bf16.msra.mxu0 %v2385
        %2569 = vmatprep.subr.bf16.mxu0 %v2430
        %2570 = vmatpush1.bf16.msra.mxu0 %v2427
        %2571 = vmatprep.subr.bf16.mxu0 0
        %2572 = vmatpush1.bf16.msra.mxu0 0
        %2573 = vmatprep.subr.bf16.mxu0 0
        %2574 = vmatpush1.bf16.msra.mxu0 0
        %2575 = vmatprep.subr.bf16.mxu0 0
        %2576 = vmatpush1.bf16.msra.mxu0 0
        %2577 = vmatprep.subr.bf16.mxu0 0
        %2578 = vmatpush1.bf16.msra.mxu0 0
        %2579 = vmatprep.subr.bf16.mxu0 0
        %2580 = vmatpush1.bf16.msra.mxu0 0
        %2581 = vmatprep.subr.bf16.mxu0 0
        %2582 = vmatpush1.bf16.msra.mxu0 0
        %2583 = vmatprep.subr.bf16.mxu0 0
        %2584 = vmatpush1.bf16.msra.mxu0 0
        %2585 = vmatprep.subr.bf16.mxu0 0
        %2586 = vmatpush1.bf16.msra.mxu0 0
        %2587 = vmatprep.subr.bf16.mxu0 0
        %2588 = vmatpush1.bf16.msra.mxu0 0
        %2589 = vmatprep.subr.bf16.mxu0 0
        %2590 = vmatpush1.bf16.msra.mxu0 0
        %2591 = vmatprep.subr.bf16.mxu0 0
        %2592 = vmatpush1.bf16.msra.mxu0 0
        %2593 = vmatprep.mubr.bf16.mxu0 0
        %2594 = vmatmul.mubr.bf16.gmra.mrb[0].mxu0 %v2406
        %v2595 = vpop.f32.mrb[0].mxu0
        %v2596 = vadd.f32 %v2402, %v2595
        %v2597 = vpop.f32.mrb[0].mxu0
        %v2598 = vadd.f32 %v2402, %v2597
        %v2599 = vpop.f32.mrb[0].mxu0
        %v2600 = vpop.f32.mrb[0].mxu0
        %2601 = vdwg.mxu0
        %2602 = vmatprep.subr.bf16.mxu0 %v2358
        %2603 = vmatpush1.bf16.msra.mxu0 %v2357
        %2604 = vmatprep.subr.bf16.mxu0 %v2368
        %2605 = vmatpush1.bf16.msra.mxu0 %v2367
        %2606 = vmatprep.subr.bf16.mxu0 %v2378
        %2607 = vmatpush1.bf16.msra.mxu0 %v2377
        %2608 = vmatprep.subr.bf16.mxu0 %v2388
        %2609 = vmatpush1.bf16.msra.mxu0 %v2387
        %2610 = vmatprep.subr.bf16.mxu0 %v2436
        %2611 = vmatpush1.bf16.msra.mxu0 %v2433
        %2612 = vmatprep.subr.bf16.mxu0 0
        %2613 = vmatpush1.bf16.msra.mxu0 0
        %2614 = vmatprep.subr.bf16.mxu0 0
        %2615 = vmatpush1.bf16.msra.mxu0 0
        %2616 = vmatprep.subr.bf16.mxu0 0
        %2617 = vmatpush1.bf16.msra.mxu0 0
        %2618 = vmatprep.subr.bf16.mxu0 0
        %2619 = vmatpush1.bf16.msra.mxu0 0
        %2620 = vmatprep.subr.bf16.mxu0 0
        %2621 = vmatpush1.bf16.msra.mxu0 0
        %2622 = vmatprep.subr.bf16.mxu0 0
        %2623 = vmatpush1.bf16.msra.mxu0 0
        %2624 = vmatprep.subr.bf16.mxu0 0
        %2625 = vmatpush1.bf16.msra.mxu0 0
        %2626 = vmatprep.subr.bf16.mxu0 0
        %2627 = vmatpush1.bf16.msra.mxu0 0
        %2628 = vmatprep.subr.bf16.mxu0 0
        %2629 = vmatpush1.bf16.msra.mxu0 0
        %2630 = vmatprep.subr.bf16.mxu0 0
        %2631 = vmatpush1.bf16.msra.mxu0 0
        %2632 = vmatprep.subr.bf16.mxu0 0
        %2633 = vmatpush1.bf16.msra.mxu0 0
        %2634 = vmatprep.mubr.bf16.mxu0 0
        %2635 = vmatmul.mubr.bf16.gmra.mrb[0].mxu0 %v2406
        %v2636 = vpop.f32.mrb[0].mxu0
        %v2637 = vadd.f32 %v2402, %v2636
        %v2638 = vpop.f32.mrb[0].mxu0
        %v2639 = vadd.f32 %v2402, %v2638
        %v2640 = vpop.f32.mrb[0].mxu0
        %v2641 = vpop.f32.mrb[0].mxu0
        %2642 = vdwg.mxu0
        %v2643 = vmax.f32 %v2473, 0.0
        %v2644 = vmax.f32 %v2475, 0.0
        %v2645 = vmax.f32 %v2514, 0.0
        %v2646 = vmax.f32 %v2516, 0.0
        %v2647 = vmax.f32 %v2555, 0.0
        %v2648 = vmax.f32 %v2557, 0.0
        %v2649 = vmax.f32 %v2596, 0.0
        %v2650 = vmax.f32 %v2598, 0.0
        %v2651 = vmax.f32 %v2637, 0.0
        %v2652 = vmax.f32 %v2639, 0.0
        %v2653 = vld [vmem:[%s6] sm:$0xf]
        %v2654 = vld [vmem:[%s7] sm:$0xff]
        %2655 = vrot.lane.b32.xlu0 %v2643, 81
        %v2656 = vpop.permute.xlu0 %2655
        %2657 = vrot.lane.b32.xlu0 %v2644, 81
        %v2658 = vpop.permute.xlu0 %2657
        %2659 = vrot.lane.b32.xlu0 %v2645, 81
        %v2660 = vpop.permute.xlu0 %2659
        %2661 = vrot.lane.b32.xlu0 %v2646, 81
        %v2662 = vpop.permute.xlu0 %2661
        %2663 = vrot.lane.b32.xlu0 %v2647, 81
        %v2664 = vpop.permute.xlu0 %2663
        %2665 = vrot.lane.b32.xlu0 %v2648, 81
        %v2666 = vpop.permute.xlu0 %2665
        %2667 = vrot.lane.b32.xlu0 %v2649, 81
        %v2668 = vpop.permute.xlu0 %2667
        %2669 = vrot.lane.b32.xlu0 %v2650, 81
        %v2670 = vpop.permute.xlu0 %2669
        %2671 = vrot.lane.b32.xlu0 %v2651, 81
        %v2672 = vpop.permute.xlu0 %2671
        %2673 = vrot.lane.b32.xlu0 %v2652, 81
        %v2674 = vpop.permute.xlu0 %2673
        %v2675 = vsel %vm576, %v2672, %v2674
        %v2676 = vsel %vm576, %v2670, %v2672
        %v2677 = vsel %vm576, %v2668, %v2670
        %v2678 = vsel %vm576, %v2666, %v2668
        %v2679 = vsel %vm576, %v2664, %v2666
        %v2680 = vsel %vm576, %v2662, %v2664
        %v2681 = vsel %vm576, %v2660, %v2662
        %v2682 = vsel %vm576, %v2658, %v2660
        %v2683 = vsel %vm576, %v2656, %v2658
        %v2684 = vsel %vm576, %v2674, %v2656
        %v2685 = vmul.f32 %v2684, %v1692
        %v2686 = vmul.f32 %v2683, %v1696
        %v2687 = vmul.f32 %v2682, %v1700
        %v2688 = vmul.f32 %v2681, %v1704
        %v2689 = vmul.f32 %v2680, %v1708
        %v2690 = vmul.f32 %v2679, %v1712
        %v2691 = vmul.f32 %v2678, %v1716
        %v2692 = vmul.f32 %v2677, %v1720
        %v2693 = vmul.f32 %v2676, %v1724
        %v2694 = vmul.f32 %v2675, %v1728
        %2695 = vrot.lane.b32.xlu0 %v2643, 80
        %v2696 = vpop.permute.xlu0 %2695
        %2697 = vrot.lane.b32.xlu0 %v2644, 80
        %v2698 = vpop.permute.xlu0 %2697
        %2699 = vrot.lane.b32.xlu0 %v2645, 80
        %v2700 = vpop.permute.xlu0 %2699
        %2701 = vrot.lane.b32.xlu0 %v2646, 80
        %v2702 = vpop.permute.xlu0 %2701
        %2703 = vrot.lane.b32.xlu0 %v2647, 80
        %v2704 = vpop.permute.xlu0 %2703
        %2705 = vrot.lane.b32.xlu0 %v2648, 80
        %v2706 = vpop.permute.xlu0 %2705
        %2707 = vrot.lane.b32.xlu0 %v2649, 80
        %v2708 = vpop.permute.xlu0 %2707
        %2709 = vrot.lane.b32.xlu0 %v2650, 80
        %v2710 = vpop.permute.xlu0 %2709
        %2711 = vrot.lane.b32.xlu0 %v2651, 80
        %v2712 = vpop.permute.xlu0 %2711
        %2713 = vrot.lane.b32.xlu0 %v2652, 80
        %v2714 = vpop.permute.xlu0 %2713
        %v2715 = vsel %vm617, %v2712, %v2714
        %v2716 = vsel %vm617, %v2710, %v2712
        %v2717 = vsel %vm617, %v2708, %v2710
        %v2718 = vsel %vm617, %v2706, %v2708
        %v2719 = vsel %vm617, %v2704, %v2706
        %v2720 = vsel %vm617, %v2702, %v2704
        %v2721 = vsel %vm617, %v2700, %v2702
        %v2722 = vsel %vm617, %v2698, %v2700
        %v2723 = vsel %vm617, %v2696, %v2698
        %v2724 = vsel %vm617, %v2714, %v2696
        %v2725 = vmul.f32 %v2724, %v1772
        %v2726 = vmul.f32 %v2723, %v1776
        %v2727 = vmul.f32 %v2722, %v1780
        %v2728 = vmul.f32 %v2721, %v1784
        %v2729 = vmul.f32 %v2720, %v1788
        %v2730 = vmul.f32 %v2719, %v1792
        %v2731 = vmul.f32 %v2718, %v1796
        %v2732 = vmul.f32 %v2717, %v1800
        %v2733 = vmul.f32 %v2716, %v1804
        %v2734 = vmul.f32 %v2715, %v1808
        %2735 = vrot.lane.b32.xlu0 %v2643, 79
        %v2736 = vpop.permute.xlu0 %2735
        %2737 = vrot.lane.b32.xlu0 %v2644, 79
        %v2738 = vpop.permute.xlu0 %2737
        %2739 = vrot.lane.b32.xlu0 %v2645, 79
        %v2740 = vpop.permute.xlu0 %2739
        %2741 = vrot.lane.b32.xlu0 %v2646, 79
        %v2742 = vpop.permute.xlu0 %2741
        %2743 = vrot.lane.b32.xlu0 %v2647, 79
        %v2744 = vpop.permute.xlu0 %2743
        %2745 = vrot.lane.b32.xlu0 %v2648, 79
        %v2746 = vpop.permute.xlu0 %2745
        %2747 = vrot.lane.b32.xlu0 %v2649, 79
        %v2748 = vpop.permute.xlu0 %2747
        %2749 = vrot.lane.b32.xlu0 %v2650, 79
        %v2750 = vpop.permute.xlu0 %2749
        %2751 = vrot.lane.b32.xlu0 %v2651, 79
        %v2752 = vpop.permute.xlu0 %2751
        %2753 = vrot.lane.b32.xlu0 %v2652, 79
        %v2754 = vpop.permute.xlu0 %2753
        %v2755 = vsel %vm688, %v2752, %v2754
        %v2756 = vsel %vm688, %v2750, %v2752
        %v2757 = vsel %vm688, %v2748, %v2750
        %v2758 = vsel %vm688, %v2746, %v2748
        %v2759 = vsel %vm688, %v2744, %v2746
        %v2760 = vsel %vm688, %v2742, %v2744
        %v2761 = vsel %vm688, %v2740, %v2742
        %v2762 = vsel %vm688, %v2738, %v2740
        %v2763 = vsel %vm688, %v2736, %v2738
        %v2764 = vsel %vm688, %v2754, %v2736
        %v2765 = vmul.f32 %v2764, %v1852
        %v2766 = vmul.f32 %v2763, %v1856
        %v2767 = vmul.f32 %v2762, %v1860
        %v2768 = vmul.f32 %v2761, %v1864
        %v2769 = vmul.f32 %v2760, %v1868
        %v2770 = vmul.f32 %v2759, %v1872
        %v2771 = vmul.f32 %v2758, %v1876
        %v2772 = vmul.f32 %v2757, %v1880
        %v2773 = vmul.f32 %v2756, %v1884
        %v2774 = vmul.f32 %v2755, %v1888
        %2775 = vrot.lane.b32.xlu0 %v2643, 1
        %v2776 = vpop.permute.xlu0 %2775
        %2777 = vrot.lane.b32.xlu0 %v2644, 1
        %v2778 = vpop.permute.xlu0 %2777
        %2779 = vrot.lane.b32.xlu0 %v2645, 1
        %v2780 = vpop.permute.xlu0 %2779
        %2781 = vrot.lane.b32.xlu0 %v2646, 1
        %v2782 = vpop.permute.xlu0 %2781
        %2783 = vrot.lane.b32.xlu0 %v2647, 1
        %v2784 = vpop.permute.xlu0 %2783
        %2785 = vrot.lane.b32.xlu0 %v2648, 1
        %v2786 = vpop.permute.xlu0 %2785
        %2787 = vrot.lane.b32.xlu0 %v2649, 1
        %v2788 = vpop.permute.xlu0 %2787
        %2789 = vrot.lane.b32.xlu0 %v2650, 1
        %v2790 = vpop.permute.xlu0 %2789
        %2791 = vrot.lane.b32.xlu0 %v2651, 1
        %v2792 = vpop.permute.xlu0 %2791
        %2793 = vrot.lane.b32.xlu0 %v2652, 1
        %v2794 = vpop.permute.xlu0 %2793
        %v2795 = vsel %vm749, %v2792, %v2794
        %v2796 = vsel %vm749, %v2790, %v2792
        %v2797 = vsel %vm749, %v2788, %v2790
        %v2798 = vsel %vm749, %v2786, %v2788
        %v2799 = vsel %vm749, %v2784, %v2786
        %v2800 = vsel %vm749, %v2782, %v2784
        %v2801 = vsel %vm749, %v2780, %v2782
        %v2802 = vsel %vm749, %v2778, %v2780
        %v2803 = vsel %vm749, %v2776, %v2778
        %v2804 = vsel %vm749, %v2794, %v2776
        %v2805 = vmul.f32 %v2804, %v1932
        %v2806 = vmul.f32 %v2803, %v1936
        %v2807 = vmul.f32 %v2802, %v1940
        %v2808 = vmul.f32 %v2801, %v1944
        %v2809 = vmul.f32 %v2800, %v1948
        %v2810 = vmul.f32 %v2799, %v1952
        %v2811 = vmul.f32 %v2798, %v1956
        %v2812 = vmul.f32 %v2797, %v1960
        %v2813 = vmul.f32 %v2796, %v1964
        %v2814 = vmul.f32 %v2795, %v1968
        %v2815 = vmul.f32 %v2643, %v1982
        %v2816 = vmul.f32 %v2644, %v1986
        %v2817 = vmul.f32 %v2645, %v1990
        %v2818 = vmul.f32 %v2646, %v1994
        %v2819 = vmul.f32 %v2647, %v1998
        %v2820 = vmul.f32 %v2648, %v2002
        %v2821 = vmul.f32 %v2649, %v2006
        %v2822 = vmul.f32 %v2650, %v2010
        %v2823 = vmul.f32 %v2651, %v2014
        %v2824 = vmul.f32 %v2652, %v2018
        %2825 = vrot.lane.b32.xlu0 %v2643, 127
        %v2826 = vpop.permute.xlu0 %2825
        %2827 = vrot.lane.b32.xlu0 %v2644, 127
        %v2828 = vpop.permute.xlu0 %2827
        %2829 = vrot.lane.b32.xlu0 %v2645, 127
        %v2830 = vpop.permute.xlu0 %2829
        %2831 = vrot.lane.b32.xlu0 %v2646, 127
        %v2832 = vpop.permute.xlu0 %2831
        %2833 = vrot.lane.b32.xlu0 %v2647, 127
        %v2834 = vpop.permute.xlu0 %2833
        %2835 = vrot.lane.b32.xlu0 %v2648, 127
        %v2836 = vpop.permute.xlu0 %2835
        %2837 = vrot.lane.b32.xlu0 %v2649, 127
        %v2838 = vpop.permute.xlu0 %2837
        %2839 = vrot.lane.b32.xlu0 %v2650, 127
        %v2840 = vpop.permute.xlu0 %2839
        %2841 = vrot.lane.b32.xlu0 %v2651, 127
        %v2842 = vpop.permute.xlu0 %2841
        %2843 = vrot.lane.b32.xlu0 %v2652, 127
        %v2844 = vpop.permute.xlu0 %2843
        %v2845 = vsel %vm878, %v2842, %v2844
        %v2846 = vsel %vm878, %v2840, %v2842
        %v2847 = vsel %vm878, %v2838, %v2840
        %v2848 = vsel %vm878, %v2836, %v2838
        %v2849 = vsel %vm878, %v2834, %v2836
        %v2850 = vsel %vm878, %v2832, %v2834
        %v2851 = vsel %vm878, %v2830, %v2832
        %v2852 = vsel %vm878, %v2828, %v2830
        %v2853 = vsel %vm878, %v2826, %v2828
        %v2854 = vsel %vm878, %v2844, %v2826
        %v2855 = vmul.f32 %v2853, %v2062
        %v2856 = vmul.f32 %v2852, %v2066
        %v2857 = vmul.f32 %v2851, %v2070
        %v2858 = vmul.f32 %v2850, %v2074
        %v2859 = vmul.f32 %v2849, %v2078
        %v2860 = vmul.f32 %v2848, %v2082
        %v2861 = vmul.f32 %v2847, %v2086
        %v2862 = vmul.f32 %v2846, %v2090
        %v2863 = vmul.f32 %v2845, %v2094
        %v2864 = vmul.f32 %v2854, %v2098
        %2865 = vrot.lane.b32.xlu0 %v2643, 49
        %v2866 = vpop.permute.xlu0 %2865
        %2867 = vrot.lane.b32.xlu0 %v2644, 49
        %v2868 = vpop.permute.xlu0 %2867
        %2869 = vrot.lane.b32.xlu0 %v2645, 49
        %v2870 = vpop.permute.xlu0 %2869
        %2871 = vrot.lane.b32.xlu0 %v2646, 49
        %v2872 = vpop.permute.xlu0 %2871
        %2873 = vrot.lane.b32.xlu0 %v2647, 49
        %v2874 = vpop.permute.xlu0 %2873
        %2875 = vrot.lane.b32.xlu0 %v2648, 49
        %v2876 = vpop.permute.xlu0 %2875
        %2877 = vrot.lane.b32.xlu0 %v2649, 49
        %v2878 = vpop.permute.xlu0 %2877
        %2879 = vrot.lane.b32.xlu0 %v2650, 49
        %v2880 = vpop.permute.xlu0 %2879
        %2881 = vrot.lane.b32.xlu0 %v2651, 49
        %v2882 = vpop.permute.xlu0 %2881
        %2883 = vrot.lane.b32.xlu0 %v2652, 49
        %v2884 = vpop.permute.xlu0 %2883
        %v2885 = vsel %vm939, %v2882, %v2884
        %v2886 = vsel %vm939, %v2880, %v2882
        %v2887 = vsel %vm939, %v2878, %v2880
        %v2888 = vsel %vm939, %v2876, %v2878
        %v2889 = vsel %vm939, %v2874, %v2876
        %v2890 = vsel %vm939, %v2872, %v2874
        %v2891 = vsel %vm939, %v2870, %v2872
        %v2892 = vsel %vm939, %v2868, %v2870
        %v2893 = vsel %vm939, %v2866, %v2868
        %v2894 = vsel %vm939, %v2884, %v2866
        %v2895 = vmul.f32 %v2893, %v2142
        %v2896 = vmul.f32 %v2892, %v2146
        %v2897 = vmul.f32 %v2891, %v2150
        %v2898 = vmul.f32 %v2890, %v2154
        %v2899 = vmul.f32 %v2889, %v2158
        %v2900 = vmul.f32 %v2888, %v2162
        %v2901 = vmul.f32 %v2887, %v2166
        %v2902 = vmul.f32 %v2886, %v2170
        %v2903 = vmul.f32 %v2885, %v2174
        %v2904 = vmul.f32 %v2894, %v2178
        %2905 = vrot.lane.b32.xlu0 %v2643, 48
        %v2906 = vpop.permute.xlu0 %2905
        %2907 = vrot.lane.b32.xlu0 %v2644, 48
        %v2908 = vpop.permute.xlu0 %2907
        %2909 = vrot.lane.b32.xlu0 %v2645, 48
        %v2910 = vpop.permute.xlu0 %2909
        %2911 = vrot.lane.b32.xlu0 %v2646, 48
        %v2912 = vpop.permute.xlu0 %2911
        %2913 = vrot.lane.b32.xlu0 %v2647, 48
        %v2914 = vpop.permute.xlu0 %2913
        %2915 = vrot.lane.b32.xlu0 %v2648, 48
        %v2916 = vpop.permute.xlu0 %2915
        %2917 = vrot.lane.b32.xlu0 %v2649, 48
        %v2918 = vpop.permute.xlu0 %2917
        %2919 = vrot.lane.b32.xlu0 %v2650, 48
        %v2920 = vpop.permute.xlu0 %2919
        %2921 = vrot.lane.b32.xlu0 %v2651, 48
        %v2922 = vpop.permute.xlu0 %2921
        %2923 = vrot.lane.b32.xlu0 %v2652, 48
        %v2924 = vpop.permute.xlu0 %2923
        %v2925 = vsel %vm1000, %v2922, %v2924
        %v2926 = vsel %vm1000, %v2920, %v2922
        %v2927 = vsel %vm1000, %v2918, %v2920
        %v2928 = vsel %vm1000, %v2916, %v2918
        %v2929 = vsel %vm1000, %v2914, %v2916
        %v2930 = vsel %vm1000, %v2912, %v2914
        %v2931 = vsel %vm1000, %v2910, %v2912
        %v2932 = vsel %vm1000, %v2908, %v2910
        %v2933 = vsel %vm1000, %v2906, %v2908
        %v2934 = vsel %vm1000, %v2924, %v2906
        %v2935 = vmul.f32 %v2933, %v2222
        %v2936 = vmul.f32 %v2932, %v2226
        %v2937 = vmul.f32 %v2931, %v2230
        %v2938 = vmul.f32 %v2930, %v2234
        %v2939 = vmul.f32 %v2929, %v2238
        %v2940 = vmul.f32 %v2928, %v2242
        %v2941 = vmul.f32 %v2927, %v2246
        %v2942 = vmul.f32 %v2926, %v2250
        %v2943 = vmul.f32 %v2925, %v2254
        %v2944 = vmul.f32 %v2934, %v2258
        %2945 = vrot.lane.b32.xlu0 %v2643, 47
        %v2946 = vpop.permute.xlu0 %2945
        %2947 = vrot.lane.b32.xlu0 %v2644, 47
        %v2948 = vpop.permute.xlu0 %2947
        %2949 = vrot.lane.b32.xlu0 %v2645, 47
        %v2950 = vpop.permute.xlu0 %2949
        %2951 = vrot.lane.b32.xlu0 %v2646, 47
        %v2952 = vpop.permute.xlu0 %2951
        %2953 = vrot.lane.b32.xlu0 %v2647, 47
        %v2954 = vpop.permute.xlu0 %2953
        %2955 = vrot.lane.b32.xlu0 %v2648, 47
        %v2956 = vpop.permute.xlu0 %2955
        %2957 = vrot.lane.b32.xlu0 %v2649, 47
        %v2958 = vpop.permute.xlu0 %2957
        %2959 = vrot.lane.b32.xlu0 %v2650, 47
        %v2960 = vpop.permute.xlu0 %2959
        %2961 = vrot.lane.b32.xlu0 %v2651, 47
        %v2962 = vpop.permute.xlu0 %2961
        %2963 = vrot.lane.b32.xlu0 %v2652, 47
        %v2964 = vpop.permute.xlu0 %2963
        %v2965 = vsel %vm1061, %v2962, %v2964
        %v2966 = vsel %vm1061, %v2960, %v2962
        %v2967 = vsel %vm1061, %v2958, %v2960
        %v2968 = vsel %vm1061, %v2956, %v2958
        %v2969 = vsel %vm1061, %v2954, %v2956
        %v2970 = vsel %vm1061, %v2952, %v2954
        %v2971 = vsel %vm1061, %v2950, %v2952
        %v2972 = vsel %vm1061, %v2948, %v2950
        %v2973 = vsel %vm1061, %v2946, %v2948
        %v2974 = vsel %vm1061, %v2964, %v2946
        %v2975 = vmul.f32 %v2973, %v2302
        %v2976 = vmul.f32 %v2972, %v2306
        %v2977 = vmul.f32 %v2971, %v2310
        %v2978 = vmul.f32 %v2970, %v2314
        %v2979 = vmul.f32 %v2969, %v2318
        %v2980 = vmul.f32 %v2968, %v2322
        %v2981 = vmul.f32 %v2967, %v2326
        %v2982 = vmul.f32 %v2966, %v2330
        %v2983 = vmul.f32 %v2965, %v2334
        %v2984 = vmul.f32 %v2974, %v2338
        %v2985 = vpack.c.bf16 %v2725, %v2685
        %v2986 = vpack.c.bf16 %v2726, %v2686
        %v2987 = vpack.c.bf16 %v2727, %v2687
        %v2988 = vpack.c.bf16 %v2728, %v2688
        %v2989 = vpack.c.bf16 %v2729, %v2689
        %v2990 = vpack.c.bf16 %v2730, %v2690
        %v2991 = vpack.c.bf16 %v2731, %v2691
        %v2992 = vpack.c.bf16 %v2732, %v2692
        %v2993 = vpack.c.bf16 %v2733, %v2693
        %v2994 = vpack.c.bf16 %v2734, %v2694
        %v2995 = vpack.c.bf16 %v2805, %v2765
        %v2996 = vpack.c.bf16 %v2806, %v2766
        %v2997 = vpack.c.bf16 %v2807, %v2767
        %v2998 = vpack.c.bf16 %v2808, %v2768
        %v2999 = vpack.c.bf16 %v2809, %v2769
        %v3000 = vpack.c.bf16 %v2810, %v2770
        %v3001 = vpack.c.bf16 %v2811, %v2771
        %v3002 = vpack.c.bf16 %v2812, %v2772
        %v3003 = vpack.c.bf16 %v2813, %v2773
        %v3004 = vpack.c.bf16 %v2814, %v2774
        %v3005 = vpack.c.bf16 %v2855, %v2815
        %v3006 = vpack.c.bf16 %v2856, %v2816
        %v3007 = vpack.c.bf16 %v2857, %v2817
        %v3008 = vpack.c.bf16 %v2858, %v2818
        %v3009 = vpack.c.bf16 %v2859, %v2819
        %v3010 = vpack.c.bf16 %v2860, %v2820
        %v3011 = vpack.c.bf16 %v2861, %v2821
        %v3012 = vpack.c.bf16 %v2862, %v2822
        %v3013 = vpack.c.bf16 %v2863, %v2823
        %v3014 = vpack.c.bf16 %v2864, %v2824
        %v3015 = vpack.c.bf16 %v2935, %v2895
        %v3016 = vpack.c.bf16 %v2936, %v2896
        %v3017 = vpack.c.bf16 %v2937, %v2897
        %v3018 = vpack.c.bf16 %v2938, %v2898
        %v3019 = vpack.c.bf16 %v2939, %v2899
        %v3020 = vpack.c.bf16 %v2940, %v2900
        %v3021 = vpack.c.bf16 %v2941, %v2901
        %v3022 = vpack.c.bf16 %v2942, %v2902
        %v3023 = vpack.c.bf16 %v2943, %v2903
        %v3024 = vpack.c.bf16 %v2944, %v2904
        %v3025 = vpack.c.bf16 %v2975, %v2975
        %v3026 = vpack.c.bf16 %v2976, %v2976
        %v3027 = vpack.c.bf16 %v2977, %v2977
        %v3028 = vpack.c.bf16 %v2978, %v2978
        %v3029 = vpack.c.bf16 %v2979, %v2979
        %v3030 = vpack.c.bf16 %v2980, %v2980
        %v3031 = vpack.c.bf16 %v2981, %v2981
        %v3032 = vpack.c.bf16 %v2982, %v2982
        %v3033 = vpack.c.bf16 %v2983, %v2983
        %v3034 = vpack.c.bf16 %v2984, %v2984
        %3036 = vset.pattern.permute.xlu0 0
        %3037 = vperm.xlu0 %3036, %v2654
        %v3038 = vpop.permute.xlu0 %3037
        %v3041 = vsel %vm2404, %v2653, 0
        %v3044 = vsel %vm1347, %v3025, 0
        %v3047 = vsel %vm1347, %v3026, 0
        %v3050 = vsel %vm1347, %v3027, 0
        %v3053 = vsel %vm1347, %v3028, 0
        %v3056 = vsel %vm1347, %v3029, 0
        %v3059 = vsel %vm1347, %v3030, 0
        %v3062 = vsel %vm1347, %v3031, 0
        %v3065 = vsel %vm1347, %v3032, 0
        %v3068 = vsel %vm1347, %v3033, 0
        %v3071 = vsel %vm1347, %v3034, 0
        %3073 = vmatprep.subr.bf16.mxu0 %v2986
        %3074 = vmatpush1.bf16.msra.mxu0 %v2985
        %3075 = vmatprep.subr.bf16.mxu0 %v2996
        %3076 = vmatpush1.bf16.msra.mxu0 %v2995
        %3077 = vmatprep.subr.bf16.mxu0 %v3006
        %3078 = vmatpush1.bf16.msra.mxu0 %v3005
        %3079 = vmatprep.subr.bf16.mxu0 %v3016
        %3080 = vmatpush1.bf16.msra.mxu0 %v3015
        %3081 = vmatprep.subr.bf16.mxu0 %v3047
        %3082 = vmatpush1.bf16.msra.mxu0 %v3044
        %3083 = vmatprep.subr.bf16.mxu0 0
        %3084 = vmatpush1.bf16.msra.mxu0 0
        %3085 = vmatprep.subr.bf16.mxu0 0
        %3086 = vmatpush1.bf16.msra.mxu0 0
        %3087 = vmatprep.subr.bf16.mxu0 0
        %3088 = vmatpush1.bf16.msra.mxu0 0
        %3089 = vmatprep.subr.bf16.mxu0 0
        %3090 = vmatpush1.bf16.msra.mxu0 0
        %3091 = vmatprep.subr.bf16.mxu0 0
        %3092 = vmatpush1.bf16.msra.mxu0 0
        %3093 = vmatprep.subr.bf16.mxu0 0
        %3094 = vmatpush1.bf16.msra.mxu0 0
        %3095 = vmatprep.subr.bf16.mxu0 0
        %3096 = vmatpush1.bf16.msra.mxu0 0
        %3097 = vmatprep.subr.bf16.mxu0 0
        %3098 = vmatpush1.bf16.msra.mxu0 0
        %3099 = vmatprep.subr.bf16.mxu0 0
        %3100 = vmatpush1.bf16.msra.mxu0 0
        %3101 = vmatprep.subr.bf16.mxu0 0
        %3102 = vmatpush1.bf16.msra.mxu0 0
        %3103 = vmatprep.subr.bf16.mxu0 0
        %3104 = vmatpush1.bf16.msra.mxu0 0
        %3105 = vmatprep.mubr.bf16.mxu0 0
        %3106 = vmatmul.mubr.bf16.gmra.mrb[0].mxu0 %v3041
        %v3107 = vpop.f32.mrb[0].mxu0
        %v3108 = vadd.f32 %v3038, %v3107
        %v3109 = vpop.f32.mrb[0].mxu0
        %v3110 = vadd.f32 %v3038, %v3109
        %v3111 = vpop.f32.mrb[0].mxu0
        %v3112 = vpop.f32.mrb[0].mxu0
        %3113 = vdwg.mxu0
        %3114 = vmatprep.subr.bf16.mxu0 %v2988
        %3115 = vmatpush1.bf16.msra.mxu0 %v2987
        %3116 = vmatprep.subr.bf16.mxu0 %v2998
        %3117 = vmatpush1.bf16.msra.mxu0 %v2997
        %3118 = vmatprep.subr.bf16.mxu0 %v3008
        %3119 = vmatpush1.bf16.msra.mxu0 %v3007
        %3120 = vmatprep.subr.bf16.mxu0 %v3018
        %3121 = vmatpush1.bf16.msra.mxu0 %v3017
        %3122 = vmatprep.subr.bf16.mxu0 %v3053
        %3123 = vmatpush1.bf16.msra.mxu0 %v3050
        %3124 = vmatprep.subr.bf16.mxu0 0
        %3125 = vmatpush1.bf16.msra.mxu0 0
        %3126 = vmatprep.subr.bf16.mxu0 0
        %3127 = vmatpush1.bf16.msra.mxu0 0
        %3128 = vmatprep.subr.bf16.mxu0 0
        %3129 = vmatpush1.bf16.msra.mxu0 0
        %3130 = vmatprep.subr.bf16.mxu0 0
        %3131 = vmatpush1.bf16.msra.mxu0 0
        %3132 = vmatprep.subr.bf16.mxu0 0
        %3133 = vmatpush1.bf16.msra.mxu0 0
        %3134 = vmatprep.subr.bf16.mxu0 0
        %3135 = vmatpush1.bf16.msra.mxu0 0
        %3136 = vmatprep.subr.bf16.mxu0 0
        %3137 = vmatpush1.bf16.msra.mxu0 0
        %3138 = vmatprep.subr.bf16.mxu0 0
        %3139 = vmatpush1.bf16.msra.mxu0 0
        %3140 = vmatprep.subr.bf16.mxu0 0
        %3141 = vmatpush1.bf16.msra.mxu0 0
        %3142 = vmatprep.subr.bf16.mxu0 0
        %3143 = vmatpush1.bf16.msra.mxu0 0
        %3144 = vmatprep.subr.bf16.mxu0 0
        %3145 = vmatpush1.bf16.msra.mxu0 0
        %3146 = vmatprep.mubr.bf16.mxu0 0
        %3147 = vmatmul.mubr.bf16.gmra.mrb[0].mxu0 %v3041
        %v3148 = vpop.f32.mrb[0].mxu0
        %v3149 = vadd.f32 %v3038, %v3148
        %v3150 = vpop.f32.mrb[0].mxu0
        %v3151 = vadd.f32 %v3038, %v3150
        %v3152 = vpop.f32.mrb[0].mxu0
        %v3153 = vpop.f32.mrb[0].mxu0
        %3154 = vdwg.mxu0
        %3155 = vmatprep.subr.bf16.mxu0 %v2990
        %3156 = vmatpush1.bf16.msra.mxu0 %v2989
        %3157 = vmatprep.subr.bf16.mxu0 %v3000
        %3158 = vmatpush1.bf16.msra.mxu0 %v2999
        %3159 = vmatprep.subr.bf16.mxu0 %v3010
        %3160 = vmatpush1.bf16.msra.mxu0 %v3009
        %3161 = vmatprep.subr.bf16.mxu0 %v3020
        %3162 = vmatpush1.bf16.msra.mxu0 %v3019
        %3163 = vmatprep.subr.bf16.mxu0 %v3059
        %3164 = vmatpush1.bf16.msra.mxu0 %v3056
        %3165 = vmatprep.subr.bf16.mxu0 0
        %3166 = vmatpush1.bf16.msra.mxu0 0
        %3167 = vmatprep.subr.bf16.mxu0 0
        %3168 = vmatpush1.bf16.msra.mxu0 0
        %3169 = vmatprep.subr.bf16.mxu0 0
        %3170 = vmatpush1.bf16.msra.mxu0 0
        %3171 = vmatprep.subr.bf16.mxu0 0
        %3172 = vmatpush1.bf16.msra.mxu0 0
        %3173 = vmatprep.subr.bf16.mxu0 0
        %3174 = vmatpush1.bf16.msra.mxu0 0
        %3175 = vmatprep.subr.bf16.mxu0 0
        %3176 = vmatpush1.bf16.msra.mxu0 0
        %3177 = vmatprep.subr.bf16.mxu0 0
        %3178 = vmatpush1.bf16.msra.mxu0 0
        %3179 = vmatprep.subr.bf16.mxu0 0
        %3180 = vmatpush1.bf16.msra.mxu0 0
        %3181 = vmatprep.subr.bf16.mxu0 0
        %3182 = vmatpush1.bf16.msra.mxu0 0
        %3183 = vmatprep.subr.bf16.mxu0 0
        %3184 = vmatpush1.bf16.msra.mxu0 0
        %3185 = vmatprep.subr.bf16.mxu0 0
        %3186 = vmatpush1.bf16.msra.mxu0 0
        %3187 = vmatprep.mubr.bf16.mxu0 0
        %3188 = vmatmul.mubr.bf16.gmra.mrb[0].mxu0 %v3041
        %v3189 = vpop.f32.mrb[0].mxu0
        %v3190 = vadd.f32 %v3038, %v3189
        %v3191 = vpop.f32.mrb[0].mxu0
        %v3192 = vadd.f32 %v3038, %v3191
        %v3193 = vpop.f32.mrb[0].mxu0
        %v3194 = vpop.f32.mrb[0].mxu0
        %3195 = vdwg.mxu0
        %3196 = vmatprep.subr.bf16.mxu0 %v2992
        %3197 = vmatpush1.bf16.msra.mxu0 %v2991
        %3198 = vmatprep.subr.bf16.mxu0 %v3002
        %3199 = vmatpush1.bf16.msra.mxu0 %v3001
        %3200 = vmatprep.subr.bf16.mxu0 %v3012
        %3201 = vmatpush1.bf16.msra.mxu0 %v3011
        %3202 = vmatprep.subr.bf16.mxu0 %v3022
        %3203 = vmatpush1.bf16.msra.mxu0 %v3021
        %3204 = vmatprep.subr.bf16.mxu0 %v3065
        %3205 = vmatpush1.bf16.msra.mxu0 %v3062
        %3206 = vmatprep.subr.bf16.mxu0 0
        %3207 = vmatpush1.bf16.msra.mxu0 0
        %3208 = vmatprep.subr.bf16.mxu0 0
        %3209 = vmatpush1.bf16.msra.mxu0 0
        %3210 = vmatprep.subr.bf16.mxu0 0
        %3211 = vmatpush1.bf16.msra.mxu0 0
        %3212 = vmatprep.subr.bf16.mxu0 0
        %3213 = vmatpush1.bf16.msra.mxu0 0
        %3214 = vmatprep.subr.bf16.mxu0 0
        %3215 = vmatpush1.bf16.msra.mxu0 0
        %3216 = vmatprep.subr.bf16.mxu0 0
        %3217 = vmatpush1.bf16.msra.mxu0 0
        %3218 = vmatprep.subr.bf16.mxu0 0
        %3219 = vmatpush1.bf16.msra.mxu0 0
        %3220 = vmatprep.subr.bf16.mxu0 0
        %3221 = vmatpush1.bf16.msra.mxu0 0
        %3222 = vmatprep.subr.bf16.mxu0 0
        %3223 = vmatpush1.bf16.msra.mxu0 0
        %3224 = vmatprep.subr.bf16.mxu0 0
        %3225 = vmatpush1.bf16.msra.mxu0 0
        %3226 = vmatprep.subr.bf16.mxu0 0
        %3227 = vmatpush1.bf16.msra.mxu0 0
        %3228 = vmatprep.mubr.bf16.mxu0 0
        %3229 = vmatmul.mubr.bf16.gmra.mrb[0].mxu0 %v3041
        %v3230 = vpop.f32.mrb[0].mxu0
        %v3231 = vadd.f32 %v3038, %v3230
        %v3232 = vpop.f32.mrb[0].mxu0
        %v3233 = vadd.f32 %v3038, %v3232
        %v3234 = vpop.f32.mrb[0].mxu0
        %v3235 = vpop.f32.mrb[0].mxu0
        %3236 = vdwg.mxu0
        %3237 = vmatprep.subr.bf16.mxu0 %v2994
        %3238 = vmatpush1.bf16.msra.mxu0 %v2993
        %3239 = vmatprep.subr.bf16.mxu0 %v3004
        %3240 = vmatpush1.bf16.msra.mxu0 %v3003
        %3241 = vmatprep.subr.bf16.mxu0 %v3014
        %3242 = vmatpush1.bf16.msra.mxu0 %v3013
        %3243 = vmatprep.subr.bf16.mxu0 %v3024
        %3244 = vmatpush1.bf16.msra.mxu0 %v3023
        %3245 = vmatprep.subr.bf16.mxu0 %v3071
        %3246 = vmatpush1.bf16.msra.mxu0 %v3068
        %3247 = vmatprep.subr.bf16.mxu0 0
        %3248 = vmatpush1.bf16.msra.mxu0 0
        %3249 = vmatprep.subr.bf16.mxu0 0
        %3250 = vmatpush1.bf16.msra.mxu0 0
        %3251 = vmatprep.subr.bf16.mxu0 0
        %3252 = vmatpush1.bf16.msra.mxu0 0
        %3253 = vmatprep.subr.bf16.mxu0 0
        %3254 = vmatpush1.bf16.msra.mxu0 0
        %3255 = vmatprep.subr.bf16.mxu0 0
        %3256 = vmatpush1.bf16.msra.mxu0 0
        %3257 = vmatprep.subr.bf16.mxu0 0
        %3258 = vmatpush1.bf16.msra.mxu0 0
        %3259 = vmatprep.subr.bf16.mxu0 0
        %3260 = vmatpush1.bf16.msra.mxu0 0
        %3261 = vmatprep.subr.bf16.mxu0 0
        %3262 = vmatpush1.bf16.msra.mxu0 0
        %3263 = vmatprep.subr.bf16.mxu0 0
        %3264 = vmatpush1.bf16.msra.mxu0 0
        %3265 = vmatprep.subr.bf16.mxu0 0
        %3266 = vmatpush1.bf16.msra.mxu0 0
        %3267 = vmatprep.subr.bf16.mxu0 0
        %3268 = vmatpush1.bf16.msra.mxu0 0
        %3269 = vmatprep.mubr.bf16.mxu0 0
        %3270 = vmatmul.mubr.bf16.gmra.mrb[0].mxu0 %v3041
        %v3271 = vpop.f32.mrb[0].mxu0
        %v3272 = vadd.f32 %v3038, %v3271
        %v3273 = vpop.f32.mrb[0].mxu0
        %v3274 = vadd.f32 %v3038, %v3273
        %v3275 = vpop.f32.mrb[0].mxu0
        %v3276 = vpop.f32.mrb[0].mxu0
        %3277 = vdwg.mxu0
        %v3278 = vadd.f32 %v3108, %v3110
        %v3279 = vadd.f32 %v3278, %v3149
        %v3280 = vadd.f32 %v3279, %v3151
        %v3281 = vadd.f32 %v3280, %v3190
        %v3282 = vadd.f32 %v3281, %v3192
        %v3283 = vadd.f32 %v3282, %v3231
        %v3284 = vadd.f32 %v3283, %v3233
        %v3285 = vadd.f32 %v3284, %v3272
        %v3286 = vadd.f32 %v3285, %v3274
        %3287 = vadd.xlane.f32.xlu0 %v3286
        %v3288 = vpop.xlane.xlu0 %3287
        %v3289 = vrcp.pop 1280.0
        %v3290 = vmul.f32 %v3288, %v3289
        %v3291 = vld [vmem:[%s8] sm:$0xff]
        %v3292 = vmul.f32 %v3291, %v3290
        %vm3293 = vcmask 31744
        %v3294 = vsel %vm3293, %v3292, 0.0
        %v3295 = vrot.slane %v3294, 4
        %v3296 = vadd.f32 %v3294, %v3295
        %v3297 = vrot.slane %v3296, 2
        %v3298 = vadd.f32 %v3296, %v3297
        %v3299 = vrot.slane %v3298, 1
        %v3300 = vadd.f32 %v3298, %v3299
        %v3301 = vld [vmem:[%s9] sm:$0x1]
        %v3302 = vadd.f32 %v3300, %v3301
        %v3303 = vmax.f32 %v3302, 0.0
        %v3304 = vld [vmem:[%s10] sm:$0xff]
        %v3305 = vlaneseq
        %v3306 = vshrl.u32 %v3305, 7
        %v3307 = vsub.s32 0, %v3306
        %v3308 = vrot.slane %v3303, %v3307
        %v3309 = vmul.f32 %v3304, %v3308
        %v3310 = vsel %vm3293, %v3309, 0.0
        %3311 = vadd.xlane.f32.xlu0 %v3310
        %v3312 = vpop.xlane.xlu0 %3311
        %v3313 = vld [vmem:[%s11] sm:$0xff]
        %v3314 = vadd.f32 %v3312, %v3313
        %v3315 = vxor.u32 %v3314, 2147483648
        %v3316 = vmul.f32 %v3315, 1.442695
        %v3317 = vpow.pop %v3316
        %v3318 = vadd.f32 %v3317, 1.0
        %v3319 = vrcp.pop %v3318
        %v3320 = vmul.f32 1.0, %v3319
        %3322 = vset.pattern.permute.xlu0 0
        %3323 = vperm.xlu0 %3322, %v3320
        %v3324 = vpop.permute.xlu0 %3323
        %v3326 = vmul.f32 %v3108, %v3324
        %v3327 = vmul.f32 %v3110, %v3324
        %v3328 = vmul.f32 %v3149, %v3324
        %v3329 = vmul.f32 %v3151, %v3324
        %v3330 = vmul.f32 %v3190, %v3324
        %v3331 = vmul.f32 %v3192, %v3324
        %v3332 = vmul.f32 %v3231, %v3324
        %v3333 = vmul.f32 %v3233, %v3324
        %v3334 = vmul.f32 %v3272, %v3324
        %v3335 = vmul.f32 %v3274, %v3324
        %v3336 = vadd.f32 %v3326, %v1647
        %v3337 = vadd.f32 %v3327, %v1648
        %v3338 = vadd.f32 %v3328, %v1649
        %v3339 = vadd.f32 %v3329, %v1650
        %v3340 = vadd.f32 %v3330, %v1651
        %v3341 = vadd.f32 %v3331, %v1652
        %v3342 = vadd.f32 %v3332, %v1653
        %v3343 = vadd.f32 %v3333, %v1654
        %v3344 = vadd.f32 %v3334, %v1655
        %v3345 = vadd.f32 %v3335, %v1656
        %v3346 = vmax.f32 %v3336, 0.0
        %v3347 = vmax.f32 %v3337, 0.0
        %v3348 = vmax.f32 %v3338, 0.0
        %v3349 = vmax.f32 %v3339, 0.0
        %v3350 = vmax.f32 %v3340, 0.0
        %v3351 = vmax.f32 %v3341, 0.0
        %v3352 = vmax.f32 %v3342, 0.0
        %v3353 = vmax.f32 %v3343, 0.0
        %v3354 = vmax.f32 %v3344, 0.0
        %v3355 = vmax.f32 %v3345, 0.0
        %v3356 = vadd.f32 %v3346, %v3347
        %v3357 = vadd.f32 %v3356, %v3348
        %v3358 = vadd.f32 %v3357, %v3349
        %v3359 = vadd.f32 %v3358, %v3350
        %v3360 = vadd.f32 %v3359, %v3351
        %v3361 = vadd.f32 %v3360, %v3352
        %v3362 = vadd.f32 %v3361, %v3353
        %v3363 = vadd.f32 %v3362, %v3354
        %v3364 = vadd.f32 %v3363, %v3355
        %3365 = vadd.xlane.f32.xlu0 %v3364
        %v3366 = vpop.xlane.xlu0 %3365
        %v3367 = vmul.f32 %v3366, %v3289
        %v3368 = vld [vmem:[%s12] sm:$0xff]
        %v3369 = vmul.f32 %v3367, %v3368
        %v3370 = vrot.slane %v3369, 4
        %v3371 = vadd.f32 %v3369, %v3370
        %v3372 = vrot.slane %v3371, 2
        %v3373 = vadd.f32 %v3371, %v3372
        %v3374 = vrot.slane %v3373, 1
        %v3375 = vadd.f32 %v3373, %v3374
        %v3376 = vld [vmem:[%s13] sm:$0x1]
        %v3377 = vadd.f32 %v3375, %v3376
        %3378 = vst [vmem:[%s472] sm:$0x1] %v3377
        %s3379 = sand.u32 %s336, 1
        %s3380 = scalar_lea.sflag [#allocation4], %s3379
        %s3381 = sand.u32 %s336, 1
        %s3382 = scalar_lea.vmem [#allocation5], %s3381
        // Predicated region
        $region81: #{tpu_custom_call.1} parent=75 // pred_check
          %p3383 = pneg %p346
        $region82: #{tpu_custom_call.1} parent=75 // pred_check_branch
          %3385 = sbr.rel (%p3383) target = $region84
        $region83: #{tpu_custom_call.1} parent=75 // pred_region
          %s3387 = ssub.s32 16, 16
          %3388 = vsyncadd %s3380, %s3387
          %s3389 = smul.addr %s29, 16
          %s3390 = scalar_lea.hbm %s14, %s3389
          %s3392 = sshll.u32 %s3382, 4
          %s3393 = int_to_ptr.vmem [resolvable:$true] %s3392
          %3395 = dma.vmem_to_hbm [thread:$0]  %s3393, 16, %s3390, %s3380
        $region84: #{tpu_custom_call.1} parent=75 // pred_fallthru
          _
      $region76: #{tpu_custom_call.1} parent=5 // pred_fallthru
        _
      %p3396 = scmp.le.s32.totalorder 2, %s24
      // Predicated region
      $region85: #{tpu_custom_call.1} parent=5 // pred_check
        %p3397 = pneg %p3396
      $region86: #{tpu_custom_call.1} parent=5 // pred_check_branch
        %3399 = sbr.rel (%p3397) target = $region88
      $region87: #{tpu_custom_call.1} parent=5 // pred_region
        %s3400 = ssub.s32 %s24, 2
        // Predicated region
        $region89: #{tpu_custom_call.1} parent=87 // pred_check
          %p3401 = pneg %p352
        $region90: #{tpu_custom_call.1} parent=87 // pred_check_branch
          %3403 = sbr.rel (%p3401) target = $region92
        $region91: #{tpu_custom_call.1} parent=87 // pred_region
          %s3404 = sand.u32 %s337, 1
          %s3405 = scalar_lea.sflag [#allocation4], %s3404
          %s3406 = sand.u32 %s337, 1
          %s3407 = scalar_lea.vmem [#allocation5], %s3406
          %3408 = dma.done %s3405, 16
        $region92: #{tpu_custom_call.1} parent=87 // pred_fallthru
          _
      $region88: #{tpu_custom_call.1} parent=5 // pred_fallthru
        _
    $region6: #{tpu_custom_call.1} parent=1 // loop_footer
      %s28 = sadd.s32 1, %s24
    $region7: #{tpu_custom_call.1} parent=1 // loop_footer_branch
      %23 = sbr.rel target = $region3
    $region8: #{tpu_custom_call.1} parent=1 // loop_exit
      _
    %3409 = vsyncpa [#allocation3], 1
    %s3410 = scalar_lea.sflag [#allocation3], 1
    %3411 = vsyncpa %s3410, 1
    %3412 = vsyncpa [#allocation4], 1
    %s3413 = scalar_lea.sflag [#allocation4], 1
    %3414 = vsyncpa %s3413, 1

</llo_original>
